<compile_context>
chip_gen: v6e
topology: v6e:2x2x1
jax: 0.10.0
libtpu: 0.0.40
codegen_flags: <defaults>
</compile_context>

<pallas_src>
import jax
import jax.numpy as jnp
from jax.experimental import pallas as pl
from jax.experimental.pallas import tpu as pltpu

# ----- original model dimensions ---------------------------------------------
HIDDEN = 200          # hidden
K = 10                # k == emb_size == num_embeddings == embeddings_dim
D_IN = 784
D_H1 = 400
N_LAT = HIDDEN // K   # 20 latent positions per sample


def _round_up(x, m):
    return (x + m - 1) // m * m


def _cdiv(a, b):
    return (a + b - 1) // b


# ----- lane-dense padded dimensions -------------------------------------------
D_H1_P = _round_up(D_H1, 128)     # 512
HID_P = _round_up(HIDDEN, 128)    # 256
D_IN_P = _round_up(D_IN, 128)     # 896

TILE_B_MAX = 256                  # safe on all of v5e/v6e/v7x default VMEM limits


# --------------------------- fused Pallas kernel ------------------------------

def _vqvae_kernel(x_ref, w1_ref, b1_ref, w2_ref, b2_ref, embx_ref, red_ref,
                  w3_ref, b3_ref, w4_ref, b4_ref,
                  recon_ref, ze_ref, zq_ref):
    # ---------- encoder: h1 = relu(x@W1 + b1);  z_e = h1@W2 + b2 --------------
    x = x_ref[...]                                            # bf16 (TB, 896)
    h1 = jnp.dot(x, w1_ref[...], preferred_element_type=jnp.float32) + b1_ref[...]
    h1 = jnp.maximum(h1, 0.0)
    z_e = (jnp.dot(h1.astype(jnp.bfloat16), w2_ref[...],
                   preferred_element_type=jnp.float32) + b2_ref[...])
    ze_ref[...] = z_e            # single full-lane store; pad lanes 200:256 == 0

    # ---------- nearest-embedding quantization (full lane width) --------------
    # Lane layout of z_e: lane i*20 + l holds emb-dim i of latent position l.
    # E_exp[c, i*20 + l] = emb[i, c];  R[a, b] = 1 iff a%20 == b%20 (valid lanes),
    # so (sqd @ R)[b, lane] = sum_i sqd[b, l + 20*i]  — the per-position distance,
    # replicated across all 10 lanes of that position's group.
    emb_rows = embx_ref[...]                                  # (K, HID_P) f32
    red = red_ref[...]                                        # (HID_P, HID_P) bf16

    best_d = None
    best_idx = None
    for c in range(K):
        diff = z_e - emb_rows[c, :]                           # direct (z - e)
        sqd = (diff * diff).astype(jnp.bfloat16)
        d_c = jnp.dot(sqd, red, preferred_element_type=jnp.float32)
        if c == 0:
            best_d = d_c
            best_idx = jnp.zeros(d_c.shape, jnp.int32)
        else:
            better = d_c < best_d                 # strict '<' => first index wins ties
            best_d = jnp.where(better, d_c, best_d)
            best_idx = jnp.where(better, jnp.int32(c), best_idx)

    # best_idx is already replicated over each position's emb-dim lanes (and is 0
    # in pad lanes, where E_exp[0] is 0), so z_q is a plain chain of selects.
    z_q = jnp.broadcast_to(emb_rows[0, :], z_e.shape)
    for c in range(1, K):
        z_q = jnp.where(best_idx == c, emb_rows[c, :], z_q)
    zq_ref[...] = z_q                                         # single full-lane store

    # ---------- decoder: h3 = relu(z_q@W3 + b3); recon = tanh(h3@W4 + b4) -----
    h3 = (jnp.dot(z_q.astype(jnp.bfloat16), w3_ref[...],
                  preferred_element_type=jnp.float32) + b3_ref[...])
    h3 = jnp.maximum(h3, 0.0)
    recon_ref[...] = jnp.tanh(
        jnp.dot(h3.astype(jnp.bfloat16), w4_ref[...],
                preferred_element_type=jnp.float32) + b4_ref[...])


# --------------------------- wrapper -------------------------------------------

def _fused_specs(tile_b):
    const = lambda i: (0, 0)
    tile = lambda i: (i, 0)
    in_specs = [
        pl.BlockSpec((tile_b, D_IN_P), tile),                # x tile (bf16, padded)
        pl.BlockSpec((D_IN_P, D_H1_P), const),               # w1 (VMEM-resident)
        pl.BlockSpec((1, D_H1_P), const),                    # b1
        pl.BlockSpec((D_H1_P, HID_P), const),                # w2
        pl.BlockSpec((1, HID_P), const),                     # b2
        pl.BlockSpec((K, HID_P), const),                     # E_exp (lane-expanded codebook)
        pl.BlockSpec((HID_P, HID_P), const),                 # R (0/1 group-reduction)
        pl.BlockSpec((HID_P, D_H1_P), const),                # w3
        pl.BlockSpec((1, D_H1_P), const),                    # b3
        pl.BlockSpec((D_H1_P, D_IN_P), const),               # w4
        pl.BlockSpec((1, D_IN_P), const),                    # b4
    ]
    out_specs = [
        pl.BlockSpec((tile_b, D_IN_P), tile),                # recon (padded)
        pl.BlockSpec((tile_b, HID_P), tile),                 # z_e   (padded)
        pl.BlockSpec((tile_b, HID_P), tile),                 # z_q   (padded)
    ]
    return in_specs, out_specs


@jax.jit
def vq_vae_forward(x, p):
    B = x.shape[0]
    # x.view(-1, 784); cast to bf16 in the wrapper (kernel consumes bf16 on MXU)
    xf = x.reshape(B, -1)[:, :D_IN].astype(jnp.bfloat16)

    # tile_b minimizes batch padding; multiple of 16 keeps bf16 blocks pack-aligned
    n_tiles = max(1, _cdiv(B, TILE_B_MAX))
    tile_b = min(TILE_B_MAX, _round_up(_cdiv(B, n_tiles), 16))
    b_pad = _round_up(B, tile_b)

    xf = jnp.pad(xf, ((0, b_pad - B), (0, D_IN_P - D_IN)))

    in_specs, out_specs = _fused_specs(tile_b)
    recon_p, ze_p, zq_p = pl.pallas_call(
        _vqvae_kernel,
        out_shape=(
            jax.ShapeDtypeStruct((b_pad, D_IN_P), jnp.float32),
            jax.ShapeDtypeStruct((b_pad, HID_P), jnp.float32),
            jax.ShapeDtypeStruct((b_pad, HID_P), jnp.float32),
        ),
        grid_spec=pltpu.PrefetchScalarGridSpec(
            num_scalar_prefetch=0,
            grid=(b_pad // tile_b,),
            in_specs=in_specs,
            out_specs=out_specs,
        ),
        compiler_params=pltpu.CompilerParams(
            dimension_semantics=("parallel",),
            vmem_limit_bytes=32 * 1024 * 1024),
    )(xf, p["w1"], p["b1"], p["w2"], p["b2"], p["emb_exp"], p["red"],
      p["w3"], p["b3"], p["w4"], p["b4"])

    # Depad kept for API parity with the PyTorch forward (recon (B,784),
    # z_e/emb (B, K, hidden/K)); perf-critical callers can consume the padded
    # buffers directly to avoid this extra HBM pass.
    recon = recon_p[:B, :D_IN]
    z_e = ze_p[:B, :HIDDEN].reshape(B, K, N_LAT)
    emb_out = zq_p[:B, :HIDDEN].reshape(B, K, N_LAT)
    return recon, z_e, emb_out


# --------------------------- params & main --------------------------------------

def init_params(key):
    ks = jax.random.split(key, 9)

    def linear(kw, kb, fan_in, fan_out, fan_in_p, fan_out_p):
        bound = 1.0 / jnp.sqrt(jnp.float32(fan_in))
        w = jax.random.uniform(kw, (fan_in, fan_out), jnp.float32, -bound, bound)
        b = jax.random.uniform(kb, (1, fan_out), jnp.float32, -bound, bound)
        # zero-pad to lane-dense shapes: padded rows/cols contribute exactly 0
        w = jnp.pad(w, ((0, fan_in_p - fan_in), (0, fan_out_p - fan_out)))
        b = jnp.pad(b, ((0, 0), (0, fan_out_p - fan_out)))
        return w.astype(jnp.bfloat16), b          # bf16 weights (MXU), f32 bias

    w1, b1 = linear(ks[0], ks[1], D_IN, D_H1, D_IN_P, D_H1_P)   # fc1: 784 -> 400
    w2, b2 = linear(ks[2], ks[3], D_H1, HIDDEN, D_H1_P, HID_P)  # fc2: 400 -> 200
    w3, b3 = linear(ks[4], ks[5], HIDDEN, D_H1, HID_P, D_H1_P)  # fc3: 200 -> 400
    w4, b4 = linear(ks[6], ks[7], D_H1, D_IN, D_H1_P, D_IN_P)   # fc4: 400 -> 784

    # codebook: torch.rand(emb_dim, num_emb) -> emb[i, c]
    emb = jax.random.uniform(ks[8], (K, K), jnp.float32)

    # lane-expanded codebook: E_exp[c, i*N_LAT + l] = emb[i, c]; pad lanes zero
    emb_exp = jnp.pad(jnp.repeat(emb.T, N_LAT, axis=1),
                      ((0, 0), (0, HID_P - HIDDEN))).astype(jnp.float32)

    # 0/1 group-reduction matrix: R[a, b] = 1 iff a,b < HIDDEN and a%20 == b%20
    lane = jnp.arange(HID_P)
    valid = lane < HIDDEN
    same_pos = (lane[:, None] % N_LAT) == (lane[None, :] % N_LAT)
    red = (same_pos & valid[:, None] & valid[None, :]).astype(jnp.bfloat16)

    return dict(w1=w1, b1=b1, w2=w2, b2=b2, w3=w3, b3=b3, w4=w4, b4=b4,
                emb=emb, emb_exp=emb_exp, red=red)


if __name__ == "__main__":
    key = jax.random.PRNGKey(0)
    k_x, k_p = jax.random.split(key)
    # MNIST-like input: (B, C, H, W) = (2, 1, 28, 28)
    x = jax.random.uniform(k_x, (2, 1, 28, 28), jnp.float32)
    params = init_params(k_p)

    recon, z_e, emb_out = vq_vae_forward(x, params)
    jax.block_until_ready((recon, z_e, emb_out))

    assert recon.shape == (2, D_IN)
    assert z_e.shape == (2, K, N_LAT)
    assert emb_out.shape == (2, K, N_LAT)
    assert bool(jnp.all(jnp.isfinite(recon)))
    assert bool(jnp.all(jnp.isfinite(z_e)))

    # sanity: every quantized latent vector must be (exactly) one codebook column
    emb_cols = params["emb"]                                   # (emb_dim, num_emb)
    dist = jnp.max(jnp.abs(emb_out[:, :, :, None] - emb_cols[:, None, :]), axis=1)
    assert bool(jnp.all(jnp.min(dist, axis=-1) == 0.0))

    print("KERNEL_OK")
</pallas_src>

<mosaic_0001>
module attributes {stable_mosaic.version = 11 : i64} {
  func.func @_vqvae_kernel(%arg0: i32, %arg1: memref<16x896xbf16, #tpu.memory_space<vmem>>, %arg2: memref<896x512xbf16, #tpu.memory_space<vmem>>, %arg3: memref<1x512xf32, #tpu.memory_space<vmem>>, %arg4: memref<512x256xbf16, #tpu.memory_space<vmem>>, %arg5: memref<1x256xf32, #tpu.memory_space<vmem>>, %arg6: memref<10x256xf32, #tpu.memory_space<vmem>>, %arg7: memref<256x256xbf16, #tpu.memory_space<vmem>>, %arg8: memref<256x512xbf16, #tpu.memory_space<vmem>>, %arg9: memref<1x512xf32, #tpu.memory_space<vmem>>, %arg10: memref<512x896xbf16, #tpu.memory_space<vmem>>, %arg11: memref<1x896xf32, #tpu.memory_space<vmem>>, %arg12: memref<16x896xf32, #tpu.memory_space<vmem>>, %arg13: memref<16x256xf32, #tpu.memory_space<vmem>>, %arg14: memref<16x256xf32, #tpu.memory_space<vmem>>) attributes {dimension_semantics = [#tpu.dimension_semantics<parallel>], iteration_bounds = array<i64: 1>, scalar_prefetch = 0 : i64, scratch_operands = 0 : i64, tpu.core_type = #tpu.core_type<tc>, window_params = [{transform_indices = @transform_0, window_bounds = array<i64: 16, 896>}, {pipeline_mode = #tpu.pipeline_mode<synchronous>, transform_indices = @transform_1, window_bounds = array<i64: 896, 512>}, {pipeline_mode = #tpu.pipeline_mode<synchronous>, transform_indices = @transform_2, window_bounds = array<i64: 1, 512>}, {pipeline_mode = #tpu.pipeline_mode<synchronous>, transform_indices = @transform_3, window_bounds = array<i64: 512, 256>}, {pipeline_mode = #tpu.pipeline_mode<synchronous>, transform_indices = @transform_4, window_bounds = array<i64: 1, 256>}, {pipeline_mode = #tpu.pipeline_mode<synchronous>, transform_indices = @transform_5, window_bounds = array<i64: 10, 256>}, {pipeline_mode = #tpu.pipeline_mode<synchronous>, transform_indices = @transform_6, window_bounds = array<i64: 256, 256>}, {pipeline_mode = #tpu.pipeline_mode<synchronous>, transform_indices = @transform_7, window_bounds = array<i64: 256, 512>}, {pipeline_mode = #tpu.pipeline_mode<synchronous>, transform_indices = @transform_8, window_bounds = array<i64: 1, 512>}, {pipeline_mode = #tpu.pipeline_mode<synchronous>, transform_indices = @transform_9, window_bounds = array<i64: 512, 896>}, {pipeline_mode = #tpu.pipeline_mode<synchronous>, transform_indices = @transform_10, window_bounds = array<i64: 1, 896>}, {transform_indices = @transform_11, window_bounds = array<i64: 16, 896>}, {transform_indices = @transform_12, window_bounds = array<i64: 16, 256>}, {transform_indices = @transform_13, window_bounds = array<i64: 16, 256>}]} {
    %c0 = arith.constant 0 : index
    %c0_0 = arith.constant 0 : index
    %0 = vector.load %arg1[%c0, %c0_0] : memref<16x896xbf16, #tpu.memory_space<vmem>>, vector<16x896xbf16>
    %c0_1 = arith.constant 0 : index
    %c0_2 = arith.constant 0 : index
    %1 = vector.load %arg2[%c0_1, %c0_2] : memref<896x512xbf16, #tpu.memory_space<vmem>>, vector<896x512xbf16>
    %cst = arith.constant dense<0.000000e+00> : vector<16x512xf32>
    %2 = tpu.matmul %0, %1, %cst {dimension_numbers = #tpu.dot_dimension_numbers<[1], [0], [0], [1], [0, 0, 1, 1], [], []>} : vector<16x896xbf16>, vector<896x512xbf16>, vector<16x512xf32> -> vector<16x512xf32>
    %c0_3 = arith.constant 0 : index
    %c0_4 = arith.constant 0 : index
    %3 = vector.load %arg3[%c0_3, %c0_4] : memref<1x512xf32, #tpu.memory_space<vmem>>, vector<1x512xf32>
    %4 = vector.broadcast %3 : vector<1x512xf32> to vector<16x512xf32>
    %5 = arith.addf %2, %4 : vector<16x512xf32>
    %cst_5 = arith.constant 0.000000e+00 : f32
    %6 = vector.broadcast %cst_5 : f32 to vector<16x512xf32>
    %7 = arith.maximumf %5, %6 : vector<16x512xf32>
    %8 = arith.truncf %7 : vector<16x512xf32> to vector<16x512xbf16>
    %c0_6 = arith.constant 0 : index
    %c0_7 = arith.constant 0 : index
    %9 = vector.load %arg4[%c0_6, %c0_7] : memref<512x256xbf16, #tpu.memory_space<vmem>>, vector<512x256xbf16>
    %cst_8 = arith.constant dense<0.000000e+00> : vector<16x256xf32>
    %10 = tpu.matmul %8, %9, %cst_8 {dimension_numbers = #tpu.dot_dimension_numbers<[1], [0], [0], [1], [0, 0, 1, 1], [], []>} : vector<16x512xbf16>, vector<512x256xbf16>, vector<16x256xf32> -> vector<16x256xf32>
    %c0_9 = arith.constant 0 : index
    %c0_10 = arith.constant 0 : index
    %11 = vector.load %arg5[%c0_9, %c0_10] : memref<1x256xf32, #tpu.memory_space<vmem>>, vector<1x256xf32>
    %12 = vector.broadcast %11 : vector<1x256xf32> to vector<16x256xf32>
    %13 = arith.addf %10, %12 : vector<16x256xf32>
    %c0_11 = arith.constant 0 : index
    %c0_12 = arith.constant 0 : index
    %14 = vector.load %arg13[%c0_11, %c0_12] : memref<16x256xf32, #tpu.memory_space<vmem>>, vector<16x256xf32>
    tpu.vector_store %arg13[%c0_11, %c0_12], %13 {strides = array<i32>} : memref<16x256xf32, #tpu.memory_space<vmem>>, vector<16x256xf32>,
    %c0_13 = arith.constant 0 : index
    %c0_14 = arith.constant 0 : index
    %15 = vector.load %arg6[%c0_13, %c0_14] : memref<10x256xf32, #tpu.memory_space<vmem>>, vector<10x256xf32>
    %c0_15 = arith.constant 0 : index
    %c0_16 = arith.constant 0 : index
    %16 = vector.load %arg7[%c0_15, %c0_16] : memref<256x256xbf16, #tpu.memory_space<vmem>>, vector<256x256xbf16>
    %17 = vector.extract_strided_slice %15 {offsets = [0, 0], sizes = [1, 256], strides = [1, 1]} : vector<10x256xf32> to vector<1x256xf32>
    %18 = vector.shape_cast %17 : vector<1x256xf32> to vector<256xf32>
    %19 = vector.shape_cast %18 : vector<256xf32> to vector<1x256xf32>
    %20 = vector.broadcast %19 : vector<1x256xf32> to vector<16x256xf32>
    %21 = arith.subf %13, %20 : vector<16x256xf32>
    %22 = arith.mulf %21, %21 : vector<16x256xf32>
    %23 = arith.truncf %22 : vector<16x256xf32> to vector<16x256xbf16>
    %cst_17 = arith.constant dense<0.000000e+00> : vector<16x256xf32>
    %24 = tpu.matmul %23, %16, %cst_17 {dimension_numbers = #tpu.dot_dimension_numbers<[1], [0], [0], [1], [0, 0, 1, 1], [], []>} : vector<16x256xbf16>, vector<256x256xbf16>, vector<16x256xf32> -> vector<16x256xf32>
    %c0_i32 = arith.constant 0 : i32
    %25 = vector.broadcast %c0_i32 : i32 to vector<16x256xi32>
    %26 = vector.extract_strided_slice %15 {offsets = [1, 0], sizes = [1, 256], strides = [1, 1]} : vector<10x256xf32> to vector<1x256xf32>
    %27 = vector.shape_cast %26 : vector<1x256xf32> to vector<256xf32>
    %28 = vector.shape_cast %27 : vector<256xf32> to vector<1x256xf32>
    %29 = vector.broadcast %28 : vector<1x256xf32> to vector<16x256xf32>
    %30 = arith.subf %13, %29 : vector<16x256xf32>
    %31 = arith.mulf %30, %30 : vector<16x256xf32>
    %32 = arith.truncf %31 : vector<16x256xf32> to vector<16x256xbf16>
    %cst_18 = arith.constant dense<0.000000e+00> : vector<16x256xf32>
    %33 = tpu.matmul %32, %16, %cst_18 {dimension_numbers = #tpu.dot_dimension_numbers<[1], [0], [0], [1], [0, 0, 1, 1], [], []>} : vector<16x256xbf16>, vector<256x256xbf16>, vector<16x256xf32> -> vector<16x256xf32>
    %34 = arith.cmpf olt, %33, %24 : vector<16x256xf32>
    %35 = arith.select %34, %33, %24 : vector<16x256xi1>, vector<16x256xf32>
    %c1_i32 = arith.constant 1 : i32
    %36 = vector.broadcast %c1_i32 : i32 to vector<16x256xi32>
    %37 = arith.select %34, %36, %25 : vector<16x256xi1>, vector<16x256xi32>
    %38 = vector.extract_strided_slice %15 {offsets = [2, 0], sizes = [1, 256], strides = [1, 1]} : vector<10x256xf32> to vector<1x256xf32>
    %39 = vector.shape_cast %38 : vector<1x256xf32> to vector<256xf32>
    %40 = vector.shape_cast %39 : vector<256xf32> to vector<1x256xf32>
    %41 = vector.broadcast %40 : vector<1x256xf32> to vector<16x256xf32>
    %42 = arith.subf %13, %41 : vector<16x256xf32>
    %43 = arith.mulf %42, %42 : vector<16x256xf32>
    %44 = arith.truncf %43 : vector<16x256xf32> to vector<16x256xbf16>
    %cst_19 = arith.constant dense<0.000000e+00> : vector<16x256xf32>
    %45 = tpu.matmul %44, %16, %cst_19 {dimension_numbers = #tpu.dot_dimension_numbers<[1], [0], [0], [1], [0, 0, 1, 1], [], []>} : vector<16x256xbf16>, vector<256x256xbf16>, vector<16x256xf32> -> vector<16x256xf32>
    %46 = arith.cmpf olt, %45, %35 : vector<16x256xf32>
    %47 = arith.select %46, %45, %35 : vector<16x256xi1>, vector<16x256xf32>
    %c2_i32 = arith.constant 2 : i32
    %48 = vector.broadcast %c2_i32 : i32 to vector<16x256xi32>
    %49 = arith.select %46, %48, %37 : vector<16x256xi1>, vector<16x256xi32>
    %50 = vector.extract_strided_slice %15 {offsets = [3, 0], sizes = [1, 256], strides = [1, 1]} : vector<10x256xf32> to vector<1x256xf32>
    %51 = vector.shape_cast %50 : vector<1x256xf32> to vector<256xf32>
    %52 = vector.shape_cast %51 : vector<256xf32> to vector<1x256xf32>
    %53 = vector.broadcast %52 : vector<1x256xf32> to vector<16x256xf32>
    %54 = arith.subf %13, %53 : vector<16x256xf32>
    %55 = arith.mulf %54, %54 : vector<16x256xf32>
    %56 = arith.truncf %55 : vector<16x256xf32> to vector<16x256xbf16>
    %cst_20 = arith.constant dense<0.000000e+00> : vector<16x256xf32>
    %57 = tpu.matmul %56, %16, %cst_20 {dimension_numbers = #tpu.dot_dimension_numbers<[1], [0], [0], [1], [0, 0, 1, 1], [], []>} : vector<16x256xbf16>, vector<256x256xbf16>, vector<16x256xf32> -> vector<16x256xf32>
    %58 = arith.cmpf olt, %57, %47 : vector<16x256xf32>
    %59 = arith.select %58, %57, %47 : vector<16x256xi1>, vector<16x256xf32>
    %c3_i32 = arith.constant 3 : i32
    %60 = vector.broadcast %c3_i32 : i32 to vector<16x256xi32>
    %61 = arith.select %58, %60, %49 : vector<16x256xi1>, vector<16x256xi32>
    %62 = vector.extract_strided_slice %15 {offsets = [4, 0], sizes = [1, 256], strides = [1, 1]} : vector<10x256xf32> to vector<1x256xf32>
    %63 = vector.shape_cast %62 : vector<1x256xf32> to vector<256xf32>
    %64 = vector.shape_cast %63 : vector<256xf32> to vector<1x256xf32>
    %65 = vector.broadcast %64 : vector<1x256xf32> to vector<16x256xf32>
    %66 = arith.subf %13, %65 : vector<16x256xf32>
    %67 = arith.mulf %66, %66 : vector<16x256xf32>
    %68 = arith.truncf %67 : vector<16x256xf32> to vector<16x256xbf16>
    %cst_21 = arith.constant dense<0.000000e+00> : vector<16x256xf32>
    %69 = tpu.matmul %68, %16, %cst_21 {dimension_numbers = #tpu.dot_dimension_numbers<[1], [0], [0], [1], [0, 0, 1, 1], [], []>} : vector<16x256xbf16>, vector<256x256xbf16>, vector<16x256xf32> -> vector<16x256xf32>
    %70 = arith.cmpf olt, %69, %59 : vector<16x256xf32>
    %71 = arith.select %70, %69, %59 : vector<16x256xi1>, vector<16x256xf32>
    %c4_i32 = arith.constant 4 : i32
    %72 = vector.broadcast %c4_i32 : i32 to vector<16x256xi32>
    %73 = arith.select %70, %72, %61 : vector<16x256xi1>, vector<16x256xi32>
    %74 = vector.extract_strided_slice %15 {offsets = [5, 0], sizes = [1, 256], strides = [1, 1]} : vector<10x256xf32> to vector<1x256xf32>
    %75 = vector.shape_cast %74 : vector<1x256xf32> to vector<256xf32>
    %76 = vector.shape_cast %75 : vector<256xf32> to vector<1x256xf32>
    %77 = vector.broadcast %76 : vector<1x256xf32> to vector<16x256xf32>
    %78 = arith.subf %13, %77 : vector<16x256xf32>
    %79 = arith.mulf %78, %78 : vector<16x256xf32>
    %80 = arith.truncf %79 : vector<16x256xf32> to vector<16x256xbf16>
    %cst_22 = arith.constant dense<0.000000e+00> : vector<16x256xf32>
    %81 = tpu.matmul %80, %16, %cst_22 {dimension_numbers = #tpu.dot_dimension_numbers<[1], [0], [0], [1], [0, 0, 1, 1], [], []>} : vector<16x256xbf16>, vector<256x256xbf16>, vector<16x256xf32> -> vector<16x256xf32>
    %82 = arith.cmpf olt, %81, %71 : vector<16x256xf32>
    %83 = arith.select %82, %81, %71 : vector<16x256xi1>, vector<16x256xf32>
    %c5_i32 = arith.constant 5 : i32
    %84 = vector.broadcast %c5_i32 : i32 to vector<16x256xi32>
    %85 = arith.select %82, %84, %73 : vector<16x256xi1>, vector<16x256xi32>
    %86 = vector.extract_strided_slice %15 {offsets = [6, 0], sizes = [1, 256], strides = [1, 1]} : vector<10x256xf32> to vector<1x256xf32>
    %87 = vector.shape_cast %86 : vector<1x256xf32> to vector<256xf32>
    %88 = vector.shape_cast %87 : vector<256xf32> to vector<1x256xf32>
    %89 = vector.broadcast %88 : vector<1x256xf32> to vector<16x256xf32>
    %90 = arith.subf %13, %89 : vector<16x256xf32>
    %91 = arith.mulf %90, %90 : vector<16x256xf32>
    %92 = arith.truncf %91 : vector<16x256xf32> to vector<16x256xbf16>
    %cst_23 = arith.constant dense<0.000000e+00> : vector<16x256xf32>
    %93 = tpu.matmul %92, %16, %cst_23 {dimension_numbers = #tpu.dot_dimension_numbers<[1], [0], [0], [1], [0, 0, 1, 1], [], []>} : vector<16x256xbf16>, vector<256x256xbf16>, vector<16x256xf32> -> vector<16x256xf32>
    %94 = arith.cmpf olt, %93, %83 : vector<16x256xf32>
    %95 = arith.select %94, %93, %83 : vector<16x256xi1>, vector<16x256xf32>
    %c6_i32 = arith.constant 6 : i32
    %96 = vector.broadcast %c6_i32 : i32 to vector<16x256xi32>
    %97 = arith.select %94, %96, %85 : vector<16x256xi1>, vector<16x256xi32>
    %98 = vector.extract_strided_slice %15 {offsets = [7, 0], sizes = [1, 256], strides = [1, 1]} : vector<10x256xf32> to vector<1x256xf32>
    %99 = vector.shape_cast %98 : vector<1x256xf32> to vector<256xf32>
    %100 = vector.shape_cast %99 : vector<256xf32> to vector<1x256xf32>
    %101 = vector.broadcast %100 : vector<1x256xf32> to vector<16x256xf32>
    %102 = arith.subf %13, %101 : vector<16x256xf32>
    %103 = arith.mulf %102, %102 : vector<16x256xf32>
    %104 = arith.truncf %103 : vector<16x256xf32> to vector<16x256xbf16>
    %cst_24 = arith.constant dense<0.000000e+00> : vector<16x256xf32>
    %105 = tpu.matmul %104, %16, %cst_24 {dimension_numbers = #tpu.dot_dimension_numbers<[1], [0], [0], [1], [0, 0, 1, 1], [], []>} : vector<16x256xbf16>, vector<256x256xbf16>, vector<16x256xf32> -> vector<16x256xf32>
    %106 = arith.cmpf olt, %105, %95 : vector<16x256xf32>
    %107 = arith.select %106, %105, %95 : vector<16x256xi1>, vector<16x256xf32>
    %c7_i32 = arith.constant 7 : i32
    %108 = vector.broadcast %c7_i32 : i32 to vector<16x256xi32>
    %109 = arith.select %106, %108, %97 : vector<16x256xi1>, vector<16x256xi32>
    %110 = vector.extract_strided_slice %15 {offsets = [8, 0], sizes = [1, 256], strides = [1, 1]} : vector<10x256xf32> to vector<1x256xf32>
    %111 = vector.shape_cast %110 : vector<1x256xf32> to vector<256xf32>
    %112 = vector.shape_cast %111 : vector<256xf32> to vector<1x256xf32>
    %113 = vector.broadcast %112 : vector<1x256xf32> to vector<16x256xf32>
    %114 = arith.subf %13, %113 : vector<16x256xf32>
    %115 = arith.mulf %114, %114 : vector<16x256xf32>
    %116 = arith.truncf %115 : vector<16x256xf32> to vector<16x256xbf16>
    %cst_25 = arith.constant dense<0.000000e+00> : vector<16x256xf32>
    %117 = tpu.matmul %116, %16, %cst_25 {dimension_numbers = #tpu.dot_dimension_numbers<[1], [0], [0], [1], [0, 0, 1, 1], [], []>} : vector<16x256xbf16>, vector<256x256xbf16>, vector<16x256xf32> -> vector<16x256xf32>
    %118 = arith.cmpf olt, %117, %107 : vector<16x256xf32>
    %119 = arith.select %118, %117, %107 : vector<16x256xi1>, vector<16x256xf32>
    %c8_i32 = arith.constant 8 : i32
    %120 = vector.broadcast %c8_i32 : i32 to vector<16x256xi32>
    %121 = arith.select %118, %120, %109 : vector<16x256xi1>, vector<16x256xi32>
    %122 = vector.extract_strided_slice %15 {offsets = [9, 0], sizes = [1, 256], strides = [1, 1]} : vector<10x256xf32> to vector<1x256xf32>
    %123 = vector.shape_cast %122 : vector<1x256xf32> to vector<256xf32>
    %124 = vector.shape_cast %123 : vector<256xf32> to vector<1x256xf32>
    %125 = vector.broadcast %124 : vector<1x256xf32> to vector<16x256xf32>
    %126 = arith.subf %13, %125 : vector<16x256xf32>
    %127 = arith.mulf %126, %126 : vector<16x256xf32>
    %128 = arith.truncf %127 : vector<16x256xf32> to vector<16x256xbf16>
    %cst_26 = arith.constant dense<0.000000e+00> : vector<16x256xf32>
    %129 = tpu.matmul %128, %16, %cst_26 {dimension_numbers = #tpu.dot_dimension_numbers<[1], [0], [0], [1], [0, 0, 1, 1], [], []>} : vector<16x256xbf16>, vector<256x256xbf16>, vector<16x256xf32> -> vector<16x256xf32>
    %130 = arith.cmpf olt, %129, %119 : vector<16x256xf32>
    %c9_i32 = arith.constant 9 : i32
    %131 = vector.broadcast %c9_i32 : i32 to vector<16x256xi32>
    %132 = arith.select %130, %131, %121 : vector<16x256xi1>, vector<16x256xi32>
    %133 = vector.extract_strided_slice %15 {offsets = [0, 0], sizes = [1, 256], strides = [1, 1]} : vector<10x256xf32> to vector<1x256xf32>
    %134 = vector.shape_cast %133 : vector<1x256xf32> to vector<256xf32>
    %135 = vector.shape_cast %134 : vector<256xf32> to vector<1x256xf32>
    %136 = vector.broadcast %135 : vector<1x256xf32> to vector<16x256xf32>
    %c1_i32_27 = arith.constant 1 : i32
    %137 = vector.broadcast %c1_i32_27 : i32 to vector<16x256xi32>
    %138 = arith.cmpi eq, %132, %137 : vector<16x256xi32>
    %139 = vector.extract_strided_slice %15 {offsets = [1, 0], sizes = [1, 256], strides = [1, 1]} : vector<10x256xf32> to vector<1x256xf32>
    %140 = vector.shape_cast %139 : vector<1x256xf32> to vector<256xf32>
    %141 = vector.shape_cast %140 : vector<256xf32> to vector<1x256xf32>
    %142 = vector.broadcast %141 : vector<1x256xf32> to vector<16x256xf32>
    %143 = arith.select %138, %142, %136 : vector<16x256xi1>, vector<16x256xf32>
    %c2_i32_28 = arith.constant 2 : i32
    %144 = vector.broadcast %c2_i32_28 : i32 to vector<16x256xi32>
    %145 = arith.cmpi eq, %132, %144 : vector<16x256xi32>
    %146 = vector.extract_strided_slice %15 {offsets = [2, 0], sizes = [1, 256], strides = [1, 1]} : vector<10x256xf32> to vector<1x256xf32>
    %147 = vector.shape_cast %146 : vector<1x256xf32> to vector<256xf32>
    %148 = vector.shape_cast %147 : vector<256xf32> to vector<1x256xf32>
    %149 = vector.broadcast %148 : vector<1x256xf32> to vector<16x256xf32>
    %150 = arith.select %145, %149, %143 : vector<16x256xi1>, vector<16x256xf32>
    %c3_i32_29 = arith.constant 3 : i32
    %151 = vector.broadcast %c3_i32_29 : i32 to vector<16x256xi32>
    %152 = arith.cmpi eq, %132, %151 : vector<16x256xi32>
    %153 = vector.extract_strided_slice %15 {offsets = [3, 0], sizes = [1, 256], strides = [1, 1]} : vector<10x256xf32> to vector<1x256xf32>
    %154 = vector.shape_cast %153 : vector<1x256xf32> to vector<256xf32>
    %155 = vector.shape_cast %154 : vector<256xf32> to vector<1x256xf32>
    %156 = vector.broadcast %155 : vector<1x256xf32> to vector<16x256xf32>
    %157 = arith.select %152, %156, %150 : vector<16x256xi1>, vector<16x256xf32>
    %c4_i32_30 = arith.constant 4 : i32
    %158 = vector.broadcast %c4_i32_30 : i32 to vector<16x256xi32>
    %159 = arith.cmpi eq, %132, %158 : vector<16x256xi32>
    %160 = vector.extract_strided_slice %15 {offsets = [4, 0], sizes = [1, 256], strides = [1, 1]} : vector<10x256xf32> to vector<1x256xf32>
    %161 = vector.shape_cast %160 : vector<1x256xf32> to vector<256xf32>
    %162 = vector.shape_cast %161 : vector<256xf32> to vector<1x256xf32>
    %163 = vector.broadcast %162 : vector<1x256xf32> to vector<16x256xf32>
    %164 = arith.select %159, %163, %157 : vector<16x256xi1>, vector<16x256xf32>
    %c5_i32_31 = arith.constant 5 : i32
    %165 = vector.broadcast %c5_i32_31 : i32 to vector<16x256xi32>
    %166 = arith.cmpi eq, %132, %165 : vector<16x256xi32>
    %167 = vector.extract_strided_slice %15 {offsets = [5, 0], sizes = [1, 256], strides = [1, 1]} : vector<10x256xf32> to vector<1x256xf32>
    %168 = vector.shape_cast %167 : vector<1x256xf32> to vector<256xf32>
    %169 = vector.shape_cast %168 : vector<256xf32> to vector<1x256xf32>
    %170 = vector.broadcast %169 : vector<1x256xf32> to vector<16x256xf32>
    %171 = arith.select %166, %170, %164 : vector<16x256xi1>, vector<16x256xf32>
    %c6_i32_32 = arith.constant 6 : i32
    %172 = vector.broadcast %c6_i32_32 : i32 to vector<16x256xi32>
    %173 = arith.cmpi eq, %132, %172 : vector<16x256xi32>
    %174 = vector.extract_strided_slice %15 {offsets = [6, 0], sizes = [1, 256], strides = [1, 1]} : vector<10x256xf32> to vector<1x256xf32>
    %175 = vector.shape_cast %174 : vector<1x256xf32> to vector<256xf32>
    %176 = vector.shape_cast %175 : vector<256xf32> to vector<1x256xf32>
    %177 = vector.broadcast %176 : vector<1x256xf32> to vector<16x256xf32>
    %178 = arith.select %173, %177, %171 : vector<16x256xi1>, vector<16x256xf32>
    %c7_i32_33 = arith.constant 7 : i32
    %179 = vector.broadcast %c7_i32_33 : i32 to vector<16x256xi32>
    %180 = arith.cmpi eq, %132, %179 : vector<16x256xi32>
    %181 = vector.extract_strided_slice %15 {offsets = [7, 0], sizes = [1, 256], strides = [1, 1]} : vector<10x256xf32> to vector<1x256xf32>
    %182 = vector.shape_cast %181 : vector<1x256xf32> to vector<256xf32>
    %183 = vector.shape_cast %182 : vector<256xf32> to vector<1x256xf32>
    %184 = vector.broadcast %183 : vector<1x256xf32> to vector<16x256xf32>
    %185 = arith.select %180, %184, %178 : vector<16x256xi1>, vector<16x256xf32>
    %c8_i32_34 = arith.constant 8 : i32
    %186 = vector.broadcast %c8_i32_34 : i32 to vector<16x256xi32>
    %187 = arith.cmpi eq, %132, %186 : vector<16x256xi32>
    %188 = vector.extract_strided_slice %15 {offsets = [8, 0], sizes = [1, 256], strides = [1, 1]} : vector<10x256xf32> to vector<1x256xf32>
    %189 = vector.shape_cast %188 : vector<1x256xf32> to vector<256xf32>
    %190 = vector.shape_cast %189 : vector<256xf32> to vector<1x256xf32>
    %191 = vector.broadcast %190 : vector<1x256xf32> to vector<16x256xf32>
    %192 = arith.select %187, %191, %185 : vector<16x256xi1>, vector<16x256xf32>
    %c9_i32_35 = arith.constant 9 : i32
    %193 = vector.broadcast %c9_i32_35 : i32 to vector<16x256xi32>
    %194 = arith.cmpi eq, %132, %193 : vector<16x256xi32>
    %195 = vector.extract_strided_slice %15 {offsets = [9, 0], sizes = [1, 256], strides = [1, 1]} : vector<10x256xf32> to vector<1x256xf32>
    %196 = vector.shape_cast %195 : vector<1x256xf32> to vector<256xf32>
    %197 = vector.shape_cast %196 : vector<256xf32> to vector<1x256xf32>
    %198 = vector.broadcast %197 : vector<1x256xf32> to vector<16x256xf32>
    %199 = arith.select %194, %198, %192 : vector<16x256xi1>, vector<16x256xf32>
    %c0_36 = arith.constant 0 : index
    %c0_37 = arith.constant 0 : index
    %200 = vector.load %arg14[%c0_36, %c0_37] : memref<16x256xf32, #tpu.memory_space<vmem>>, vector<16x256xf32>
    tpu.vector_store %arg14[%c0_36, %c0_37], %199 {strides = array<i32>} : memref<16x256xf32, #tpu.memory_space<vmem>>, vector<16x256xf32>,
    %201 = arith.truncf %199 : vector<16x256xf32> to vector<16x256xbf16>
    %c0_38 = arith.constant 0 : index
    %c0_39 = arith.constant 0 : index
    %202 = vector.load %arg8[%c0_38, %c0_39] : memref<256x512xbf16, #tpu.memory_space<vmem>>, vector<256x512xbf16>
    %cst_40 = arith.constant dense<0.000000e+00> : vector<16x512xf32>
    %203 = tpu.matmul %201, %202, %cst_40 {dimension_numbers = #tpu.dot_dimension_numbers<[1], [0], [0], [1], [0, 0, 1, 1], [], []>} : vector<16x256xbf16>, vector<256x512xbf16>, vector<16x512xf32> -> vector<16x512xf32>
    %c0_41 = arith.constant 0 : index
    %c0_42 = arith.constant 0 : index
    %204 = vector.load %arg9[%c0_41, %c0_42] : memref<1x512xf32, #tpu.memory_space<vmem>>, vector<1x512xf32>
    %205 = vector.broadcast %204 : vector<1x512xf32> to vector<16x512xf32>
    %206 = arith.addf %203, %205 : vector<16x512xf32>
    %cst_43 = arith.constant 0.000000e+00 : f32
    %207 = vector.broadcast %cst_43 : f32 to vector<16x512xf32>
    %208 = arith.maximumf %206, %207 : vector<16x512xf32>
    %209 = arith.truncf %208 : vector<16x512xf32> to vector<16x512xbf16>
    %c0_44 = arith.constant 0 : index
    %c0_45 = arith.constant 0 : index
    %210 = vector.load %arg10[%c0_44, %c0_45] : memref<512x896xbf16, #tpu.memory_space<vmem>>, vector<512x896xbf16>
    %cst_46 = arith.constant dense<0.000000e+00> : vector<16x896xf32>
    %211 = tpu.matmul %209, %210, %cst_46 {dimension_numbers = #tpu.dot_dimension_numbers<[1], [0], [0], [1], [0, 0, 1, 1], [], []>} : vector<16x512xbf16>, vector<512x896xbf16>, vector<16x896xf32> -> vector<16x896xf32>
    %c0_47 = arith.constant 0 : index
    %c0_48 = arith.constant 0 : index
    %212 = vector.load %arg11[%c0_47, %c0_48] : memref<1x896xf32, #tpu.memory_space<vmem>>, vector<1x896xf32>
    %213 = vector.broadcast %212 : vector<1x896xf32> to vector<16x896xf32>
    %214 = arith.addf %211, %213 : vector<16x896xf32>
    %215 = math.tanh %214 : vector<16x896xf32>
    %c0_49 = arith.constant 0 : index
    %c0_50 = arith.constant 0 : index
    %216 = vector.load %arg12[%c0_49, %c0_50] : memref<16x896xf32, #tpu.memory_space<vmem>>, vector<16x896xf32>
    tpu.vector_store %arg12[%c0_49, %c0_50], %215 {strides = array<i32>} : memref<16x896xf32, #tpu.memory_space<vmem>>, vector<16x896xf32>,
    return
  }
  func.func @transform_0(%arg0: i32) -> (i32, i32) {
    %c0_i32 = arith.constant 0 : i32
    %c0_i32_0 = arith.constant 0 : i32
    return %arg0, %c0_i32 : i32, i32
  }
  func.func @transform_1(%arg0: i32) -> (i32, i32) {
    %c0_i32 = arith.constant 0 : i32
    %c0_i32_0 = arith.constant 0 : i32
    %c0_i32_1 = arith.constant 0 : i32
    return %c0_i32, %c0_i32_0 : i32, i32
  }
  func.func @transform_2(%arg0: i32) -> (i32, i32) {
    %c0_i32 = arith.constant 0 : i32
    %c0_i32_0 = arith.constant 0 : i32
    %c0_i32_1 = arith.constant 0 : i32
    return %c0_i32, %c0_i32_0 : i32, i32
  }
  func.func @transform_3(%arg0: i32) -> (i32, i32) {
    %c0_i32 = arith.constant 0 : i32
    %c0_i32_0 = arith.constant 0 : i32
    %c0_i32_1 = arith.constant 0 : i32
    return %c0_i32, %c0_i32_0 : i32, i32
  }
  func.func @transform_4(%arg0: i32) -> (i32, i32) {
    %c0_i32 = arith.constant 0 : i32
    %c0_i32_0 = arith.constant 0 : i32
    %c0_i32_1 = arith.constant 0 : i32
    return %c0_i32, %c0_i32_0 : i32, i32
  }
  func.func @transform_5(%arg0: i32) -> (i32, i32) {
    %c0_i32 = arith.constant 0 : i32
    %c0_i32_0 = arith.constant 0 : i32
    %c0_i32_1 = arith.constant 0 : i32
    return %c0_i32, %c0_i32_0 : i32, i32
  }
  func.func @transform_6(%arg0: i32) -> (i32, i32) {
    %c0_i32 = arith.constant 0 : i32
    %c0_i32_0 = arith.constant 0 : i32
    %c0_i32_1 = arith.constant 0 : i32
    return %c0_i32, %c0_i32_0 : i32, i32
  }
  func.func @transform_7(%arg0: i32) -> (i32, i32) {
    %c0_i32 = arith.constant 0 : i32
    %c0_i32_0 = arith.constant 0 : i32
    %c0_i32_1 = arith.constant 0 : i32
    return %c0_i32, %c0_i32_0 : i32, i32
  }
  func.func @transform_8(%arg0: i32) -> (i32, i32) {
    %c0_i32 = arith.constant 0 : i32
    %c0_i32_0 = arith.constant 0 : i32
    %c0_i32_1 = arith.constant 0 : i32
    return %c0_i32, %c0_i32_0 : i32, i32
  }
  func.func @transform_9(%arg0: i32) -> (i32, i32) {
    %c0_i32 = arith.constant 0 : i32
    %c0_i32_0 = arith.constant 0 : i32
    %c0_i32_1 = arith.constant 0 : i32
    return %c0_i32, %c0_i32_0 : i32, i32
  }
  func.func @transform_10(%arg0: i32) -> (i32, i32) {
    %c0_i32 = arith.constant 0 : i32
    %c0_i32_0 = arith.constant 0 : i32
    %c0_i32_1 = arith.constant 0 : i32
    return %c0_i32, %c0_i32_0 : i32, i32
  }
  func.func @transform_11(%arg0: i32) -> (i32, i32) {
    %c0_i32 = arith.constant 0 : i32
    %c0_i32_0 = arith.constant 0 : i32
    return %arg0, %c0_i32 : i32, i32
  }
  func.func @transform_12(%arg0: i32) -> (i32, i32) {
    %c0_i32 = arith.constant 0 : i32
    %c0_i32_0 = arith.constant 0 : i32
    return %arg0, %c0_i32 : i32, i32
  }
  func.func @transform_13(%arg0: i32) -> (i32, i32) {
    %c0_i32 = arith.constant 0 : i32
    %c0_i32_0 = arith.constant 0 : i32
    return %arg0, %c0_i32 : i32, i32
  }
}

</mosaic_0001>

<llo_original>
// kernel: vq_vae_forward.1
$region0: #{vq_vae_forward.1}
  #allocation0 [shape = 'u32[]', space=smem, size = 0x4, offset = 0x4, fixed_abs, tag = 'smem constant byte address 0x4 - core index']
  #allocation1 [shape = 'u32[144,128]{1,0:T(1,128)}', space=vmem, size = 0x12000, scoped, tag = 'internal scratch']
  %s0 = inlined_call_operand.vmem [shape: bf16[16,896], index: 0, kind: input, shape index: {}]
  %s1 = inlined_call_operand.hbm [shape: bf16[896,512], index: 1, kind: input, shape index: {}]
  %s2 = inlined_call_operand.vmem [shape: f32[1,512], index: 2, kind: input, shape index: {}]
  %s3 = inlined_call_operand.hbm [shape: bf16[512,256], index: 3, kind: input, shape index: {}]
  %s4 = inlined_call_operand.vmem [shape: f32[1,256], index: 4, kind: input, shape index: {}]
  %s5 = inlined_call_operand.vmem [shape: f32[10,256], index: 5, kind: input, shape index: {}]
  %s6 = inlined_call_operand.hbm [shape: bf16[256,256], index: 6, kind: input, shape index: {}]
  %s7 = inlined_call_operand.hbm [shape: bf16[256,512], index: 7, kind: input, shape index: {}]
  %s8 = inlined_call_operand.vmem [shape: f32[1,512], index: 8, kind: input, shape index: {}]
  %s9 = inlined_call_operand.hbm [shape: bf16[512,896], index: 9, kind: input, shape index: {}]
  %s10 = inlined_call_operand.vmem [shape: f32[1,896], index: 10, kind: input, shape index: {}]
  %s11 = inlined_call_operand.vmem [shape: f32[16,896], index: 11, kind: output, shape index: {0}]
  %s12 = inlined_call_operand.vmem [shape: f32[16,256], index: 12, kind: output, shape index: {1}]
  %s13 = inlined_call_operand.vmem [shape: f32[16,256], index: 13, kind: output, shape index: {2}]
  %14 = xla_tuple %s11, %s12, %s13
  %s15 = sld [smem:[#allocation0]]
  $region90: #{vq_vae_forward.1} parent=0
    _
  %s17 = ssub.s32 1, %s15
  %s18 = scalar_select 0, %s17, %s15
  $region1: #{vq_vae_forward.1} parent=0
    #allocation2 [shape = 'u8[917504]{0}', space=vmem, size = 0xe0000, scoped, tag = 'input window, operand 1, single buffered']
    #allocation3 [shape = 's32[1]{0}', space=sflag, size = 0x4, scoped, tag = 'scoped memory for vq_vae_forward.1']
    #allocation4 [shape = 'u8[262144]{0}', space=vmem, size = 0x40000, scoped, tag = 'input window, operand 3, single buffered']
    #allocation5 [shape = 's32[1]{0}', space=sflag, size = 0x4, scoped, tag = 'scoped memory for vq_vae_forward.1']
    #allocation6 [shape = 'u8[131072]{0}', space=vmem, size = 0x20000, scoped, tag = 'input window, operand 6, single buffered']
    #allocation7 [shape = 'u8[262144]{0}', space=vmem, size = 0x40000, scoped, tag = 'input window, operand 7, single buffered']
    #allocation8 [shape = 's32[1]{0}', space=sflag, size = 0x4, scoped, tag = 'scoped memory for vq_vae_forward.1']
    #allocation9 [shape = 'u8[917504]{0}', space=vmem, size = 0xe0000, scoped, tag = 'input window, operand 9, single buffered']
    %19 = vsyncpa [#allocation3], 0
    %20 = vsyncpa [#allocation5], 0
    %21 = vsyncpa [#allocation8], 0
    // Predicated region
    $region2: #{vq_vae_forward.1} parent=1 // pred_check
      _
    $region3: #{vq_vae_forward.1} parent=1 // pred_check_branch
      %23 = sbr.rel (0) target = $region5
    $region4: #{vq_vae_forward.1} parent=1 // pred_region
      _
    $region5: #{vq_vae_forward.1} parent=1 // pred_fallthru
      _
    // Predicated region
    $region6: #{vq_vae_forward.1} parent=1 // pred_check
      _
    $region7: #{vq_vae_forward.1} parent=1 // pred_check_branch
      %25 = sbr.rel (0) target = $region9
    $region8: #{vq_vae_forward.1} parent=1 // pred_region
      %s27 = ssub.s32 28672, 28672
      %28 = vsyncadd [#allocation3], %s27
      %s29 = sshll.u32 [#allocation2], 4
      %s30 = int_to_ptr.vmem [resolvable:$true] %s29
      %35 = dma.hbm_to_vmem [thread:$0]  %s1, 28672, %s30, [#allocation3], 256, 256, 16
    $region9: #{vq_vae_forward.1} parent=1 // pred_fallthru
      _
    // Predicated region
    $region10: #{vq_vae_forward.1} parent=1 // pred_check
      _
    $region11: #{vq_vae_forward.1} parent=1 // pred_check_branch
      %37 = sbr.rel (0) target = $region13
    $region12: #{vq_vae_forward.1} parent=1 // pred_region
      _
    $region13: #{vq_vae_forward.1} parent=1 // pred_fallthru
      _
    // Predicated region
    $region14: #{vq_vae_forward.1} parent=1 // pred_check
      _
    $region15: #{vq_vae_forward.1} parent=1 // pred_check_branch
      %39 = sbr.rel (0) target = $region17
    $region16: #{vq_vae_forward.1} parent=1 // pred_region
      %s41 = ssub.s32 8192, 8192
      %42 = vsyncadd [#allocation5], %s41
      %s43 = sshll.u32 [#allocation4], 4
      %s44 = int_to_ptr.vmem [resolvable:$true] %s43
      %49 = dma.hbm_to_vmem [thread:$0]  %s3, 8192, %s44, [#allocation5], 128, 128, 8
    $region17: #{vq_vae_forward.1} parent=1 // pred_fallthru
      _
    // Predicated region
    $region18: #{vq_vae_forward.1} parent=1 // pred_check
      _
    $region19: #{vq_vae_forward.1} parent=1 // pred_check_branch
      %51 = sbr.rel (0) target = $region21
    $region20: #{vq_vae_forward.1} parent=1 // pred_region
      _
    $region21: #{vq_vae_forward.1} parent=1 // pred_fallthru
      _
    // Predicated region
    $region22: #{vq_vae_forward.1} parent=1 // pred_check
      _
    $region23: #{vq_vae_forward.1} parent=1 // pred_check_branch
      %53 = sbr.rel (0) target = $region25
    $region24: #{vq_vae_forward.1} parent=1 // pred_region
      _
    $region25: #{vq_vae_forward.1} parent=1 // pred_fallthru
      _
    // Predicated region
    $region26: #{vq_vae_forward.1} parent=1 // pred_check
      _
    $region27: #{vq_vae_forward.1} parent=1 // pred_check_branch
      %55 = sbr.rel (0) target = $region29
    $region28: #{vq_vae_forward.1} parent=1 // pred_region
      %s57 = ssub.s32 4096, 4096
      %58 = vsyncadd [#allocation5], %s57
      %s59 = sshll.u32 [#allocation6], 4
      %s60 = int_to_ptr.vmem [resolvable:$true] %s59
      %65 = dma.hbm_to_vmem [thread:$0]  %s6, 4096, %s60, [#allocation5], 128, 128, 8
    $region29: #{vq_vae_forward.1} parent=1 // pred_fallthru
      _
    // Predicated region
    $region30: #{vq_vae_forward.1} parent=1 // pred_check
      _
    $region31: #{vq_vae_forward.1} parent=1 // pred_check_branch
      %67 = sbr.rel (0) target = $region33
    $region32: #{vq_vae_forward.1} parent=1 // pred_region
      %s69 = ssub.s32 8192, 8192
      %70 = vsyncadd [#allocation8], %s69
      %s71 = sshll.u32 [#allocation7], 4
      %s72 = int_to_ptr.vmem [resolvable:$true] %s71
      %77 = dma.hbm_to_vmem [thread:$0]  %s7, 8192, %s72, [#allocation8], 256, 256, 16
    $region33: #{vq_vae_forward.1} parent=1 // pred_fallthru
      _
    // Predicated region
    $region34: #{vq_vae_forward.1} parent=1 // pred_check
      _
    $region35: #{vq_vae_forward.1} parent=1 // pred_check_branch
      %79 = sbr.rel (0) target = $region37
    $region36: #{vq_vae_forward.1} parent=1 // pred_region
      _
    $region37: #{vq_vae_forward.1} parent=1 // pred_fallthru
      _
    // Predicated region
    $region38: #{vq_vae_forward.1} parent=1 // pred_check
      _
    $region39: #{vq_vae_forward.1} parent=1 // pred_check_branch
      %81 = sbr.rel (0) target = $region41
    $region40: #{vq_vae_forward.1} parent=1 // pred_region
      %s83 = ssub.s32 28672, 28672
      %84 = vsyncadd [#allocation8], %s83
      %s85 = sshll.u32 [#allocation9], 4
      %s86 = int_to_ptr.vmem [resolvable:$true] %s85
      %91 = dma.hbm_to_vmem [thread:$0]  %s9, 28672, %s86, [#allocation8], 448, 448, 28
    $region41: #{vq_vae_forward.1} parent=1 // pred_fallthru
      _
    // Predicated region
    $region42: #{vq_vae_forward.1} parent=1 // pred_check
      _
    $region43: #{vq_vae_forward.1} parent=1 // pred_check_branch
      %93 = sbr.rel (0) target = $region45
    $region44: #{vq_vae_forward.1} parent=1 // pred_region
      _
    $region45: #{vq_vae_forward.1} parent=1 // pred_fallthru
      _
    // Predicated region
    $region46: #{vq_vae_forward.1} parent=1 // pred_check
      _
    $region47: #{vq_vae_forward.1} parent=1 // pred_check_branch
      %95 = sbr.rel (0) target = $region49
    $region48: #{vq_vae_forward.1} parent=1 // pred_region
      %96 = dma.done [#allocation3], 28672
    $region49: #{vq_vae_forward.1} parent=1 // pred_fallthru
      _
    // Predicated region
    $region50: #{vq_vae_forward.1} parent=1 // pred_check
      _
    $region51: #{vq_vae_forward.1} parent=1 // pred_check_branch
      %98 = sbr.rel (0) target = $region53
    $region52: #{vq_vae_forward.1} parent=1 // pred_region
      %99 = dma.done [#allocation5], 8192
    $region53: #{vq_vae_forward.1} parent=1 // pred_fallthru
      _
    // Predicated region
    $region54: #{vq_vae_forward.1} parent=1 // pred_check
      _
    $region55: #{vq_vae_forward.1} parent=1 // pred_check_branch
      %101 = sbr.rel (0) target = $region57
    $region56: #{vq_vae_forward.1} parent=1 // pred_region
      %102 = dma.done [#allocation5], 4096
    $region57: #{vq_vae_forward.1} parent=1 // pred_fallthru
      _
    // Predicated region
    $region58: #{vq_vae_forward.1} parent=1 // pred_check
      _
    $region59: #{vq_vae_forward.1} parent=1 // pred_check_branch
      %104 = sbr.rel (0) target = $region61
    $region60: #{vq_vae_forward.1} parent=1 // pred_region
      %105 = dma.done [#allocation8], 8192
    $region61: #{vq_vae_forward.1} parent=1 // pred_fallthru
      _
    // Predicated region
    $region62: #{vq_vae_forward.1} parent=1 // pred_check
      _
    $region63: #{vq_vae_forward.1} parent=1 // pred_check_branch
      %107 = sbr.rel (0) target = $region65
    $region64: #{vq_vae_forward.1} parent=1 // pred_region
      %108 = dma.done [#allocation8], 28672
    $region65: #{vq_vae_forward.1} parent=1 // pred_fallthru
      _
    %v110 = vld [vmem:[%s0] sm:$0xff]
    %v111 = vld [vmem:[%s0 + $0x8] sm:$0xff]
    %v112 = vld [vmem:[%s0 + $0x10] sm:$0xff]
    %v113 = vld [vmem:[%s0 + $0x18] sm:$0xf]
    %v114 = vld [vmem:[%s0 + $0x1c] sm:$0xff]
    %v115 = vld [vmem:[%s0 + $0x24] sm:$0xff]
    %v116 = vld [vmem:[%s0 + $0x2c] sm:$0xff]
    %v117 = vld [vmem:[%s0 + $0x34] sm:$0xf]
    %v118 = vld [vmem:[#allocation2] sm:$0xff]
    %v119 = vld [vmem:[#allocation2 + $0x8] sm:$0xff]
    %v120 = vld [vmem:[#allocation2 + $0x10] sm:$0xff]
    %v121 = vld [vmem:[#allocation2 + $0x18] sm:$0xff]
    %v122 = vld [vmem:[#allocation2 + $0x20] sm:$0xff]
    %v123 = vld [vmem:[#allocation2 + $0x28] sm:$0xff]
    %v124 = vld [vmem:[#allocation2 + $0x30] sm:$0xff]
    %v125 = vld [vmem:[#allocation2 + $0x38] sm:$0xff]
    %v126 = vld [vmem:[#allocation2 + $0x40] sm:$0xff]
    %v127 = vld [vmem:[#allocation2 + $0x48] sm:$0xff]
    %v128 = vld [vmem:[#allocation2 + $0x50] sm:$0xff]
    %v129 = vld [vmem:[#allocation2 + $0x58] sm:$0xff]
    %v130 = vld [vmem:[#allocation2 + $0x60] sm:$0xff]
    %v131 = vld [vmem:[#allocation2 + $0x68] sm:$0xff]
    %v132 = vld [vmem:[#allocation2 + $0x70] sm:$0xff]
    %v133 = vld [vmem:[#allocation2 + $0x78] sm:$0xff]
    %v134 = vld [vmem:[#allocation2 + $0x80] sm:$0xff]
    %v135 = vld [vmem:[#allocation2 + $0x88] sm:$0xff]
    %v136 = vld [vmem:[#allocation2 + $0x90] sm:$0xff]
    %v137 = vld [vmem:[#allocation2 + $0x98] sm:$0xff]
    %v138 = vld [vmem:[#allocation2 + $0xa0] sm:$0xff]
    %v139 = vld [vmem:[#allocation2 + $0xa8] sm:$0xff]
    %v140 = vld [vmem:[#allocation2 + $0xb0] sm:$0xff]
    %v141 = vld [vmem:[#allocation2 + $0xb8] sm:$0xff]
    %v142 = vld [vmem:[#allocation2 + $0xc0] sm:$0xff]
    %v143 = vld [vmem:[#allocation2 + $0xc8] sm:$0xff]
    %v144 = vld [vmem:[#allocation2 + $0xd0] sm:$0xff]
    %v145 = vld [vmem:[#allocation2 + $0xd8] sm:$0xff]
    %v146 = vld [vmem:[#allocation2 + $0xe0] sm:$0xff]
    %v147 = vld [vmem:[#allocation2 + $0xe8] sm:$0xff]
    %v148 = vld [vmem:[#allocation2 + $0xf0] sm:$0xff]
    %v149 = vld [vmem:[#allocation2 + $0xf8] sm:$0xff]
    %v150 = vld [vmem:[#allocation2 + $0x100] sm:$0xff]
    %v151 = vld [vmem:[#allocation2 + $0x108] sm:$0xff]
    %v152 = vld [vmem:[#allocation2 + $0x110] sm:$0xff]
    %v153 = vld [vmem:[#allocation2 + $0x118] sm:$0xff]
    %v154 = vld [vmem:[#allocation2 + $0x120] sm:$0xff]
    %v155 = vld [vmem:[#allocation2 + $0x128] sm:$0xff]
    %v156 = vld [vmem:[#allocation2 + $0x130] sm:$0xff]
    %v157 = vld [vmem:[#allocation2 + $0x138] sm:$0xff]
    %v158 = vld [vmem:[#allocation2 + $0x140] sm:$0xff]
    %v159 = vld [vmem:[#allocation2 + $0x148] sm:$0xff]
    %v160 = vld [vmem:[#allocation2 + $0x150] sm:$0xff]
    %v161 = vld [vmem:[#allocation2 + $0x158] sm:$0xff]
    %v162 = vld [vmem:[#allocation2 + $0x160] sm:$0xff]
    %v163 = vld [vmem:[#allocation2 + $0x168] sm:$0xff]
    %v164 = vld [vmem:[#allocation2 + $0x170] sm:$0xff]
    %v165 = vld [vmem:[#allocation2 + $0x178] sm:$0xff]
    %v166 = vld [vmem:[#allocation2 + $0x180] sm:$0xff]
    %v167 = vld [vmem:[#allocation2 + $0x188] sm:$0xff]
    %v168 = vld [vmem:[#allocation2 + $0x190] sm:$0xff]
    %v169 = vld [vmem:[#allocation2 + $0x198] sm:$0xff]
    %v170 = vld [vmem:[#allocation2 + $0x1a0] sm:$0xff]
    %v171 = vld [vmem:[#allocation2 + $0x1a8] sm:$0xff]
    %v172 = vld [vmem:[#allocation2 + $0x1b0] sm:$0xff]
    %v173 = vld [vmem:[#allocation2 + $0x1b8] sm:$0xff]
    %v174 = vld [vmem:[#allocation2 + $0x1c0] sm:$0xff]
    %v175 = vld [vmem:[#allocation2 + $0x1c8] sm:$0xff]
    %v176 = vld [vmem:[#allocation2 + $0x1d0] sm:$0xff]
    %v177 = vld [vmem:[#allocation2 + $0x1d8] sm:$0xff]
    %v178 = vld [vmem:[#allocation2 + $0x1e0] sm:$0xff]
    %v179 = vld [vmem:[#allocation2 + $0x1e8] sm:$0xff]
    %v180 = vld [vmem:[#allocation2 + $0x1f0] sm:$0xff]
    %v181 = vld [vmem:[#allocation2 + $0x1f8] sm:$0xff]
    %v182 = vld [vmem:[#allocation2 + $0x200] sm:$0xff]
    %v183 = vld [vmem:[#allocation2 + $0x208] sm:$0xff]
    %v184 = vld [vmem:[#allocation2 + $0x210] sm:$0xff]
    %v185 = vld [vmem:[#allocation2 + $0x218] sm:$0xff]
    %v186 = vld [vmem:[#allocation2 + $0x220] sm:$0xff]
    %v187 = vld [vmem:[#allocation2 + $0x228] sm:$0xff]
    %v188 = vld [vmem:[#allocation2 + $0x230] sm:$0xff]
    %v189 = vld [vmem:[#allocation2 + $0x238] sm:$0xff]
    %v190 = vld [vmem:[#allocation2 + $0x240] sm:$0xff]
    %v191 = vld [vmem:[#allocation2 + $0x248] sm:$0xff]
    %v192 = vld [vmem:[#allocation2 + $0x250] sm:$0xff]
    %v193 = vld [vmem:[#allocation2 + $0x258] sm:$0xff]
    %v194 = vld [vmem:[#allocation2 + $0x260] sm:$0xff]
    %v195 = vld [vmem:[#allocation2 + $0x268] sm:$0xff]
    %v196 = vld [vmem:[#allocation2 + $0x270] sm:$0xff]
    %v197 = vld [vmem:[#allocation2 + $0x278] sm:$0xff]
    %v198 = vld [vmem:[#allocation2 + $0x280] sm:$0xff]
    %v199 = vld [vmem:[#allocation2 + $0x288] sm:$0xff]
    %v200 = vld [vmem:[#allocation2 + $0x290] sm:$0xff]
    %v201 = vld [vmem:[#allocation2 + $0x298] sm:$0xff]
    %v202 = vld [vmem:[#allocation2 + $0x2a0] sm:$0xff]
    %v203 = vld [vmem:[#allocation2 + $0x2a8] sm:$0xff]
    %v204 = vld [vmem:[#allocation2 + $0x2b0] sm:$0xff]
    %v205 = vld [vmem:[#allocation2 + $0x2b8] sm:$0xff]
    %v206 = vld [vmem:[#allocation2 + $0x2c0] sm:$0xff]
    %v207 = vld [vmem:[#allocation2 + $0x2c8] sm:$0xff]
    %v208 = vld [vmem:[#allocation2 + $0x2d0] sm:$0xff]
    %v209 = vld [vmem:[#allocation2 + $0x2d8] sm:$0xff]
    %v210 = vld [vmem:[#allocation2 + $0x2e0] sm:$0xff]
    %v211 = vld [vmem:[#allocation2 + $0x2e8] sm:$0xff]
    %v212 = vld [vmem:[#allocation2 + $0x2f0] sm:$0xff]
    %v213 = vld [vmem:[#allocation2 + $0x2f8] sm:$0xff]
    %v214 = vld [vmem:[#allocation2 + $0x300] sm:$0xff]
    %v215 = vld [vmem:[#allocation2 + $0x308] sm:$0xff]
    %v216 = vld [vmem:[#allocation2 + $0x310] sm:$0xff]
    %v217 = vld [vmem:[#allocation2 + $0x318] sm:$0xff]
    %v218 = vld [vmem:[#allocation2 + $0x320] sm:$0xff]
    %v219 = vld [vmem:[#allocation2 + $0x328] sm:$0xff]
    %v220 = vld [vmem:[#allocation2 + $0x330] sm:$0xff]
    %v221 = vld [vmem:[#allocation2 + $0x338] sm:$0xff]
    %v222 = vld [vmem:[#allocation2 + $0x340] sm:$0xff]
    %v223 = vld [vmem:[#allocation2 + $0x348] sm:$0xff]
    %v224 = vld [vmem:[#allocation2 + $0x350] sm:$0xff]
    %v225 = vld [vmem:[#allocation2 + $0x358] sm:$0xff]
    %v226 = vld [vmem:[#allocation2 + $0x360] sm:$0xff]
    %v227 = vld [vmem:[#allocation2 + $0x368] sm:$0xff]
    %v228 = vld [vmem:[#allocation2 + $0x370] sm:$0xff]
    %v229 = vld [vmem:[#allocation2 + $0x378] sm:$0xff]
    %v230 = vld [vmem:[#allocation2 + $0x380] sm:$0xff]
    %v231 = vld [vmem:[#allocation2 + $0x388] sm:$0xff]
    %v232 = vld [vmem:[#allocation2 + $0x390] sm:$0xff]
    %v233 = vld [vmem:[#allocation2 + $0x398] sm:$0xff]
    %v234 = vld [vmem:[#allocation2 + $0x3a0] sm:$0xff]
    %v235 = vld [vmem:[#allocation2 + $0x3a8] sm:$0xff]
    %v236 = vld [vmem:[#allocation2 + $0x3b0] sm:$0xff]
    %v237 = vld [vmem:[#allocation2 + $0x3b8] sm:$0xff]
    %v238 = vld [vmem:[#allocation2 + $0x3c0] sm:$0xff]
    %v239 = vld [vmem:[#allocation2 + $0x3c8] sm:$0xff]
    %v240 = vld [vmem:[#allocation2 + $0x3d0] sm:$0xff]
    %v241 = vld [vmem:[#allocation2 + $0x3d8] sm:$0xff]
    %v242 = vld [vmem:[#allocation2 + $0x3e0] sm:$0xff]
    %v243 = vld [vmem:[#allocation2 + $0x3e8] sm:$0xff]
    %v244 = vld [vmem:[#allocation2 + $0x3f0] sm:$0xff]
    %v245 = vld [vmem:[#allocation2 + $0x3f8] sm:$0xff]
    %v246 = vld [vmem:[#allocation2 + $0x400] sm:$0xff]
    %v247 = vld [vmem:[#allocation2 + $0x408] sm:$0xff]
    %v248 = vld [vmem:[#allocation2 + $0x410] sm:$0xff]
    %v249 = vld [vmem:[#allocation2 + $0x418] sm:$0xff]
    %v250 = vld [vmem:[#allocation2 + $0x420] sm:$0xff]
    %v251 = vld [vmem:[#allocation2 + $0x428] sm:$0xff]
    %v252 = vld [vmem:[#allocation2 + $0x430] sm:$0xff]
    %v253 = vld [vmem:[#allocation2 + $0x438] sm:$0xff]
    %v254 = vld [vmem:[#allocation2 + $0x440] sm:$0xff]
    %v255 = vld [vmem:[#allocation2 + $0x448] sm:$0xff]
    %v256 = vld [vmem:[#allocation2 + $0x450] sm:$0xff]
    %v257 = vld [vmem:[#allocation2 + $0x458] sm:$0xff]
    %v258 = vld [vmem:[#allocation2 + $0x460] sm:$0xff]
    %v259 = vld [vmem:[#allocation2 + $0x468] sm:$0xff]
    %v260 = vld [vmem:[#allocation2 + $0x470] sm:$0xff]
    %v261 = vld [vmem:[#allocation2 + $0x478] sm:$0xff]
    %v262 = vld [vmem:[#allocation2 + $0x480] sm:$0xff]
    %v263 = vld [vmem:[#allocation2 + $0x488] sm:$0xff]
    %v264 = vld [vmem:[#allocation2 + $0x490] sm:$0xff]
    %v265 = vld [vmem:[#allocation2 + $0x498] sm:$0xff]
    %v266 = vld [vmem:[#allocation2 + $0x4a0] sm:$0xff]
    %v267 = vld [vmem:[#allocation2 + $0x4a8] sm:$0xff]
    %v268 = vld [vmem:[#allocation2 + $0x4b0] sm:$0xff]
    %v269 = vld [vmem:[#allocation2 + $0x4b8] sm:$0xff]
    %v270 = vld [vmem:[#allocation2 + $0x4c0] sm:$0xff]
    %v271 = vld [vmem:[#allocation2 + $0x4c8] sm:$0xff]
    %v272 = vld [vmem:[#allocation2 + $0x4d0] sm:$0xff]
    %v273 = vld [vmem:[#allocation2 + $0x4d8] sm:$0xff]
    %v274 = vld [vmem:[#allocation2 + $0x4e0] sm:$0xff]
    %v275 = vld [vmem:[#allocation2 + $0x4e8] sm:$0xff]
    %v276 = vld [vmem:[#allocation2 + $0x4f0] sm:$0xff]
    %v277 = vld [vmem:[#allocation2 + $0x4f8] sm:$0xff]
    %v278 = vld [vmem:[#allocation2 + $0x500] sm:$0xff]
    %v279 = vld [vmem:[#allocation2 + $0x508] sm:$0xff]
    %v280 = vld [vmem:[#allocation2 + $0x510] sm:$0xff]
    %v281 = vld [vmem:[#allocation2 + $0x518] sm:$0xff]
    %v282 = vld [vmem:[#allocation2 + $0x520] sm:$0xff]
    %v283 = vld [vmem:[#allocation2 + $0x528] sm:$0xff]
    %v284 = vld [vmem:[#allocation2 + $0x530] sm:$0xff]
    %v285 = vld [vmem:[#allocation2 + $0x538] sm:$0xff]
    %v286 = vld [vmem:[#allocation2 + $0x540] sm:$0xff]
    %v287 = vld [vmem:[#allocation2 + $0x548] sm:$0xff]
    %v288 = vld [vmem:[#allocation2 + $0x550] sm:$0xff]
    %v289 = vld [vmem:[#allocation2 + $0x558] sm:$0xff]
    %v290 = vld [vmem:[#allocation2 + $0x560] sm:$0xff]
    %v291 = vld [vmem:[#allocation2 + $0x568] sm:$0xff]
    %v292 = vld [vmem:[#allocation2 + $0x570] sm:$0xff]
    %v293 = vld [vmem:[#allocation2 + $0x578] sm:$0xff]
    %v294 = vld [vmem:[#allocation2 + $0x580] sm:$0xff]
    %v295 = vld [vmem:[#allocation2 + $0x588] sm:$0xff]
    %v296 = vld [vmem:[#allocation2 + $0x590] sm:$0xff]
    %v297 = vld [vmem:[#allocation2 + $0x598] sm:$0xff]
    %v298 = vld [vmem:[#allocation2 + $0x5a0] sm:$0xff]
    %v299 = vld [vmem:[#allocation2 + $0x5a8] sm:$0xff]
    %v300 = vld [vmem:[#allocation2 + $0x5b0] sm:$0xff]
    %v301 = vld [vmem:[#allocation2 + $0x5b8] sm:$0xff]
    %v302 = vld [vmem:[#allocation2 + $0x5c0] sm:$0xff]
    %v303 = vld [vmem:[#allocation2 + $0x5c8] sm:$0xff]
    %v304 = vld [vmem:[#allocation2 + $0x5d0] sm:$0xff]
    %v305 = vld [vmem:[#allocation2 + $0x5d8] sm:$0xff]
    %v306 = vld [vmem:[#allocation2 + $0x5e0] sm:$0xff]
    %v307 = vld [vmem:[#allocation2 + $0x5e8] sm:$0xff]
    %v308 = vld [vmem:[#allocation2 + $0x5f0] sm:$0xff]
    %v309 = vld [vmem:[#allocation2 + $0x5f8] sm:$0xff]
    %v310 = vld [vmem:[#allocation2 + $0x600] sm:$0xff]
    %v311 = vld [vmem:[#allocation2 + $0x608] sm:$0xff]
    %v312 = vld [vmem:[#allocation2 + $0x610] sm:$0xff]
    %v313 = vld [vmem:[#allocation2 + $0x618] sm:$0xff]
    %v314 = vld [vmem:[#allocation2 + $0x620] sm:$0xff]
    %v315 = vld [vmem:[#allocation2 + $0x628] sm:$0xff]
    %v316 = vld [vmem:[#allocation2 + $0x630] sm:$0xff]
    %v317 = vld [vmem:[#allocation2 + $0x638] sm:$0xff]
    %v318 = vld [vmem:[#allocation2 + $0x640] sm:$0xff]
    %v319 = vld [vmem:[#allocation2 + $0x648] sm:$0xff]
    %v320 = vld [vmem:[#allocation2 + $0x650] sm:$0xff]
    %v321 = vld [vmem:[#allocation2 + $0x658] sm:$0xff]
    %v322 = vld [vmem:[#allocation2 + $0x660] sm:$0xff]
    %v323 = vld [vmem:[#allocation2 + $0x668] sm:$0xff]
    %v324 = vld [vmem:[#allocation2 + $0x670] sm:$0xff]
    %v325 = vld [vmem:[#allocation2 + $0x678] sm:$0xff]
    %v326 = vld [vmem:[#allocation2 + $0x680] sm:$0xff]
    %v327 = vld [vmem:[#allocation2 + $0x688] sm:$0xff]
    %v328 = vld [vmem:[#allocation2 + $0x690] sm:$0xff]
    %v329 = vld [vmem:[#allocation2 + $0x698] sm:$0xff]
    %v330 = vld [vmem:[#allocation2 + $0x6a0] sm:$0xff]
    %v331 = vld [vmem:[#allocation2 + $0x6a8] sm:$0xff]
    %v332 = vld [vmem:[#allocation2 + $0x6b0] sm:$0xff]
    %v333 = vld [vmem:[#allocation2 + $0x6b8] sm:$0xff]
    %v334 = vld [vmem:[#allocation2 + $0x6c0] sm:$0xff]
    %v335 = vld [vmem:[#allocation2 + $0x6c8] sm:$0xff]
    %v336 = vld [vmem:[#allocation2 + $0x6d0] sm:$0xff]
    %v337 = vld [vmem:[#allocation2 + $0x6d8] sm:$0xff]
    %v338 = vld [vmem:[#allocation2 + $0x6e0] sm:$0xff]
    %v339 = vld [vmem:[#allocation2 + $0x6e8] sm:$0xff]
    %v340 = vld [vmem:[#allocation2 + $0x6f0] sm:$0xff]
    %v341 = vld [vmem:[#allocation2 + $0x6f8] sm:$0xff]
    %v342 = vld [vmem:[%s2] sm:$0xf]
    %v344 = vlaneseq
    %v345 = vshrl.u32 %v344, 7
    %v346 = vsub.s32 0, %v345
    %v347 = vrot.slane %v342, %v346
    %v348 = vlaneseq
    %v349 = vshrl.u32 %v348, 7
    %v350 = vsub.s32 1, %v349
    %v351 = vrot.slane %v342, %v350
    %v352 = vlaneseq
    %v353 = vshrl.u32 %v352, 7
    %v354 = vsub.s32 2, %v353
    %v355 = vrot.slane %v342, %v354
    %v356 = vlaneseq
    %v357 = vshrl.u32 %v356, 7
    %v358 = vsub.s32 3, %v357
    %v359 = vrot.slane %v342, %v358
    %v372 = vunpack.c.l.b16 %v110
    %v373 = vunpack.c.h.b16 %v110
    %v374 = vunpack.c.l.b16 %v111
    %v375 = vunpack.c.h.b16 %v111
    %v376 = vunpack.c.l.b16 %v112
    %v377 = vunpack.c.h.b16 %v112
    %v378 = vunpack.c.l.b16 %v113
    %v379 = vunpack.c.l.b16 %v114
    %v380 = vunpack.c.h.b16 %v114
    %v381 = vunpack.c.l.b16 %v115
    %v382 = vunpack.c.h.b16 %v115
    %v383 = vunpack.c.l.b16 %v116
    %v384 = vunpack.c.h.b16 %v116
    %v385 = vunpack.c.l.b16 %v117
    %v386 = vpack.c.b16 %v379, %v372
    %v387 = vpack.c.b16 %v380, %v373
    %v388 = vpack.c.b16 %v381, %v374
    %v389 = vpack.c.b16 %v382, %v375
    %v390 = vpack.c.b16 %v383, %v376
    %v391 = vpack.c.b16 %v384, %v377
    %v392 = vpack.c.b16 %v385, %v378
    %v624 = vunpack.c.l.b16 %v118
    %v625 = vunpack.c.h.b16 %v118
    %v626 = vunpack.c.l.b16 %v119
    %v627 = vunpack.c.h.b16 %v119
    %v628 = vunpack.c.l.b16 %v120
    %v629 = vunpack.c.h.b16 %v120
    %v630 = vunpack.c.l.b16 %v121
    %v631 = vunpack.c.h.b16 %v121
    %v632 = vunpack.c.l.b16 %v122
    %v633 = vunpack.c.h.b16 %v122
    %v634 = vunpack.c.l.b16 %v123
    %v635 = vunpack.c.h.b16 %v123
    %v636 = vunpack.c.l.b16 %v124
    %v637 = vunpack.c.h.b16 %v124
    %v638 = vunpack.c.l.b16 %v125
    %v639 = vunpack.c.h.b16 %v125
    %v640 = vunpack.c.l.b16 %v126
    %v641 = vunpack.c.h.b16 %v126
    %v642 = vunpack.c.l.b16 %v127
    %v643 = vunpack.c.h.b16 %v127
    %v644 = vunpack.c.l.b16 %v128
    %v645 = vunpack.c.h.b16 %v128
    %v646 = vunpack.c.l.b16 %v129
    %v647 = vunpack.c.h.b16 %v129
    %v648 = vunpack.c.l.b16 %v130
    %v649 = vunpack.c.h.b16 %v130
    %v650 = vunpack.c.l.b16 %v131
    %v651 = vunpack.c.h.b16 %v131
    %v652 = vunpack.c.l.b16 %v132
    %v653 = vunpack.c.h.b16 %v132
    %v654 = vunpack.c.l.b16 %v133
    %v655 = vunpack.c.h.b16 %v133
    %v656 = vunpack.c.l.b16 %v134
    %v657 = vunpack.c.h.b16 %v134
    %v658 = vunpack.c.l.b16 %v135
    %v659 = vunpack.c.h.b16 %v135
    %v660 = vunpack.c.l.b16 %v136
    %v661 = vunpack.c.h.b16 %v136
    %v662 = vunpack.c.l.b16 %v137
    %v663 = vunpack.c.h.b16 %v137
    %v664 = vunpack.c.l.b16 %v138
    %v665 = vunpack.c.h.b16 %v138
    %v666 = vunpack.c.l.b16 %v139
    %v667 = vunpack.c.h.b16 %v139
    %v668 = vunpack.c.l.b16 %v140
    %v669 = vunpack.c.h.b16 %v140
    %v670 = vunpack.c.l.b16 %v141
    %v671 = vunpack.c.h.b16 %v141
    %v672 = vunpack.c.l.b16 %v142
    %v673 = vunpack.c.h.b16 %v142
    %v674 = vunpack.c.l.b16 %v143
    %v675 = vunpack.c.h.b16 %v143
    %v676 = vunpack.c.l.b16 %v144
    %v677 = vunpack.c.h.b16 %v144
    %v678 = vunpack.c.l.b16 %v145
    %v679 = vunpack.c.h.b16 %v145
    %v680 = vunpack.c.l.b16 %v146
    %v681 = vunpack.c.h.b16 %v146
    %v682 = vunpack.c.l.b16 %v147
    %v683 = vunpack.c.h.b16 %v147
    %v684 = vunpack.c.l.b16 %v148
    %v685 = vunpack.c.h.b16 %v148
    %v686 = vunpack.c.l.b16 %v149
    %v687 = vunpack.c.h.b16 %v149
    %v688 = vunpack.c.l.b16 %v150
    %v689 = vunpack.c.h.b16 %v150
    %v690 = vunpack.c.l.b16 %v151
    %v691 = vunpack.c.h.b16 %v151
    %v692 = vunpack.c.l.b16 %v152
    %v693 = vunpack.c.h.b16 %v152
    %v694 = vunpack.c.l.b16 %v153
    %v695 = vunpack.c.h.b16 %v153
    %v696 = vunpack.c.l.b16 %v154
    %v697 = vunpack.c.h.b16 %v154
    %v698 = vunpack.c.l.b16 %v155
    %v699 = vunpack.c.h.b16 %v155
    %v700 = vunpack.c.l.b16 %v156
    %v701 = vunpack.c.h.b16 %v156
    %v702 = vunpack.c.l.b16 %v157
    %v703 = vunpack.c.h.b16 %v157
    %v704 = vunpack.c.l.b16 %v158
    %v705 = vunpack.c.h.b16 %v158
    %v706 = vunpack.c.l.b16 %v159
    %v707 = vunpack.c.h.b16 %v159
    %v708 = vunpack.c.l.b16 %v160
    %v709 = vunpack.c.h.b16 %v160
    %v710 = vunpack.c.l.b16 %v161
    %v711 = vunpack.c.h.b16 %v161
    %v712 = vunpack.c.l.b16 %v162
    %v713 = vunpack.c.h.b16 %v162
    %v714 = vunpack.c.l.b16 %v163
    %v715 = vunpack.c.h.b16 %v163
    %v716 = vunpack.c.l.b16 %v164
    %v717 = vunpack.c.h.b16 %v164
    %v718 = vunpack.c.l.b16 %v165
    %v719 = vunpack.c.h.b16 %v165
    %v720 = vunpack.c.l.b16 %v166
    %v721 = vunpack.c.h.b16 %v166
    %v722 = vunpack.c.l.b16 %v167
    %v723 = vunpack.c.h.b16 %v167
    %v724 = vunpack.c.l.b16 %v168
    %v725 = vunpack.c.h.b16 %v168
    %v726 = vunpack.c.l.b16 %v169
    %v727 = vunpack.c.h.b16 %v169
    %v728 = vunpack.c.l.b16 %v170
    %v729 = vunpack.c.h.b16 %v170
    %v730 = vunpack.c.l.b16 %v171
    %v731 = vunpack.c.h.b16 %v171
    %v732 = vunpack.c.l.b16 %v172
    %v733 = vunpack.c.h.b16 %v172
    %v734 = vunpack.c.l.b16 %v173
    %v735 = vunpack.c.h.b16 %v173
    %v736 = vunpack.c.l.b16 %v174
    %v737 = vunpack.c.h.b16 %v174
    %v738 = vunpack.c.l.b16 %v175
    %v739 = vunpack.c.h.b16 %v175
    %v740 = vunpack.c.l.b16 %v176
    %v741 = vunpack.c.h.b16 %v176
    %v742 = vunpack.c.l.b16 %v177
    %v743 = vunpack.c.h.b16 %v177
    %v744 = vunpack.c.l.b16 %v178
    %v745 = vunpack.c.h.b16 %v178
    %v746 = vunpack.c.l.b16 %v179
    %v747 = vunpack.c.h.b16 %v179
    %v748 = vunpack.c.l.b16 %v180
    %v749 = vunpack.c.h.b16 %v180
    %v750 = vunpack.c.l.b16 %v181
    %v751 = vunpack.c.h.b16 %v181
    %v752 = vunpack.c.l.b16 %v182
    %v753 = vunpack.c.h.b16 %v182
    %v754 = vunpack.c.l.b16 %v183
    %v755 = vunpack.c.h.b16 %v183
    %v756 = vunpack.c.l.b16 %v184
    %v757 = vunpack.c.h.b16 %v184
    %v758 = vunpack.c.l.b16 %v185
    %v759 = vunpack.c.h.b16 %v185
    %v760 = vunpack.c.l.b16 %v186
    %v761 = vunpack.c.h.b16 %v186
    %v762 = vunpack.c.l.b16 %v187
    %v763 = vunpack.c.h.b16 %v187
    %v764 = vunpack.c.l.b16 %v188
    %v765 = vunpack.c.h.b16 %v188
    %v766 = vunpack.c.l.b16 %v189
    %v767 = vunpack.c.h.b16 %v189
    %v768 = vunpack.c.l.b16 %v190
    %v769 = vunpack.c.h.b16 %v190
    %v770 = vunpack.c.l.b16 %v191
    %v771 = vunpack.c.h.b16 %v191
    %v772 = vunpack.c.l.b16 %v192
    %v773 = vunpack.c.h.b16 %v192
    %v774 = vunpack.c.l.b16 %v193
    %v775 = vunpack.c.h.b16 %v193
    %v776 = vunpack.c.l.b16 %v194
    %v777 = vunpack.c.h.b16 %v194
    %v778 = vunpack.c.l.b16 %v195
    %v779 = vunpack.c.h.b16 %v195
    %v780 = vunpack.c.l.b16 %v196
    %v781 = vunpack.c.h.b16 %v196
    %v782 = vunpack.c.l.b16 %v197
    %v783 = vunpack.c.h.b16 %v197
    %v784 = vunpack.c.l.b16 %v198
    %v785 = vunpack.c.h.b16 %v198
    %v786 = vunpack.c.l.b16 %v199
    %v787 = vunpack.c.h.b16 %v199
    %v788 = vunpack.c.l.b16 %v200
    %v789 = vunpack.c.h.b16 %v200
    %v790 = vunpack.c.l.b16 %v201
    %v791 = vunpack.c.h.b16 %v201
    %v792 = vunpack.c.l.b16 %v202
    %v793 = vunpack.c.h.b16 %v202
    %v794 = vunpack.c.l.b16 %v203
    %v795 = vunpack.c.h.b16 %v203
    %v796 = vunpack.c.l.b16 %v204
    %v797 = vunpack.c.h.b16 %v204
    %v798 = vunpack.c.l.b16 %v205
    %v799 = vunpack.c.h.b16 %v205
    %v800 = vunpack.c.l.b16 %v206
    %v801 = vunpack.c.h.b16 %v206
    %v802 = vunpack.c.l.b16 %v207
    %v803 = vunpack.c.h.b16 %v207
    %v804 = vunpack.c.l.b16 %v208
    %v805 = vunpack.c.h.b16 %v208
    %v806 = vunpack.c.l.b16 %v209
    %v807 = vunpack.c.h.b16 %v209
    %v808 = vunpack.c.l.b16 %v210
    %v809 = vunpack.c.h.b16 %v210
    %v810 = vunpack.c.l.b16 %v211
    %v811 = vunpack.c.h.b16 %v211
    %v812 = vunpack.c.l.b16 %v212
    %v813 = vunpack.c.h.b16 %v212
    %v814 = vunpack.c.l.b16 %v213
    %v815 = vunpack.c.h.b16 %v213
    %v816 = vunpack.c.l.b16 %v214
    %v817 = vunpack.c.h.b16 %v214
    %v818 = vunpack.c.l.b16 %v215
    %v819 = vunpack.c.h.b16 %v215
    %v820 = vunpack.c.l.b16 %v216
    %v821 = vunpack.c.h.b16 %v216
    %v822 = vunpack.c.l.b16 %v217
    %v823 = vunpack.c.h.b16 %v217
    %v824 = vunpack.c.l.b16 %v218
    %v825 = vunpack.c.h.b16 %v218
    %v826 = vunpack.c.l.b16 %v219
    %v827 = vunpack.c.h.b16 %v219
    %v828 = vunpack.c.l.b16 %v220
    %v829 = vunpack.c.h.b16 %v220
    %v830 = vunpack.c.l.b16 %v221
    %v831 = vunpack.c.h.b16 %v221
    %v832 = vunpack.c.l.b16 %v222
    %v833 = vunpack.c.h.b16 %v222
    %v834 = vunpack.c.l.b16 %v223
    %v835 = vunpack.c.h.b16 %v223
    %v836 = vunpack.c.l.b16 %v224
    %v837 = vunpack.c.h.b16 %v224
    %v838 = vunpack.c.l.b16 %v225
    %v839 = vunpack.c.h.b16 %v225
    %v840 = vunpack.c.l.b16 %v226
    %v841 = vunpack.c.h.b16 %v226
    %v842 = vunpack.c.l.b16 %v227
    %v843 = vunpack.c.h.b16 %v227
    %v844 = vunpack.c.l.b16 %v228
    %v845 = vunpack.c.h.b16 %v228
    %v846 = vunpack.c.l.b16 %v229
    %v847 = vunpack.c.h.b16 %v229
    %v848 = vunpack.c.l.b16 %v230
    %v849 = vunpack.c.h.b16 %v230
    %v850 = vunpack.c.l.b16 %v231
    %v851 = vunpack.c.h.b16 %v231
    %v852 = vunpack.c.l.b16 %v232
    %v853 = vunpack.c.h.b16 %v232
    %v854 = vunpack.c.l.b16 %v233
    %v855 = vunpack.c.h.b16 %v233
    %v856 = vunpack.c.l.b16 %v234
    %v857 = vunpack.c.h.b16 %v234
    %v858 = vunpack.c.l.b16 %v235
    %v859 = vunpack.c.h.b16 %v235
    %v860 = vunpack.c.l.b16 %v236
    %v861 = vunpack.c.h.b16 %v236
    %v862 = vunpack.c.l.b16 %v237
    %v863 = vunpack.c.h.b16 %v237
    %v864 = vunpack.c.l.b16 %v238
    %v865 = vunpack.c.h.b16 %v238
    %v866 = vunpack.c.l.b16 %v239
    %v867 = vunpack.c.h.b16 %v239
    %v868 = vunpack.c.l.b16 %v240
    %v869 = vunpack.c.h.b16 %v240
    %v870 = vunpack.c.l.b16 %v241
    %v871 = vunpack.c.h.b16 %v241
    %v872 = vunpack.c.l.b16 %v242
    %v873 = vunpack.c.h.b16 %v242
    %v874 = vunpack.c.l.b16 %v243
    %v875 = vunpack.c.h.b16 %v243
    %v876 = vunpack.c.l.b16 %v244
    %v877 = vunpack.c.h.b16 %v244
    %v878 = vunpack.c.l.b16 %v245
    %v879 = vunpack.c.h.b16 %v245
    %v880 = vunpack.c.l.b16 %v246
    %v881 = vunpack.c.h.b16 %v246
    %v882 = vunpack.c.l.b16 %v247
    %v883 = vunpack.c.h.b16 %v247
    %v884 = vunpack.c.l.b16 %v248
    %v885 = vunpack.c.h.b16 %v248
    %v886 = vunpack.c.l.b16 %v249
    %v887 = vunpack.c.h.b16 %v249
    %v888 = vunpack.c.l.b16 %v250
    %v889 = vunpack.c.h.b16 %v250
    %v890 = vunpack.c.l.b16 %v251
    %v891 = vunpack.c.h.b16 %v251
    %v892 = vunpack.c.l.b16 %v252
    %v893 = vunpack.c.h.b16 %v252
    %v894 = vunpack.c.l.b16 %v253
    %v895 = vunpack.c.h.b16 %v253
    %v896 = vunpack.c.l.b16 %v254
    %v897 = vunpack.c.h.b16 %v254
    %v898 = vunpack.c.l.b16 %v255
    %v899 = vunpack.c.h.b16 %v255
    %v900 = vunpack.c.l.b16 %v256
    %v901 = vunpack.c.h.b16 %v256
    %v902 = vunpack.c.l.b16 %v257
    %v903 = vunpack.c.h.b16 %v257
    %v904 = vunpack.c.l.b16 %v258
    %v905 = vunpack.c.h.b16 %v258
    %v906 = vunpack.c.l.b16 %v259
    %v907 = vunpack.c.h.b16 %v259
    %v908 = vunpack.c.l.b16 %v260
    %v909 = vunpack.c.h.b16 %v260
    %v910 = vunpack.c.l.b16 %v261
    %v911 = vunpack.c.h.b16 %v261
    %v912 = vunpack.c.l.b16 %v262
    %v913 = vunpack.c.h.b16 %v262
    %v914 = vunpack.c.l.b16 %v263
    %v915 = vunpack.c.h.b16 %v263
    %v916 = vunpack.c.l.b16 %v264
    %v917 = vunpack.c.h.b16 %v264
    %v918 = vunpack.c.l.b16 %v265
    %v919 = vunpack.c.h.b16 %v265
    %v920 = vunpack.c.l.b16 %v266
    %v921 = vunpack.c.h.b16 %v266
    %v922 = vunpack.c.l.b16 %v267
    %v923 = vunpack.c.h.b16 %v267
    %v924 = vunpack.c.l.b16 %v268
    %v925 = vunpack.c.h.b16 %v268
    %v926 = vunpack.c.l.b16 %v269
    %v927 = vunpack.c.h.b16 %v269
    %v928 = vunpack.c.l.b16 %v270
    %v929 = vunpack.c.h.b16 %v270
    %v930 = vunpack.c.l.b16 %v271
    %v931 = vunpack.c.h.b16 %v271
    %v932 = vunpack.c.l.b16 %v272
    %v933 = vunpack.c.h.b16 %v272
    %v934 = vunpack.c.l.b16 %v273
    %v935 = vunpack.c.h.b16 %v273
    %v936 = vunpack.c.l.b16 %v274
    %v937 = vunpack.c.h.b16 %v274
    %v938 = vunpack.c.l.b16 %v275
    %v939 = vunpack.c.h.b16 %v275
    %v940 = vunpack.c.l.b16 %v276
    %v941 = vunpack.c.h.b16 %v276
    %v942 = vunpack.c.l.b16 %v277
    %v943 = vunpack.c.h.b16 %v277
    %v944 = vunpack.c.l.b16 %v278
    %v945 = vunpack.c.h.b16 %v278
    %v946 = vunpack.c.l.b16 %v279
    %v947 = vunpack.c.h.b16 %v279
    %v948 = vunpack.c.l.b16 %v280
    %v949 = vunpack.c.h.b16 %v280
    %v950 = vunpack.c.l.b16 %v281
    %v951 = vunpack.c.h.b16 %v281
    %v952 = vunpack.c.l.b16 %v282
    %v953 = vunpack.c.h.b16 %v282
    %v954 = vunpack.c.l.b16 %v283
    %v955 = vunpack.c.h.b16 %v283
    %v956 = vunpack.c.l.b16 %v284
    %v957 = vunpack.c.h.b16 %v284
    %v958 = vunpack.c.l.b16 %v285
    %v959 = vunpack.c.h.b16 %v285
    %v960 = vunpack.c.l.b16 %v286
    %v961 = vunpack.c.h.b16 %v286
    %v962 = vunpack.c.l.b16 %v287
    %v963 = vunpack.c.h.b16 %v287
    %v964 = vunpack.c.l.b16 %v288
    %v965 = vunpack.c.h.b16 %v288
    %v966 = vunpack.c.l.b16 %v289
    %v967 = vunpack.c.h.b16 %v289
    %v968 = vunpack.c.l.b16 %v290
    %v969 = vunpack.c.h.b16 %v290
    %v970 = vunpack.c.l.b16 %v291
    %v971 = vunpack.c.h.b16 %v291
    %v972 = vunpack.c.l.b16 %v292
    %v973 = vunpack.c.h.b16 %v292
    %v974 = vunpack.c.l.b16 %v293
    %v975 = vunpack.c.h.b16 %v293
    %v976 = vunpack.c.l.b16 %v294
    %v977 = vunpack.c.h.b16 %v294
    %v978 = vunpack.c.l.b16 %v295
    %v979 = vunpack.c.h.b16 %v295
    %v980 = vunpack.c.l.b16 %v296
    %v981 = vunpack.c.h.b16 %v296
    %v982 = vunpack.c.l.b16 %v297
    %v983 = vunpack.c.h.b16 %v297
    %v984 = vunpack.c.l.b16 %v298
    %v985 = vunpack.c.h.b16 %v298
    %v986 = vunpack.c.l.b16 %v299
    %v987 = vunpack.c.h.b16 %v299
    %v988 = vunpack.c.l.b16 %v300
    %v989 = vunpack.c.h.b16 %v300
    %v990 = vunpack.c.l.b16 %v301
    %v991 = vunpack.c.h.b16 %v301
    %v992 = vunpack.c.l.b16 %v302
    %v993 = vunpack.c.h.b16 %v302
    %v994 = vunpack.c.l.b16 %v303
    %v995 = vunpack.c.h.b16 %v303
    %v996 = vunpack.c.l.b16 %v304
    %v997 = vunpack.c.h.b16 %v304
    %v998 = vunpack.c.l.b16 %v305
    %v999 = vunpack.c.h.b16 %v305
    %v1000 = vunpack.c.l.b16 %v306
    %v1001 = vunpack.c.h.b16 %v306
    %v1002 = vunpack.c.l.b16 %v307
    %v1003 = vunpack.c.h.b16 %v307
    %v1004 = vunpack.c.l.b16 %v308
    %v1005 = vunpack.c.h.b16 %v308
    %v1006 = vunpack.c.l.b16 %v309
    %v1007 = vunpack.c.h.b16 %v309
    %v1008 = vunpack.c.l.b16 %v310
    %v1009 = vunpack.c.h.b16 %v310
    %v1010 = vunpack.c.l.b16 %v311
    %v1011 = vunpack.c.h.b16 %v311
    %v1012 = vunpack.c.l.b16 %v312
    %v1013 = vunpack.c.h.b16 %v312
    %v1014 = vunpack.c.l.b16 %v313
    %v1015 = vunpack.c.h.b16 %v313
    %v1016 = vunpack.c.l.b16 %v314
    %v1017 = vunpack.c.h.b16 %v314
    %v1018 = vunpack.c.l.b16 %v315
    %v1019 = vunpack.c.h.b16 %v315
    %v1020 = vunpack.c.l.b16 %v316
    %v1021 = vunpack.c.h.b16 %v316
    %v1022 = vunpack.c.l.b16 %v317
    %v1023 = vunpack.c.h.b16 %v317
    %v1024 = vunpack.c.l.b16 %v318
    %v1025 = vunpack.c.h.b16 %v318
    %v1026 = vunpack.c.l.b16 %v319
    %v1027 = vunpack.c.h.b16 %v319
    %v1028 = vunpack.c.l.b16 %v320
    %v1029 = vunpack.c.h.b16 %v320
    %v1030 = vunpack.c.l.b16 %v321
    %v1031 = vunpack.c.h.b16 %v321
    %v1032 = vunpack.c.l.b16 %v322
    %v1033 = vunpack.c.h.b16 %v322
    %v1034 = vunpack.c.l.b16 %v323
    %v1035 = vunpack.c.h.b16 %v323
    %v1036 = vunpack.c.l.b16 %v324
    %v1037 = vunpack.c.h.b16 %v324
    %v1038 = vunpack.c.l.b16 %v325
    %v1039 = vunpack.c.h.b16 %v325
    %v1040 = vunpack.c.l.b16 %v326
    %v1041 = vunpack.c.h.b16 %v326
    %v1042 = vunpack.c.l.b16 %v327
    %v1043 = vunpack.c.h.b16 %v327
    %v1044 = vunpack.c.l.b16 %v328
    %v1045 = vunpack.c.h.b16 %v328
    %v1046 = vunpack.c.l.b16 %v329
    %v1047 = vunpack.c.h.b16 %v329
    %v1048 = vunpack.c.l.b16 %v330
    %v1049 = vunpack.c.h.b16 %v330
    %v1050 = vunpack.c.l.b16 %v331
    %v1051 = vunpack.c.h.b16 %v331
    %v1052 = vunpack.c.l.b16 %v332
    %v1053 = vunpack.c.h.b16 %v332
    %v1054 = vunpack.c.l.b16 %v333
    %v1055 = vunpack.c.h.b16 %v333
    %v1056 = vunpack.c.l.b16 %v334
    %v1057 = vunpack.c.h.b16 %v334
    %v1058 = vunpack.c.l.b16 %v335
    %v1059 = vunpack.c.h.b16 %v335
    %v1060 = vunpack.c.l.b16 %v336
    %v1061 = vunpack.c.h.b16 %v336
    %v1062 = vunpack.c.l.b16 %v337
    %v1063 = vunpack.c.h.b16 %v337
    %v1064 = vunpack.c.l.b16 %v338
    %v1065 = vunpack.c.h.b16 %v338
    %v1066 = vunpack.c.l.b16 %v339
    %v1067 = vunpack.c.h.b16 %v339
    %v1068 = vunpack.c.l.b16 %v340
    %v1069 = vunpack.c.h.b16 %v340
    %v1070 = vunpack.c.l.b16 %v341
    %v1071 = vunpack.c.h.b16 %v341
    %v1072 = vpack.c.b16 %v628, %v624
    %v1073 = vpack.c.b16 %v629, %v625
    %v1074 = vpack.c.b16 %v630, %v626
    %v1075 = vpack.c.b16 %v631, %v627
    %v1076 = vpack.c.b16 %v636, %v632
    %v1077 = vpack.c.b16 %v637, %v633
    %v1078 = vpack.c.b16 %v638, %v634
    %v1079 = vpack.c.b16 %v639, %v635
    %v1080 = vpack.c.b16 %v644, %v640
    %v1081 = vpack.c.b16 %v645, %v641
    %v1082 = vpack.c.b16 %v646, %v642
    %v1083 = vpack.c.b16 %v647, %v643
    %v1084 = vpack.c.b16 %v652, %v648
    %v1085 = vpack.c.b16 %v653, %v649
    %v1086 = vpack.c.b16 %v654, %v650
    %v1087 = vpack.c.b16 %v655, %v651
    %v1088 = vpack.c.b16 %v660, %v656
    %v1089 = vpack.c.b16 %v661, %v657
    %v1090 = vpack.c.b16 %v662, %v658
    %v1091 = vpack.c.b16 %v663, %v659
    %v1092 = vpack.c.b16 %v668, %v664
    %v1093 = vpack.c.b16 %v669, %v665
    %v1094 = vpack.c.b16 %v670, %v666
    %v1095 = vpack.c.b16 %v671, %v667
    %v1096 = vpack.c.b16 %v676, %v672
    %v1097 = vpack.c.b16 %v677, %v673
    %v1098 = vpack.c.b16 %v678, %v674
    %v1099 = vpack.c.b16 %v679, %v675
    %v1100 = vpack.c.b16 %v684, %v680
    %v1101 = vpack.c.b16 %v685, %v681
    %v1102 = vpack.c.b16 %v686, %v682
    %v1103 = vpack.c.b16 %v687, %v683
    %v1104 = vpack.c.b16 %v692, %v688
    %v1105 = vpack.c.b16 %v693, %v689
    %v1106 = vpack.c.b16 %v694, %v690
    %v1107 = vpack.c.b16 %v695, %v691
    %v1108 = vpack.c.b16 %v700, %v696
    %v1109 = vpack.c.b16 %v701, %v697
    %v1110 = vpack.c.b16 %v702, %v698
    %v1111 = vpack.c.b16 %v703, %v699
    %v1112 = vpack.c.b16 %v708, %v704
    %v1113 = vpack.c.b16 %v709, %v705
    %v1114 = vpack.c.b16 %v710, %v706
    %v1115 = vpack.c.b16 %v711, %v707
    %v1116 = vpack.c.b16 %v716, %v712
    %v1117 = vpack.c.b16 %v717, %v713
    %v1118 = vpack.c.b16 %v718, %v714
    %v1119 = vpack.c.b16 %v719, %v715
    %v1120 = vpack.c.b16 %v724, %v720
    %v1121 = vpack.c.b16 %v725, %v721
    %v1122 = vpack.c.b16 %v726, %v722
    %v1123 = vpack.c.b16 %v727, %v723
    %v1124 = vpack.c.b16 %v732, %v728
    %v1125 = vpack.c.b16 %v733, %v729
    %v1126 = vpack.c.b16 %v734, %v730
    %v1127 = vpack.c.b16 %v735, %v731
    %v1128 = vpack.c.b16 %v740, %v736
    %v1129 = vpack.c.b16 %v741, %v737
    %v1130 = vpack.c.b16 %v742, %v738
    %v1131 = vpack.c.b16 %v743, %v739
    %v1132 = vpack.c.b16 %v748, %v744
    %v1133 = vpack.c.b16 %v749, %v745
    %v1134 = vpack.c.b16 %v750, %v746
    %v1135 = vpack.c.b16 %v751, %v747
    %v1136 = vpack.c.b16 %v756, %v752
    %v1137 = vpack.c.b16 %v757, %v753
    %v1138 = vpack.c.b16 %v758, %v754
    %v1139 = vpack.c.b16 %v759, %v755
    %v1140 = vpack.c.b16 %v764, %v760
    %v1141 = vpack.c.b16 %v765, %v761
    %v1142 = vpack.c.b16 %v766, %v762
    %v1143 = vpack.c.b16 %v767, %v763
    %v1144 = vpack.c.b16 %v772, %v768
    %v1145 = vpack.c.b16 %v773, %v769
    %v1146 = vpack.c.b16 %v774, %v770
    %v1147 = vpack.c.b16 %v775, %v771
    %v1148 = vpack.c.b16 %v780, %v776
    %v1149 = vpack.c.b16 %v781, %v777
    %v1150 = vpack.c.b16 %v782, %v778
    %v1151 = vpack.c.b16 %v783, %v779
    %v1152 = vpack.c.b16 %v788, %v784
    %v1153 = vpack.c.b16 %v789, %v785
    %v1154 = vpack.c.b16 %v790, %v786
    %v1155 = vpack.c.b16 %v791, %v787
    %v1156 = vpack.c.b16 %v796, %v792
    %v1157 = vpack.c.b16 %v797, %v793
    %v1158 = vpack.c.b16 %v798, %v794
    %v1159 = vpack.c.b16 %v799, %v795
    %v1160 = vpack.c.b16 %v804, %v800
    %v1161 = vpack.c.b16 %v805, %v801
    %v1162 = vpack.c.b16 %v806, %v802
    %v1163 = vpack.c.b16 %v807, %v803
    %v1164 = vpack.c.b16 %v812, %v808
    %v1165 = vpack.c.b16 %v813, %v809
    %v1166 = vpack.c.b16 %v814, %v810
    %v1167 = vpack.c.b16 %v815, %v811
    %v1168 = vpack.c.b16 %v820, %v816
    %v1169 = vpack.c.b16 %v821, %v817
    %v1170 = vpack.c.b16 %v822, %v818
    %v1171 = vpack.c.b16 %v823, %v819
    %v1172 = vpack.c.b16 %v828, %v824
    %v1173 = vpack.c.b16 %v829, %v825
    %v1174 = vpack.c.b16 %v830, %v826
    %v1175 = vpack.c.b16 %v831, %v827
    %v1176 = vpack.c.b16 %v836, %v832
    %v1177 = vpack.c.b16 %v837, %v833
    %v1178 = vpack.c.b16 %v838, %v834
    %v1179 = vpack.c.b16 %v839, %v835
    %v1180 = vpack.c.b16 %v844, %v840
    %v1181 = vpack.c.b16 %v845, %v841
    %v1182 = vpack.c.b16 %v846, %v842
    %v1183 = vpack.c.b16 %v847, %v843
    %v1184 = vpack.c.b16 %v852, %v848
    %v1185 = vpack.c.b16 %v853, %v849
    %v1186 = vpack.c.b16 %v854, %v850
    %v1187 = vpack.c.b16 %v855, %v851
    %v1188 = vpack.c.b16 %v860, %v856
    %v1189 = vpack.c.b16 %v861, %v857
    %v1190 = vpack.c.b16 %v862, %v858
    %v1191 = vpack.c.b16 %v863, %v859
    %v1192 = vpack.c.b16 %v868, %v864
    %v1193 = vpack.c.b16 %v869, %v865
    %v1194 = vpack.c.b16 %v870, %v866
    %v1195 = vpack.c.b16 %v871, %v867
    %v1196 = vpack.c.b16 %v876, %v872
    %v1197 = vpack.c.b16 %v877, %v873
    %v1198 = vpack.c.b16 %v878, %v874
    %v1199 = vpack.c.b16 %v879, %v875
    %v1200 = vpack.c.b16 %v884, %v880
    %v1201 = vpack.c.b16 %v885, %v881
    %v1202 = vpack.c.b16 %v886, %v882
    %v1203 = vpack.c.b16 %v887, %v883
    %v1204 = vpack.c.b16 %v892, %v888
    %v1205 = vpack.c.b16 %v893, %v889
    %v1206 = vpack.c.b16 %v894, %v890
    %v1207 = vpack.c.b16 %v895, %v891
    %v1208 = vpack.c.b16 %v900, %v896
    %v1209 = vpack.c.b16 %v901, %v897
    %v1210 = vpack.c.b16 %v902, %v898
    %v1211 = vpack.c.b16 %v903, %v899
    %v1212 = vpack.c.b16 %v908, %v904
    %v1213 = vpack.c.b16 %v909, %v905
    %v1214 = vpack.c.b16 %v910, %v906
    %v1215 = vpack.c.b16 %v911, %v907
    %v1216 = vpack.c.b16 %v916, %v912
    %v1217 = vpack.c.b16 %v917, %v913
    %v1218 = vpack.c.b16 %v918, %v914
    %v1219 = vpack.c.b16 %v919, %v915
    %v1220 = vpack.c.b16 %v924, %v920
    %v1221 = vpack.c.b16 %v925, %v921
    %v1222 = vpack.c.b16 %v926, %v922
    %v1223 = vpack.c.b16 %v927, %v923
    %v1224 = vpack.c.b16 %v932, %v928
    %v1225 = vpack.c.b16 %v933, %v929
    %v1226 = vpack.c.b16 %v934, %v930
    %v1227 = vpack.c.b16 %v935, %v931
    %v1228 = vpack.c.b16 %v940, %v936
    %v1229 = vpack.c.b16 %v941, %v937
    %v1230 = vpack.c.b16 %v942, %v938
    %v1231 = vpack.c.b16 %v943, %v939
    %v1232 = vpack.c.b16 %v948, %v944
    %v1233 = vpack.c.b16 %v949, %v945
    %v1234 = vpack.c.b16 %v950, %v946
    %v1235 = vpack.c.b16 %v951, %v947
    %v1236 = vpack.c.b16 %v956, %v952
    %v1237 = vpack.c.b16 %v957, %v953
    %v1238 = vpack.c.b16 %v958, %v954
    %v1239 = vpack.c.b16 %v959, %v955
    %v1240 = vpack.c.b16 %v964, %v960
    %v1241 = vpack.c.b16 %v965, %v961
    %v1242 = vpack.c.b16 %v966, %v962
    %v1243 = vpack.c.b16 %v967, %v963
    %v1244 = vpack.c.b16 %v972, %v968
    %v1245 = vpack.c.b16 %v973, %v969
    %v1246 = vpack.c.b16 %v974, %v970
    %v1247 = vpack.c.b16 %v975, %v971
    %v1248 = vpack.c.b16 %v980, %v976
    %v1249 = vpack.c.b16 %v981, %v977
    %v1250 = vpack.c.b16 %v982, %v978
    %v1251 = vpack.c.b16 %v983, %v979
    %v1252 = vpack.c.b16 %v988, %v984
    %v1253 = vpack.c.b16 %v989, %v985
    %v1254 = vpack.c.b16 %v990, %v986
    %v1255 = vpack.c.b16 %v991, %v987
    %v1256 = vpack.c.b16 %v996, %v992
    %v1257 = vpack.c.b16 %v997, %v993
    %v1258 = vpack.c.b16 %v998, %v994
    %v1259 = vpack.c.b16 %v999, %v995
    %v1260 = vpack.c.b16 %v1004, %v1000
    %v1261 = vpack.c.b16 %v1005, %v1001
    %v1262 = vpack.c.b16 %v1006, %v1002
    %v1263 = vpack.c.b16 %v1007, %v1003
    %v1264 = vpack.c.b16 %v1012, %v1008
    %v1265 = vpack.c.b16 %v1013, %v1009
    %v1266 = vpack.c.b16 %v1014, %v1010
    %v1267 = vpack.c.b16 %v1015, %v1011
    %v1268 = vpack.c.b16 %v1020, %v1016
    %v1269 = vpack.c.b16 %v1021, %v1017
    %v1270 = vpack.c.b16 %v1022, %v1018
    %v1271 = vpack.c.b16 %v1023, %v1019
    %v1272 = vpack.c.b16 %v1028, %v1024
    %v1273 = vpack.c.b16 %v1029, %v1025
    %v1274 = vpack.c.b16 %v1030, %v1026
    %v1275 = vpack.c.b16 %v1031, %v1027
    %v1276 = vpack.c.b16 %v1036, %v1032
    %v1277 = vpack.c.b16 %v1037, %v1033
    %v1278 = vpack.c.b16 %v1038, %v1034
    %v1279 = vpack.c.b16 %v1039, %v1035
    %v1280 = vpack.c.b16 %v1044, %v1040
    %v1281 = vpack.c.b16 %v1045, %v1041
    %v1282 = vpack.c.b16 %v1046, %v1042
    %v1283 = vpack.c.b16 %v1047, %v1043
    %v1284 = vpack.c.b16 %v1052, %v1048
    %v1285 = vpack.c.b16 %v1053, %v1049
    %v1286 = vpack.c.b16 %v1054, %v1050
    %v1287 = vpack.c.b16 %v1055, %v1051
    %v1288 = vpack.c.b16 %v1060, %v1056
    %v1289 = vpack.c.b16 %v1061, %v1057
    %v1290 = vpack.c.b16 %v1062, %v1058
    %v1291 = vpack.c.b16 %v1063, %v1059
    %v1292 = vpack.c.b16 %v1068, %v1064
    %v1293 = vpack.c.b16 %v1069, %v1065
    %v1294 = vpack.c.b16 %v1070, %v1066
    %v1295 = vpack.c.b16 %v1071, %v1067
    %1520 = vmatprep.subr.bf16.mxu0 %v1101
    %1521 = vmatpush1.bf16.msra.mxu0 %v1100
    %1522 = vmatprep.subr.bf16.mxu0 %v1097
    %1523 = vmatpush1.bf16.msra.mxu0 %v1096
    %1524 = vmatprep.subr.bf16.mxu0 %v1093
    %1525 = vmatpush1.bf16.msra.mxu0 %v1092
    %1526 = vmatprep.subr.bf16.mxu0 %v1089
    %1527 = vmatpush1.bf16.msra.mxu0 %v1088
    %1528 = vmatprep.subr.bf16.mxu0 %v1085
    %1529 = vmatpush1.bf16.msra.mxu0 %v1084
    %1530 = vmatprep.subr.bf16.mxu0 %v1081
    %1531 = vmatpush1.bf16.msra.mxu0 %v1080
    %1532 = vmatprep.subr.bf16.mxu0 %v1077
    %1533 = vmatpush1.bf16.msra.mxu0 %v1076
    %1534 = vmatprep.subr.bf16.mxu0 %v1073
    %1535 = vmatpush1.bf16.msra.mxu0 %v1072
    %1536 = vmatprep.subr.bf16.mxu0 %v1133
    %1537 = vmatpush2.bf16.msra.mxu0 %v1132
    %1538 = vmatprep.subr.bf16.mxu0 %v1129
    %1539 = vmatpush2.bf16.msra.mxu0 %v1128
    %1540 = vmatprep.subr.bf16.mxu0 %v1125
    %1541 = vmatpush2.bf16.msra.mxu0 %v1124
    %1542 = vmatprep.subr.bf16.mxu0 %v1121
    %1543 = vmatpush2.bf16.msra.mxu0 %v1120
    %1544 = vmatprep.subr.bf16.mxu0 %v1117
    %1545 = vmatpush2.bf16.msra.mxu0 %v1116
    %1546 = vmatprep.subr.bf16.mxu0 %v1113
    %1547 = vmatpush2.bf16.msra.mxu0 %v1112
    %1548 = vmatprep.subr.bf16.mxu0 %v1109
    %1549 = vmatpush2.bf16.msra.mxu0 %v1108
    %1550 = vmatprep.subr.bf16.mxu0 %v1105
    %1551 = vmatpush2.bf16.msra.mxu0 %v1104
    %1552 = vmatprep.mubr.bf16.mxu0 %v387
    %1553 = vmatmul.mubr.bf16.gmra.mxu0 %v386
    %v1554 = vpop.f32.mrf.mxu0
    %v1555 = vadd.f32 %v347, %v1554
    %v1556 = vpop.f32.mrf.mxu0
    %v1557 = vadd.f32 %v351, %v1556
    %v1558 = vpop.f32.mrf.mxu0
    %v1559 = vadd.f32 %v347, %v1558
    %v1560 = vpop.f32.mrf.mxu0
    %v1561 = vadd.f32 %v351, %v1560
    %1562 = vdwg.mxu0
    %1563 = vmatprep.subr.bf16.mxu0 %v1165
    %1564 = vmatpush1.bf16.msra.mxu0 %v1164
    %1565 = vmatprep.subr.bf16.mxu0 %v1161
    %1566 = vmatpush1.bf16.msra.mxu0 %v1160
    %1567 = vmatprep.subr.bf16.mxu0 %v1157
    %1568 = vmatpush1.bf16.msra.mxu0 %v1156
    %1569 = vmatprep.subr.bf16.mxu0 %v1153
    %1570 = vmatpush1.bf16.msra.mxu0 %v1152
    %1571 = vmatprep.subr.bf16.mxu0 %v1149
    %1572 = vmatpush1.bf16.msra.mxu0 %v1148
    %1573 = vmatprep.subr.bf16.mxu0 %v1145
    %1574 = vmatpush1.bf16.msra.mxu0 %v1144
    %1575 = vmatprep.subr.bf16.mxu0 %v1141
    %1576 = vmatpush1.bf16.msra.mxu0 %v1140
    %1577 = vmatprep.subr.bf16.mxu0 %v1137
    %1578 = vmatpush1.bf16.msra.mxu0 %v1136
    %1579 = vmatprep.subr.bf16.mxu0 %v1197
    %1580 = vmatpush2.bf16.msra.mxu0 %v1196
    %1581 = vmatprep.subr.bf16.mxu0 %v1193
    %1582 = vmatpush2.bf16.msra.mxu0 %v1192
    %1583 = vmatprep.subr.bf16.mxu0 %v1189
    %1584 = vmatpush2.bf16.msra.mxu0 %v1188
    %1585 = vmatprep.subr.bf16.mxu0 %v1185
    %1586 = vmatpush2.bf16.msra.mxu0 %v1184
    %1587 = vmatprep.subr.bf16.mxu0 %v1181
    %1588 = vmatpush2.bf16.msra.mxu0 %v1180
    %1589 = vmatprep.subr.bf16.mxu0 %v1177
    %1590 = vmatpush2.bf16.msra.mxu0 %v1176
    %1591 = vmatprep.subr.bf16.mxu0 %v1173
    %1592 = vmatpush2.bf16.msra.mxu0 %v1172
    %1593 = vmatprep.subr.bf16.mxu0 %v1169
    %1594 = vmatpush2.bf16.msra.mxu0 %v1168
    %1595 = vmatprep.mubr.bf16.mxu0 %v389
    %1596 = vmatmul.mubr.bf16.gmra.mxu0 %v388
    %v1597 = vpop.f32.mrf.mxu0
    %v1598 = vadd.f32 %v1555, %v1597
    %v1599 = vpop.f32.mrf.mxu0
    %v1600 = vadd.f32 %v1557, %v1599
    %v1601 = vpop.f32.mrf.mxu0
    %v1602 = vadd.f32 %v1559, %v1601
    %v1603 = vpop.f32.mrf.mxu0
    %v1604 = vadd.f32 %v1561, %v1603
    %1605 = vdwg.mxu0
    %1606 = vmatprep.subr.bf16.mxu0 %v1229
    %1607 = vmatpush1.bf16.msra.mxu0 %v1228
    %1608 = vmatprep.subr.bf16.mxu0 %v1225
    %1609 = vmatpush1.bf16.msra.mxu0 %v1224
    %1610 = vmatprep.subr.bf16.mxu0 %v1221
    %1611 = vmatpush1.bf16.msra.mxu0 %v1220
    %1612 = vmatprep.subr.bf16.mxu0 %v1217
    %1613 = vmatpush1.bf16.msra.mxu0 %v1216
    %1614 = vmatprep.subr.bf16.mxu0 %v1213
    %1615 = vmatpush1.bf16.msra.mxu0 %v1212
    %1616 = vmatprep.subr.bf16.mxu0 %v1209
    %1617 = vmatpush1.bf16.msra.mxu0 %v1208
    %1618 = vmatprep.subr.bf16.mxu0 %v1205
    %1619 = vmatpush1.bf16.msra.mxu0 %v1204
    %1620 = vmatprep.subr.bf16.mxu0 %v1201
    %1621 = vmatpush1.bf16.msra.mxu0 %v1200
    %1622 = vmatprep.subr.bf16.mxu0 %v1261
    %1623 = vmatpush2.bf16.msra.mxu0 %v1260
    %1624 = vmatprep.subr.bf16.mxu0 %v1257
    %1625 = vmatpush2.bf16.msra.mxu0 %v1256
    %1626 = vmatprep.subr.bf16.mxu0 %v1253
    %1627 = vmatpush2.bf16.msra.mxu0 %v1252
    %1628 = vmatprep.subr.bf16.mxu0 %v1249
    %1629 = vmatpush2.bf16.msra.mxu0 %v1248
    %1630 = vmatprep.subr.bf16.mxu0 %v1245
    %1631 = vmatpush2.bf16.msra.mxu0 %v1244
    %1632 = vmatprep.subr.bf16.mxu0 %v1241
    %1633 = vmatpush2.bf16.msra.mxu0 %v1240
    %1634 = vmatprep.subr.bf16.mxu0 %v1237
    %1635 = vmatpush2.bf16.msra.mxu0 %v1236
    %1636 = vmatprep.subr.bf16.mxu0 %v1233
    %1637 = vmatpush2.bf16.msra.mxu0 %v1232
    %1638 = vmatprep.mubr.bf16.mxu0 %v391
    %1639 = vmatmul.mubr.bf16.gmra.mxu0 %v390
    %v1640 = vpop.f32.mrf.mxu0
    %v1641 = vadd.f32 %v1598, %v1640
    %v1642 = vpop.f32.mrf.mxu0
    %v1643 = vadd.f32 %v1600, %v1642
    %v1644 = vpop.f32.mrf.mxu0
    %v1645 = vadd.f32 %v1602, %v1644
    %v1646 = vpop.f32.mrf.mxu0
    %v1647 = vadd.f32 %v1604, %v1646
    %1648 = vdwg.mxu0
    %1649 = vmatprep.subr.bf16.mxu0 %v1293
    %1650 = vmatpush1.bf16.msra.mxu0 %v1292
    %1651 = vmatprep.subr.bf16.mxu0 %v1289
    %1652 = vmatpush1.bf16.msra.mxu0 %v1288
    %1653 = vmatprep.subr.bf16.mxu0 %v1285
    %1654 = vmatpush1.bf16.msra.mxu0 %v1284
    %1655 = vmatprep.subr.bf16.mxu0 %v1281
    %1656 = vmatpush1.bf16.msra.mxu0 %v1280
    %1657 = vmatprep.subr.bf16.mxu0 %v1277
    %1658 = vmatpush1.bf16.msra.mxu0 %v1276
    %1659 = vmatprep.subr.bf16.mxu0 %v1273
    %1660 = vmatpush1.bf16.msra.mxu0 %v1272
    %1661 = vmatprep.subr.bf16.mxu0 %v1269
    %1662 = vmatpush1.bf16.msra.mxu0 %v1268
    %1663 = vmatprep.subr.bf16.mxu0 %v1265
    %1664 = vmatpush1.bf16.msra.mxu0 %v1264
    %1665 = vmatprep.subr.bf16.mxu0 0
    %1666 = vmatpush2.bf16.msra.mxu0 0
    %1667 = vmatprep.subr.bf16.mxu0 0
    %1668 = vmatpush2.bf16.msra.mxu0 0
    %1669 = vmatprep.subr.bf16.mxu0 0
    %1670 = vmatpush2.bf16.msra.mxu0 0
    %1671 = vmatprep.subr.bf16.mxu0 0
    %1672 = vmatpush2.bf16.msra.mxu0 0
    %1673 = vmatprep.subr.bf16.mxu0 0
    %1674 = vmatpush2.bf16.msra.mxu0 0
    %1675 = vmatprep.subr.bf16.mxu0 0
    %1676 = vmatpush2.bf16.msra.mxu0 0
    %1677 = vmatprep.subr.bf16.mxu0 0
    %1678 = vmatpush2.bf16.msra.mxu0 0
    %1679 = vmatprep.subr.bf16.mxu0 0
    %1680 = vmatpush2.bf16.msra.mxu0 0
    %1681 = vmatprep.mubr.bf16.mxu0 0
    %1682 = vmatmul.mubr.bf16.gmra.mxu0 %v392
    %v1683 = vpop.f32.mrf.mxu0
    %v1684 = vadd.f32 %v1641, %v1683
    %v1685 = vpop.f32.mrf.mxu0
    %v1686 = vadd.f32 %v1643, %v1685
    %v1687 = vpop.f32.mrf.mxu0
    %v1688 = vadd.f32 %v1645, %v1687
    %v1689 = vpop.f32.mrf.mxu0
    %v1690 = vadd.f32 %v1647, %v1689
    %1691 = vdwg.mxu0
    %1692 = vmatprep.subr.bf16.mxu0 %v1103
    %1693 = vmatpush1.bf16.msra.mxu0 %v1102
    %1694 = vmatprep.subr.bf16.mxu0 %v1099
    %1695 = vmatpush1.bf16.msra.mxu0 %v1098
    %1696 = vmatprep.subr.bf16.mxu0 %v1095
    %1697 = vmatpush1.bf16.msra.mxu0 %v1094
    %1698 = vmatprep.subr.bf16.mxu0 %v1091
    %1699 = vmatpush1.bf16.msra.mxu0 %v1090
    %1700 = vmatprep.subr.bf16.mxu0 %v1087
    %1701 = vmatpush1.bf16.msra.mxu0 %v1086
    %1702 = vmatprep.subr.bf16.mxu0 %v1083
    %1703 = vmatpush1.bf16.msra.mxu0 %v1082
    %1704 = vmatprep.subr.bf16.mxu0 %v1079
    %1705 = vmatpush1.bf16.msra.mxu0 %v1078
    %1706 = vmatprep.subr.bf16.mxu0 %v1075
    %1707 = vmatpush1.bf16.msra.mxu0 %v1074
    %1708 = vmatprep.subr.bf16.mxu0 %v1135
    %1709 = vmatpush2.bf16.msra.mxu0 %v1134
    %1710 = vmatprep.subr.bf16.mxu0 %v1131
    %1711 = vmatpush2.bf16.msra.mxu0 %v1130
    %1712 = vmatprep.subr.bf16.mxu0 %v1127
    %1713 = vmatpush2.bf16.msra.mxu0 %v1126
    %1714 = vmatprep.subr.bf16.mxu0 %v1123
    %1715 = vmatpush2.bf16.msra.mxu0 %v1122
    %1716 = vmatprep.subr.bf16.mxu0 %v1119
    %1717 = vmatpush2.bf16.msra.mxu0 %v1118
    %1718 = vmatprep.subr.bf16.mxu0 %v1115
    %1719 = vmatpush2.bf16.msra.mxu0 %v1114
    %1720 = vmatprep.subr.bf16.mxu0 %v1111
    %1721 = vmatpush2.bf16.msra.mxu0 %v1110
    %1722 = vmatprep.subr.bf16.mxu0 %v1107
    %1723 = vmatpush2.bf16.msra.mxu0 %v1106
    %1724 = vmatprep.mubr.bf16.mxu0 %v387
    %1725 = vmatmul.mubr.bf16.gmra.mxu0 %v386
    %v1726 = vpop.f32.mrf.mxu0
    %v1727 = vadd.f32 %v355, %v1726
    %v1728 = vpop.f32.mrf.mxu0
    %v1729 = vadd.f32 %v359, %v1728
    %v1730 = vpop.f32.mrf.mxu0
    %v1731 = vadd.f32 %v355, %v1730
    %v1732 = vpop.f32.mrf.mxu0
    %v1733 = vadd.f32 %v359, %v1732
    %1734 = vdwg.mxu0
    %1735 = vmatprep.subr.bf16.mxu0 %v1167
    %1736 = vmatpush1.bf16.msra.mxu0 %v1166
    %1737 = vmatprep.subr.bf16.mxu0 %v1163
    %1738 = vmatpush1.bf16.msra.mxu0 %v1162
    %1739 = vmatprep.subr.bf16.mxu0 %v1159
    %1740 = vmatpush1.bf16.msra.mxu0 %v1158
    %1741 = vmatprep.subr.bf16.mxu0 %v1155
    %1742 = vmatpush1.bf16.msra.mxu0 %v1154
    %1743 = vmatprep.subr.bf16.mxu0 %v1151
    %1744 = vmatpush1.bf16.msra.mxu0 %v1150
    %1745 = vmatprep.subr.bf16.mxu0 %v1147
    %1746 = vmatpush1.bf16.msra.mxu0 %v1146
    %1747 = vmatprep.subr.bf16.mxu0 %v1143
    %1748 = vmatpush1.bf16.msra.mxu0 %v1142
    %1749 = vmatprep.subr.bf16.mxu0 %v1139
    %1750 = vmatpush1.bf16.msra.mxu0 %v1138
    %1751 = vmatprep.subr.bf16.mxu0 %v1199
    %1752 = vmatpush2.bf16.msra.mxu0 %v1198
    %1753 = vmatprep.subr.bf16.mxu0 %v1195
    %1754 = vmatpush2.bf16.msra.mxu0 %v1194
    %1755 = vmatprep.subr.bf16.mxu0 %v1191
    %1756 = vmatpush2.bf16.msra.mxu0 %v1190
    %1757 = vmatprep.subr.bf16.mxu0 %v1187
    %1758 = vmatpush2.bf16.msra.mxu0 %v1186
    %1759 = vmatprep.subr.bf16.mxu0 %v1183
    %1760 = vmatpush2.bf16.msra.mxu0 %v1182
    %1761 = vmatprep.subr.bf16.mxu0 %v1179
    %1762 = vmatpush2.bf16.msra.mxu0 %v1178
    %1763 = vmatprep.subr.bf16.mxu0 %v1175
    %1764 = vmatpush2.bf16.msra.mxu0 %v1174
    %1765 = vmatprep.subr.bf16.mxu0 %v1171
    %1766 = vmatpush2.bf16.msra.mxu0 %v1170
    %1767 = vmatprep.mubr.bf16.mxu0 %v389
    %1768 = vmatmul.mubr.bf16.gmra.mxu0 %v388
    %v1769 = vpop.f32.mrf.mxu0
    %v1770 = vadd.f32 %v1727, %v1769
    %v1771 = vpop.f32.mrf.mxu0
    %v1772 = vadd.f32 %v1729, %v1771
    %v1773 = vpop.f32.mrf.mxu0
    %v1774 = vadd.f32 %v1731, %v1773
    %v1775 = vpop.f32.mrf.mxu0
    %v1776 = vadd.f32 %v1733, %v1775
    %1777 = vdwg.mxu0
    %1778 = vmatprep.subr.bf16.mxu0 %v1231
    %1779 = vmatpush1.bf16.msra.mxu0 %v1230
    %1780 = vmatprep.subr.bf16.mxu0 %v1227
    %1781 = vmatpush1.bf16.msra.mxu0 %v1226
    %1782 = vmatprep.subr.bf16.mxu0 %v1223
    %1783 = vmatpush1.bf16.msra.mxu0 %v1222
    %1784 = vmatprep.subr.bf16.mxu0 %v1219
    %1785 = vmatpush1.bf16.msra.mxu0 %v1218
    %1786 = vmatprep.subr.bf16.mxu0 %v1215
    %1787 = vmatpush1.bf16.msra.mxu0 %v1214
    %1788 = vmatprep.subr.bf16.mxu0 %v1211
    %1789 = vmatpush1.bf16.msra.mxu0 %v1210
    %1790 = vmatprep.subr.bf16.mxu0 %v1207
    %1791 = vmatpush1.bf16.msra.mxu0 %v1206
    %1792 = vmatprep.subr.bf16.mxu0 %v1203
    %1793 = vmatpush1.bf16.msra.mxu0 %v1202
    %1794 = vmatprep.subr.bf16.mxu0 %v1263
    %1795 = vmatpush2.bf16.msra.mxu0 %v1262
    %1796 = vmatprep.subr.bf16.mxu0 %v1259
    %1797 = vmatpush2.bf16.msra.mxu0 %v1258
    %1798 = vmatprep.subr.bf16.mxu0 %v1255
    %1799 = vmatpush2.bf16.msra.mxu0 %v1254
    %1800 = vmatprep.subr.bf16.mxu0 %v1251
    %1801 = vmatpush2.bf16.msra.mxu0 %v1250
    %1802 = vmatprep.subr.bf16.mxu0 %v1247
    %1803 = vmatpush2.bf16.msra.mxu0 %v1246
    %1804 = vmatprep.subr.bf16.mxu0 %v1243
    %1805 = vmatpush2.bf16.msra.mxu0 %v1242
    %1806 = vmatprep.subr.bf16.mxu0 %v1239
    %1807 = vmatpush2.bf16.msra.mxu0 %v1238
    %1808 = vmatprep.subr.bf16.mxu0 %v1235
    %1809 = vmatpush2.bf16.msra.mxu0 %v1234
    %1810 = vmatprep.mubr.bf16.mxu0 %v391
    %1811 = vmatmul.mubr.bf16.gmra.mxu0 %v390
    %v1812 = vpop.f32.mrf.mxu0
    %v1813 = vadd.f32 %v1770, %v1812
    %v1814 = vpop.f32.mrf.mxu0
    %v1815 = vadd.f32 %v1772, %v1814
    %v1816 = vpop.f32.mrf.mxu0
    %v1817 = vadd.f32 %v1774, %v1816
    %v1818 = vpop.f32.mrf.mxu0
    %v1819 = vadd.f32 %v1776, %v1818
    %1820 = vdwg.mxu0
    %1821 = vmatprep.subr.bf16.mxu0 %v1295
    %1822 = vmatpush1.bf16.msra.mxu0 %v1294
    %1823 = vmatprep.subr.bf16.mxu0 %v1291
    %1824 = vmatpush1.bf16.msra.mxu0 %v1290
    %1825 = vmatprep.subr.bf16.mxu0 %v1287
    %1826 = vmatpush1.bf16.msra.mxu0 %v1286
    %1827 = vmatprep.subr.bf16.mxu0 %v1283
    %1828 = vmatpush1.bf16.msra.mxu0 %v1282
    %1829 = vmatprep.subr.bf16.mxu0 %v1279
    %1830 = vmatpush1.bf16.msra.mxu0 %v1278
    %1831 = vmatprep.subr.bf16.mxu0 %v1275
    %1832 = vmatpush1.bf16.msra.mxu0 %v1274
    %1833 = vmatprep.subr.bf16.mxu0 %v1271
    %1834 = vmatpush1.bf16.msra.mxu0 %v1270
    %1835 = vmatprep.subr.bf16.mxu0 %v1267
    %1836 = vmatpush1.bf16.msra.mxu0 %v1266
    %1837 = vmatprep.subr.bf16.mxu0 0
    %1838 = vmatpush2.bf16.msra.mxu0 0
    %1839 = vmatprep.subr.bf16.mxu0 0
    %1840 = vmatpush2.bf16.msra.mxu0 0
    %1841 = vmatprep.subr.bf16.mxu0 0
    %1842 = vmatpush2.bf16.msra.mxu0 0
    %1843 = vmatprep.subr.bf16.mxu0 0
    %1844 = vmatpush2.bf16.msra.mxu0 0
    %1845 = vmatprep.subr.bf16.mxu0 0
    %1846 = vmatpush2.bf16.msra.mxu0 0
    %1847 = vmatprep.subr.bf16.mxu0 0
    %1848 = vmatpush2.bf16.msra.mxu0 0
    %1849 = vmatprep.subr.bf16.mxu0 0
    %1850 = vmatpush2.bf16.msra.mxu0 0
    %1851 = vmatprep.subr.bf16.mxu0 0
    %1852 = vmatpush2.bf16.msra.mxu0 0
    %1853 = vmatprep.mubr.bf16.mxu0 0
    %1854 = vmatmul.mubr.bf16.gmra.mxu0 %v392
    %v1855 = vpop.f32.mrf.mxu0
    %v1856 = vadd.f32 %v1813, %v1855
    %v1857 = vpop.f32.mrf.mxu0
    %v1858 = vadd.f32 %v1815, %v1857
    %v1859 = vpop.f32.mrf.mxu0
    %v1860 = vadd.f32 %v1817, %v1859
    %v1861 = vpop.f32.mrf.mxu0
    %v1862 = vadd.f32 %v1819, %v1861
    %1863 = vdwg.mxu0
    %v1864 = vmax.f32 %v1684, 0.0
    %v1865 = vmax.f32 %v1686, 0.0
    %v1866 = vmax.f32 %v1856, 0.0
    %v1867 = vmax.f32 %v1858, 0.0
    %v1868 = vmax.f32 %v1688, 0.0
    %v1869 = vmax.f32 %v1690, 0.0
    %v1870 = vmax.f32 %v1860, 0.0
    %v1871 = vmax.f32 %v1862, 0.0
    %v1872 = vpack.c.bf16 %v1868, %v1864
    %v1873 = vpack.c.bf16 %v1869, %v1865
    %v1874 = vpack.c.bf16 %v1870, %v1866
    %v1875 = vpack.c.bf16 %v1871, %v1867
    %v1876 = vld [vmem:[#allocation4] sm:$0xff]
    %v1877 = vld [vmem:[#allocation4 + $0x8] sm:$0xff]
    %v1878 = vld [vmem:[#allocation4 + $0x10] sm:$0xff]
    %v1879 = vld [vmem:[#allocation4 + $0x18] sm:$0xff]
    %v1880 = vld [vmem:[#allocation4 + $0x20] sm:$0xff]
    %v1881 = vld [vmem:[#allocation4 + $0x28] sm:$0xff]
    %v1882 = vld [vmem:[#allocation4 + $0x30] sm:$0xff]
    %v1883 = vld [vmem:[#allocation4 + $0x38] sm:$0xff]
    %v1884 = vld [vmem:[#allocation4 + $0x40] sm:$0xff]
    %v1885 = vld [vmem:[#allocation4 + $0x48] sm:$0xff]
    %v1886 = vld [vmem:[#allocation4 + $0x50] sm:$0xff]
    %v1887 = vld [vmem:[#allocation4 + $0x58] sm:$0xff]
    %v1888 = vld [vmem:[#allocation4 + $0x60] sm:$0xff]
    %v1889 = vld [vmem:[#allocation4 + $0x68] sm:$0xff]
    %v1890 = vld [vmem:[#allocation4 + $0x70] sm:$0xff]
    %v1891 = vld [vmem:[#allocation4 + $0x78] sm:$0xff]
    %v1892 = vld [vmem:[#allocation4 + $0x80] sm:$0xff]
    %v1893 = vld [vmem:[#allocation4 + $0x88] sm:$0xff]
    %v1894 = vld [vmem:[#allocation4 + $0x90] sm:$0xff]
    %v1895 = vld [vmem:[#allocation4 + $0x98] sm:$0xff]
    %v1896 = vld [vmem:[#allocation4 + $0xa0] sm:$0xff]
    %v1897 = vld [vmem:[#allocation4 + $0xa8] sm:$0xff]
    %v1898 = vld [vmem:[#allocation4 + $0xb0] sm:$0xff]
    %v1899 = vld [vmem:[#allocation4 + $0xb8] sm:$0xff]
    %v1900 = vld [vmem:[#allocation4 + $0xc0] sm:$0xff]
    %v1901 = vld [vmem:[#allocation4 + $0xc8] sm:$0xff]
    %v1902 = vld [vmem:[#allocation4 + $0xd0] sm:$0xff]
    %v1903 = vld [vmem:[#allocation4 + $0xd8] sm:$0xff]
    %v1904 = vld [vmem:[#allocation4 + $0xe0] sm:$0xff]
    %v1905 = vld [vmem:[#allocation4 + $0xe8] sm:$0xff]
    %v1906 = vld [vmem:[#allocation4 + $0xf0] sm:$0xff]
    %v1907 = vld [vmem:[#allocation4 + $0xf8] sm:$0xff]
    %v1908 = vld [vmem:[#allocation4 + $0x100] sm:$0xff]
    %v1909 = vld [vmem:[#allocation4 + $0x108] sm:$0xff]
    %v1910 = vld [vmem:[#allocation4 + $0x110] sm:$0xff]
    %v1911 = vld [vmem:[#allocation4 + $0x118] sm:$0xff]
    %v1912 = vld [vmem:[#allocation4 + $0x120] sm:$0xff]
    %v1913 = vld [vmem:[#allocation4 + $0x128] sm:$0xff]
    %v1914 = vld [vmem:[#allocation4 + $0x130] sm:$0xff]
    %v1915 = vld [vmem:[#allocation4 + $0x138] sm:$0xff]
    %v1916 = vld [vmem:[#allocation4 + $0x140] sm:$0xff]
    %v1917 = vld [vmem:[#allocation4 + $0x148] sm:$0xff]
    %v1918 = vld [vmem:[#allocation4 + $0x150] sm:$0xff]
    %v1919 = vld [vmem:[#allocation4 + $0x158] sm:$0xff]
    %v1920 = vld [vmem:[#allocation4 + $0x160] sm:$0xff]
    %v1921 = vld [vmem:[#allocation4 + $0x168] sm:$0xff]
    %v1922 = vld [vmem:[#allocation4 + $0x170] sm:$0xff]
    %v1923 = vld [vmem:[#allocation4 + $0x178] sm:$0xff]
    %v1924 = vld [vmem:[#allocation4 + $0x180] sm:$0xff]
    %v1925 = vld [vmem:[#allocation4 + $0x188] sm:$0xff]
    %v1926 = vld [vmem:[#allocation4 + $0x190] sm:$0xff]
    %v1927 = vld [vmem:[#allocation4 + $0x198] sm:$0xff]
    %v1928 = vld [vmem:[#allocation4 + $0x1a0] sm:$0xff]
    %v1929 = vld [vmem:[#allocation4 + $0x1a8] sm:$0xff]
    %v1930 = vld [vmem:[#allocation4 + $0x1b0] sm:$0xff]
    %v1931 = vld [vmem:[#allocation4 + $0x1b8] sm:$0xff]
    %v1932 = vld [vmem:[#allocation4 + $0x1c0] sm:$0xff]
    %v1933 = vld [vmem:[#allocation4 + $0x1c8] sm:$0xff]
    %v1934 = vld [vmem:[#allocation4 + $0x1d0] sm:$0xff]
    %v1935 = vld [vmem:[#allocation4 + $0x1d8] sm:$0xff]
    %v1936 = vld [vmem:[#allocation4 + $0x1e0] sm:$0xff]
    %v1937 = vld [vmem:[#allocation4 + $0x1e8] sm:$0xff]
    %v1938 = vld [vmem:[#allocation4 + $0x1f0] sm:$0xff]
    %v1939 = vld [vmem:[#allocation4 + $0x1f8] sm:$0xff]
    %v1940 = vld [vmem:[%s4] sm:$0x3]
    %v1942 = vlaneseq
    %v1943 = vshrl.u32 %v1942, 7
    %v1944 = vsub.s32 0, %v1943
    %v1945 = vrot.slane %v1940, %v1944
    %v1946 = vlaneseq
    %v1947 = vshrl.u32 %v1946, 7
    %v1948 = vsub.s32 1, %v1947
    %v1949 = vrot.slane %v1940, %v1948
    %v2016 = vunpack.c.l.b16 %v1876
    %v2017 = vunpack.c.h.b16 %v1876
    %v2018 = vunpack.c.l.b16 %v1877
    %v2019 = vunpack.c.h.b16 %v1877
    %v2020 = vunpack.c.l.b16 %v1878
    %v2021 = vunpack.c.h.b16 %v1878
    %v2022 = vunpack.c.l.b16 %v1879
    %v2023 = vunpack.c.h.b16 %v1879
    %v2024 = vunpack.c.l.b16 %v1880
    %v2025 = vunpack.c.h.b16 %v1880
    %v2026 = vunpack.c.l.b16 %v1881
    %v2027 = vunpack.c.h.b16 %v1881
    %v2028 = vunpack.c.l.b16 %v1882
    %v2029 = vunpack.c.h.b16 %v1882
    %v2030 = vunpack.c.l.b16 %v1883
    %v2031 = vunpack.c.h.b16 %v1883
    %v2032 = vunpack.c.l.b16 %v1884
    %v2033 = vunpack.c.h.b16 %v1884
    %v2034 = vunpack.c.l.b16 %v1885
    %v2035 = vunpack.c.h.b16 %v1885
    %v2036 = vunpack.c.l.b16 %v1886
    %v2037 = vunpack.c.h.b16 %v1886
    %v2038 = vunpack.c.l.b16 %v1887
    %v2039 = vunpack.c.h.b16 %v1887
    %v2040 = vunpack.c.l.b16 %v1888
    %v2041 = vunpack.c.h.b16 %v1888
    %v2042 = vunpack.c.l.b16 %v1889
    %v2043 = vunpack.c.h.b16 %v1889
    %v2044 = vunpack.c.l.b16 %v1890
    %v2045 = vunpack.c.h.b16 %v1890
    %v2046 = vunpack.c.l.b16 %v1891
    %v2047 = vunpack.c.h.b16 %v1891
    %v2048 = vunpack.c.l.b16 %v1892
    %v2049 = vunpack.c.h.b16 %v1892
    %v2050 = vunpack.c.l.b16 %v1893
    %v2051 = vunpack.c.h.b16 %v1893
    %v2052 = vunpack.c.l.b16 %v1894
    %v2053 = vunpack.c.h.b16 %v1894
    %v2054 = vunpack.c.l.b16 %v1895
    %v2055 = vunpack.c.h.b16 %v1895
    %v2056 = vunpack.c.l.b16 %v1896
    %v2057 = vunpack.c.h.b16 %v1896
    %v2058 = vunpack.c.l.b16 %v1897
    %v2059 = vunpack.c.h.b16 %v1897
    %v2060 = vunpack.c.l.b16 %v1898
    %v2061 = vunpack.c.h.b16 %v1898
    %v2062 = vunpack.c.l.b16 %v1899
    %v2063 = vunpack.c.h.b16 %v1899
    %v2064 = vunpack.c.l.b16 %v1900
    %v2065 = vunpack.c.h.b16 %v1900
    %v2066 = vunpack.c.l.b16 %v1901
    %v2067 = vunpack.c.h.b16 %v1901
    %v2068 = vunpack.c.l.b16 %v1902
    %v2069 = vunpack.c.h.b16 %v1902
    %v2070 = vunpack.c.l.b16 %v1903
    %v2071 = vunpack.c.h.b16 %v1903
    %v2072 = vunpack.c.l.b16 %v1904
    %v2073 = vunpack.c.h.b16 %v1904
    %v2074 = vunpack.c.l.b16 %v1905
    %v2075 = vunpack.c.h.b16 %v1905
    %v2076 = vunpack.c.l.b16 %v1906
    %v2077 = vunpack.c.h.b16 %v1906
    %v2078 = vunpack.c.l.b16 %v1907
    %v2079 = vunpack.c.h.b16 %v1907
    %v2080 = vunpack.c.l.b16 %v1908
    %v2081 = vunpack.c.h.b16 %v1908
    %v2082 = vunpack.c.l.b16 %v1909
    %v2083 = vunpack.c.h.b16 %v1909
    %v2084 = vunpack.c.l.b16 %v1910
    %v2085 = vunpack.c.h.b16 %v1910
    %v2086 = vunpack.c.l.b16 %v1911
    %v2087 = vunpack.c.h.b16 %v1911
    %v2088 = vunpack.c.l.b16 %v1912
    %v2089 = vunpack.c.h.b16 %v1912
    %v2090 = vunpack.c.l.b16 %v1913
    %v2091 = vunpack.c.h.b16 %v1913
    %v2092 = vunpack.c.l.b16 %v1914
    %v2093 = vunpack.c.h.b16 %v1914
    %v2094 = vunpack.c.l.b16 %v1915
    %v2095 = vunpack.c.h.b16 %v1915
    %v2096 = vunpack.c.l.b16 %v1916
    %v2097 = vunpack.c.h.b16 %v1916
    %v2098 = vunpack.c.l.b16 %v1917
    %v2099 = vunpack.c.h.b16 %v1917
    %v2100 = vunpack.c.l.b16 %v1918
    %v2101 = vunpack.c.h.b16 %v1918
    %v2102 = vunpack.c.l.b16 %v1919
    %v2103 = vunpack.c.h.b16 %v1919
    %v2104 = vunpack.c.l.b16 %v1920
    %v2105 = vunpack.c.h.b16 %v1920
    %v2106 = vunpack.c.l.b16 %v1921
    %v2107 = vunpack.c.h.b16 %v1921
    %v2108 = vunpack.c.l.b16 %v1922
    %v2109 = vunpack.c.h.b16 %v1922
    %v2110 = vunpack.c.l.b16 %v1923
    %v2111 = vunpack.c.h.b16 %v1923
    %v2112 = vunpack.c.l.b16 %v1924
    %v2113 = vunpack.c.h.b16 %v1924
    %v2114 = vunpack.c.l.b16 %v1925
    %v2115 = vunpack.c.h.b16 %v1925
    %v2116 = vunpack.c.l.b16 %v1926
    %v2117 = vunpack.c.h.b16 %v1926
    %v2118 = vunpack.c.l.b16 %v1927
    %v2119 = vunpack.c.h.b16 %v1927
    %v2120 = vunpack.c.l.b16 %v1928
    %v2121 = vunpack.c.h.b16 %v1928
    %v2122 = vunpack.c.l.b16 %v1929
    %v2123 = vunpack.c.h.b16 %v1929
    %v2124 = vunpack.c.l.b16 %v1930
    %v2125 = vunpack.c.h.b16 %v1930
    %v2126 = vunpack.c.l.b16 %v1931
    %v2127 = vunpack.c.h.b16 %v1931
    %v2128 = vunpack.c.l.b16 %v1932
    %v2129 = vunpack.c.h.b16 %v1932
    %v2130 = vunpack.c.l.b16 %v1933
    %v2131 = vunpack.c.h.b16 %v1933
    %v2132 = vunpack.c.l.b16 %v1934
    %v2133 = vunpack.c.h.b16 %v1934
    %v2134 = vunpack.c.l.b16 %v1935
    %v2135 = vunpack.c.h.b16 %v1935
    %v2136 = vunpack.c.l.b16 %v1936
    %v2137 = vunpack.c.h.b16 %v1936
    %v2138 = vunpack.c.l.b16 %v1937
    %v2139 = vunpack.c.h.b16 %v1937
    %v2140 = vunpack.c.l.b16 %v1938
    %v2141 = vunpack.c.h.b16 %v1938
    %v2142 = vunpack.c.l.b16 %v1939
    %v2143 = vunpack.c.h.b16 %v1939
    %v2144 = vpack.c.b16 %v2018, %v2016
    %v2145 = vpack.c.b16 %v2019, %v2017
    %v2146 = vpack.c.b16 %v2022, %v2020
    %v2147 = vpack.c.b16 %v2023, %v2021
    %v2148 = vpack.c.b16 %v2026, %v2024
    %v2149 = vpack.c.b16 %v2027, %v2025
    %v2150 = vpack.c.b16 %v2030, %v2028
    %v2151 = vpack.c.b16 %v2031, %v2029
    %v2152 = vpack.c.b16 %v2034, %v2032
    %v2153 = vpack.c.b16 %v2035, %v2033
    %v2154 = vpack.c.b16 %v2038, %v2036
    %v2155 = vpack.c.b16 %v2039, %v2037
    %v2156 = vpack.c.b16 %v2042, %v2040
    %v2157 = vpack.c.b16 %v2043, %v2041
    %v2158 = vpack.c.b16 %v2046, %v2044
    %v2159 = vpack.c.b16 %v2047, %v2045
    %v2160 = vpack.c.b16 %v2050, %v2048
    %v2161 = vpack.c.b16 %v2051, %v2049
    %v2162 = vpack.c.b16 %v2054, %v2052
    %v2163 = vpack.c.b16 %v2055, %v2053
    %v2164 = vpack.c.b16 %v2058, %v2056
    %v2165 = vpack.c.b16 %v2059, %v2057
    %v2166 = vpack.c.b16 %v2062, %v2060
    %v2167 = vpack.c.b16 %v2063, %v2061
    %v2168 = vpack.c.b16 %v2066, %v2064
    %v2169 = vpack.c.b16 %v2067, %v2065
    %v2170 = vpack.c.b16 %v2070, %v2068
    %v2171 = vpack.c.b16 %v2071, %v2069
    %v2172 = vpack.c.b16 %v2074, %v2072
    %v2173 = vpack.c.b16 %v2075, %v2073
    %v2174 = vpack.c.b16 %v2078, %v2076
    %v2175 = vpack.c.b16 %v2079, %v2077
    %v2176 = vpack.c.b16 %v2082, %v2080
    %v2177 = vpack.c.b16 %v2083, %v2081
    %v2178 = vpack.c.b16 %v2086, %v2084
    %v2179 = vpack.c.b16 %v2087, %v2085
    %v2180 = vpack.c.b16 %v2090, %v2088
    %v2181 = vpack.c.b16 %v2091, %v2089
    %v2182 = vpack.c.b16 %v2094, %v2092
    %v2183 = vpack.c.b16 %v2095, %v2093
    %v2184 = vpack.c.b16 %v2098, %v2096
    %v2185 = vpack.c.b16 %v2099, %v2097
    %v2186 = vpack.c.b16 %v2102, %v2100
    %v2187 = vpack.c.b16 %v2103, %v2101
    %v2188 = vpack.c.b16 %v2106, %v2104
    %v2189 = vpack.c.b16 %v2107, %v2105
    %v2190 = vpack.c.b16 %v2110, %v2108
    %v2191 = vpack.c.b16 %v2111, %v2109
    %v2192 = vpack.c.b16 %v2114, %v2112
    %v2193 = vpack.c.b16 %v2115, %v2113
    %v2194 = vpack.c.b16 %v2118, %v2116
    %v2195 = vpack.c.b16 %v2119, %v2117
    %v2196 = vpack.c.b16 %v2122, %v2120
    %v2197 = vpack.c.b16 %v2123, %v2121
    %v2198 = vpack.c.b16 %v2126, %v2124
    %v2199 = vpack.c.b16 %v2127, %v2125
    %v2200 = vpack.c.b16 %v2130, %v2128
    %v2201 = vpack.c.b16 %v2131, %v2129
    %v2202 = vpack.c.b16 %v2134, %v2132
    %v2203 = vpack.c.b16 %v2135, %v2133
    %v2204 = vpack.c.b16 %v2138, %v2136
    %v2205 = vpack.c.b16 %v2139, %v2137
    %v2206 = vpack.c.b16 %v2142, %v2140
    %v2207 = vpack.c.b16 %v2143, %v2141
    %2272 = vmatprep.subr.bf16.mxu0 %v2159
    %2273 = vmatpush1.bf16.msra.mxu0 %v2158
    %2274 = vmatprep.subr.bf16.mxu0 %v2157
    %2275 = vmatpush1.bf16.msra.mxu0 %v2156
    %2276 = vmatprep.subr.bf16.mxu0 %v2155
    %2277 = vmatpush1.bf16.msra.mxu0 %v2154
    %2278 = vmatprep.subr.bf16.mxu0 %v2153
    %2279 = vmatpush1.bf16.msra.mxu0 %v2152
    %2280 = vmatprep.subr.bf16.mxu0 %v2151
    %2281 = vmatpush1.bf16.msra.mxu0 %v2150
    %2282 = vmatprep.subr.bf16.mxu0 %v2149
    %2283 = vmatpush1.bf16.msra.mxu0 %v2148
    %2284 = vmatprep.subr.bf16.mxu0 %v2147
    %2285 = vmatpush1.bf16.msra.mxu0 %v2146
    %2286 = vmatprep.subr.bf16.mxu0 %v2145
    %2287 = vmatpush1.bf16.msra.mxu0 %v2144
    %2288 = vmatprep.subr.bf16.mxu0 %v2175
    %2289 = vmatpush2.bf16.msra.mxu0 %v2174
    %2290 = vmatprep.subr.bf16.mxu0 %v2173
    %2291 = vmatpush2.bf16.msra.mxu0 %v2172
    %2292 = vmatprep.subr.bf16.mxu0 %v2171
    %2293 = vmatpush2.bf16.msra.mxu0 %v2170
    %2294 = vmatprep.subr.bf16.mxu0 %v2169
    %2295 = vmatpush2.bf16.msra.mxu0 %v2168
    %2296 = vmatprep.subr.bf16.mxu0 %v2167
    %2297 = vmatpush2.bf16.msra.mxu0 %v2166
    %2298 = vmatprep.subr.bf16.mxu0 %v2165
    %2299 = vmatpush2.bf16.msra.mxu0 %v2164
    %2300 = vmatprep.subr.bf16.mxu0 %v2163
    %2301 = vmatpush2.bf16.msra.mxu0 %v2162
    %2302 = vmatprep.subr.bf16.mxu0 %v2161
    %2303 = vmatpush2.bf16.msra.mxu0 %v2160
    %2304 = vmatprep.mubr.bf16.mxu0 %v1873
    %2305 = vmatmul.mubr.bf16.gmra.mxu0 %v1872
    %v2306 = vpop.f32.mrf.mxu0
    %v2307 = vadd.f32 %v1945, %v2306
    %v2308 = vpop.f32.mrf.mxu0
    %v2309 = vadd.f32 %v1949, %v2308
    %v2310 = vpop.f32.mrf.mxu0
    %v2311 = vadd.f32 %v1945, %v2310
    %v2312 = vpop.f32.mrf.mxu0
    %v2313 = vadd.f32 %v1949, %v2312
    %2314 = vdwg.mxu0
    %2315 = vmatprep.subr.bf16.mxu0 %v2191
    %2316 = vmatpush1.bf16.msra.mxu0 %v2190
    %2317 = vmatprep.subr.bf16.mxu0 %v2189
    %2318 = vmatpush1.bf16.msra.mxu0 %v2188
    %2319 = vmatprep.subr.bf16.mxu0 %v2187
    %2320 = vmatpush1.bf16.msra.mxu0 %v2186
    %2321 = vmatprep.subr.bf16.mxu0 %v2185
    %2322 = vmatpush1.bf16.msra.mxu0 %v2184
    %2323 = vmatprep.subr.bf16.mxu0 %v2183
    %2324 = vmatpush1.bf16.msra.mxu0 %v2182
    %2325 = vmatprep.subr.bf16.mxu0 %v2181
    %2326 = vmatpush1.bf16.msra.mxu0 %v2180
    %2327 = vmatprep.subr.bf16.mxu0 %v2179
    %2328 = vmatpush1.bf16.msra.mxu0 %v2178
    %2329 = vmatprep.subr.bf16.mxu0 %v2177
    %2330 = vmatpush1.bf16.msra.mxu0 %v2176
    %2331 = vmatprep.subr.bf16.mxu0 %v2207
    %2332 = vmatpush2.bf16.msra.mxu0 %v2206
    %2333 = vmatprep.subr.bf16.mxu0 %v2205
    %2334 = vmatpush2.bf16.msra.mxu0 %v2204
    %2335 = vmatprep.subr.bf16.mxu0 %v2203
    %2336 = vmatpush2.bf16.msra.mxu0 %v2202
    %2337 = vmatprep.subr.bf16.mxu0 %v2201
    %2338 = vmatpush2.bf16.msra.mxu0 %v2200
    %2339 = vmatprep.subr.bf16.mxu0 %v2199
    %2340 = vmatpush2.bf16.msra.mxu0 %v2198
    %2341 = vmatprep.subr.bf16.mxu0 %v2197
    %2342 = vmatpush2.bf16.msra.mxu0 %v2196
    %2343 = vmatprep.subr.bf16.mxu0 %v2195
    %2344 = vmatpush2.bf16.msra.mxu0 %v2194
    %2345 = vmatprep.subr.bf16.mxu0 %v2193
    %2346 = vmatpush2.bf16.msra.mxu0 %v2192
    %2347 = vmatprep.mubr.bf16.mxu0 %v1875
    %2348 = vmatmul.mubr.bf16.gmra.mxu0 %v1874
    %v2349 = vpop.f32.mrf.mxu0
    %v2350 = vadd.f32 %v2307, %v2349
    %v2351 = vpop.f32.mrf.mxu0
    %v2352 = vadd.f32 %v2309, %v2351
    %v2353 = vpop.f32.mrf.mxu0
    %v2354 = vadd.f32 %v2311, %v2353
    %v2355 = vpop.f32.mrf.mxu0
    %v2356 = vadd.f32 %v2313, %v2355
    %2357 = vdwg.mxu0
    %2358 = vst [vmem:[%s12] sm:$0xff] %v2350
    %2359 = vst [vmem:[%s12 + $0x8] sm:$0xff] %v2352
    %2360 = vst [vmem:[%s12 + $0x10] sm:$0xff] %v2354
    %2361 = vst [vmem:[%s12 + $0x18] sm:$0xff] %v2356
    %v2362 = vld [vmem:[%s5] sm:$0xff]
    %v2363 = vld [vmem:[%s5 + $0x8] sm:$0xff]
    %v2364 = vld [vmem:[%s5 + $0x10] sm:$0x3]
    %v2365 = vld [vmem:[%s5 + $0x18] sm:$0x3]
    %v2366 = vld [vmem:[#allocation6] sm:$0xff]
    %v2367 = vld [vmem:[#allocation6 + $0x8] sm:$0xff]
    %v2368 = vld [vmem:[#allocation6 + $0x10] sm:$0xff]
    %v2369 = vld [vmem:[#allocation6 + $0x18] sm:$0xff]
    %v2370 = vld [vmem:[#allocation6 + $0x20] sm:$0xff]
    %v2371 = vld [vmem:[#allocation6 + $0x28] sm:$0xff]
    %v2372 = vld [vmem:[#allocation6 + $0x30] sm:$0xff]
    %v2373 = vld [vmem:[#allocation6 + $0x38] sm:$0xff]
    %v2374 = vld [vmem:[#allocation6 + $0x40] sm:$0xff]
    %v2375 = vld [vmem:[#allocation6 + $0x48] sm:$0xff]
    %v2376 = vld [vmem:[#allocation6 + $0x50] sm:$0xff]
    %v2377 = vld [vmem:[#allocation6 + $0x58] sm:$0xff]
    %v2378 = vld [vmem:[#allocation6 + $0x60] sm:$0xff]
    %v2379 = vld [vmem:[#allocation6 + $0x68] sm:$0xff]
    %v2380 = vld [vmem:[#allocation6 + $0x70] sm:$0xff]
    %v2381 = vld [vmem:[#allocation6 + $0x78] sm:$0xff]
    %v2382 = vld [vmem:[#allocation6 + $0x80] sm:$0xff]
    %v2383 = vld [vmem:[#allocation6 + $0x88] sm:$0xff]
    %v2384 = vld [vmem:[#allocation6 + $0x90] sm:$0xff]
    %v2385 = vld [vmem:[#allocation6 + $0x98] sm:$0xff]
    %v2386 = vld [vmem:[#allocation6 + $0xa0] sm:$0xff]
    %v2387 = vld [vmem:[#allocation6 + $0xa8] sm:$0xff]
    %v2388 = vld [vmem:[#allocation6 + $0xb0] sm:$0xff]
    %v2389 = vld [vmem:[#allocation6 + $0xb8] sm:$0xff]
    %v2390 = vld [vmem:[#allocation6 + $0xc0] sm:$0xff]
    %v2391 = vld [vmem:[#allocation6 + $0xc8] sm:$0xff]
    %v2392 = vld [vmem:[#allocation6 + $0xd0] sm:$0xff]
    %v2393 = vld [vmem:[#allocation6 + $0xd8] sm:$0xff]
    %v2394 = vld [vmem:[#allocation6 + $0xe0] sm:$0xff]
    %v2395 = vld [vmem:[#allocation6 + $0xe8] sm:$0xff]
    %v2396 = vld [vmem:[#allocation6 + $0xf0] sm:$0xff]
    %v2397 = vld [vmem:[#allocation6 + $0xf8] sm:$0xff]
    %v2398 = vlaneseq
    %v2399 = vshrl.u32 %v2398, 7
    %v2400 = vsub.s32 0, %v2399
    %v2401 = vrot.slane %v2362, %v2400
    %v2402 = vlaneseq
    %v2403 = vshrl.u32 %v2402, 7
    %v2404 = vsub.s32 0, %v2403
    %v2405 = vrot.slane %v2363, %v2404
    %v2406 = vsub.f32 %v2350, %v2401
    %v2407 = vsub.f32 %v2352, %v2405
    %v2408 = vsub.f32 %v2354, %v2401
    %v2409 = vsub.f32 %v2356, %v2405
    %v2410 = vmul.f32 %v2406, %v2406
    %v2411 = vmul.f32 %v2407, %v2407
    %v2412 = vmul.f32 %v2408, %v2408
    %v2413 = vmul.f32 %v2409, %v2409
    %v2414 = vpack.c.bf16 %v2412, %v2410
    %v2415 = vpack.c.bf16 %v2413, %v2411
    %v2448 = vunpack.c.l.b16 %v2366
    %v2449 = vunpack.c.h.b16 %v2366
    %v2450 = vunpack.c.l.b16 %v2367
    %v2451 = vunpack.c.h.b16 %v2367
    %v2452 = vunpack.c.l.b16 %v2368
    %v2453 = vunpack.c.h.b16 %v2368
    %v2454 = vunpack.c.l.b16 %v2369
    %v2455 = vunpack.c.h.b16 %v2369
    %v2456 = vunpack.c.l.b16 %v2370
    %v2457 = vunpack.c.h.b16 %v2370
    %v2458 = vunpack.c.l.b16 %v2371
    %v2459 = vunpack.c.h.b16 %v2371
    %v2460 = vunpack.c.l.b16 %v2372
    %v2461 = vunpack.c.h.b16 %v2372
    %v2462 = vunpack.c.l.b16 %v2373
    %v2463 = vunpack.c.h.b16 %v2373
    %v2464 = vunpack.c.l.b16 %v2374
    %v2465 = vunpack.c.h.b16 %v2374
    %v2466 = vunpack.c.l.b16 %v2375
    %v2467 = vunpack.c.h.b16 %v2375
    %v2468 = vunpack.c.l.b16 %v2376
    %v2469 = vunpack.c.h.b16 %v2376
    %v2470 = vunpack.c.l.b16 %v2377
    %v2471 = vunpack.c.h.b16 %v2377
    %v2472 = vunpack.c.l.b16 %v2378
    %v2473 = vunpack.c.h.b16 %v2378
    %v2474 = vunpack.c.l.b16 %v2379
    %v2475 = vunpack.c.h.b16 %v2379
    %v2476 = vunpack.c.l.b16 %v2380
    %v2477 = vunpack.c.h.b16 %v2380
    %v2478 = vunpack.c.l.b16 %v2381
    %v2479 = vunpack.c.h.b16 %v2381
    %v2480 = vunpack.c.l.b16 %v2382
    %v2481 = vunpack.c.h.b16 %v2382
    %v2482 = vunpack.c.l.b16 %v2383
    %v2483 = vunpack.c.h.b16 %v2383
    %v2484 = vunpack.c.l.b16 %v2384
    %v2485 = vunpack.c.h.b16 %v2384
    %v2486 = vunpack.c.l.b16 %v2385
    %v2487 = vunpack.c.h.b16 %v2385
    %v2488 = vunpack.c.l.b16 %v2386
    %v2489 = vunpack.c.h.b16 %v2386
    %v2490 = vunpack.c.l.b16 %v2387
    %v2491 = vunpack.c.h.b16 %v2387
    %v2492 = vunpack.c.l.b16 %v2388
    %v2493 = vunpack.c.h.b16 %v2388
    %v2494 = vunpack.c.l.b16 %v2389
    %v2495 = vunpack.c.h.b16 %v2389
    %v2496 = vunpack.c.l.b16 %v2390
    %v2497 = vunpack.c.h.b16 %v2390
    %v2498 = vunpack.c.l.b16 %v2391
    %v2499 = vunpack.c.h.b16 %v2391
    %v2500 = vunpack.c.l.b16 %v2392
    %v2501 = vunpack.c.h.b16 %v2392
    %v2502 = vunpack.c.l.b16 %v2393
    %v2503 = vunpack.c.h.b16 %v2393
    %v2504 = vunpack.c.l.b16 %v2394
    %v2505 = vunpack.c.h.b16 %v2394
    %v2506 = vunpack.c.l.b16 %v2395
    %v2507 = vunpack.c.h.b16 %v2395
    %v2508 = vunpack.c.l.b16 %v2396
    %v2509 = vunpack.c.h.b16 %v2396
    %v2510 = vunpack.c.l.b16 %v2397
    %v2511 = vunpack.c.h.b16 %v2397
    %v2512 = vpack.c.b16 %v2450, %v2448
    %v2513 = vpack.c.b16 %v2451, %v2449
    %v2514 = vpack.c.b16 %v2454, %v2452
    %v2515 = vpack.c.b16 %v2455, %v2453
    %v2516 = vpack.c.b16 %v2458, %v2456
    %v2517 = vpack.c.b16 %v2459, %v2457
    %v2518 = vpack.c.b16 %v2462, %v2460
    %v2519 = vpack.c.b16 %v2463, %v2461
    %v2520 = vpack.c.b16 %v2466, %v2464
    %v2521 = vpack.c.b16 %v2467, %v2465
    %v2522 = vpack.c.b16 %v2470, %v2468
    %v2523 = vpack.c.b16 %v2471, %v2469
    %v2524 = vpack.c.b16 %v2474, %v2472
    %v2525 = vpack.c.b16 %v2475, %v2473
    %v2526 = vpack.c.b16 %v2478, %v2476
    %v2527 = vpack.c.b16 %v2479, %v2477
    %v2528 = vpack.c.b16 %v2482, %v2480
    %v2529 = vpack.c.b16 %v2483, %v2481
    %v2530 = vpack.c.b16 %v2486, %v2484
    %v2531 = vpack.c.b16 %v2487, %v2485
    %v2532 = vpack.c.b16 %v2490, %v2488
    %v2533 = vpack.c.b16 %v2491, %v2489
    %v2534 = vpack.c.b16 %v2494, %v2492
    %v2535 = vpack.c.b16 %v2495, %v2493
    %v2536 = vpack.c.b16 %v2498, %v2496
    %v2537 = vpack.c.b16 %v2499, %v2497
    %v2538 = vpack.c.b16 %v2502, %v2500
    %v2539 = vpack.c.b16 %v2503, %v2501
    %v2540 = vpack.c.b16 %v2506, %v2504
    %v2541 = vpack.c.b16 %v2507, %v2505
    %v2542 = vpack.c.b16 %v2510, %v2508
    %v2543 = vpack.c.b16 %v2511, %v2509
    %2576 = vmatprep.subr.bf16.mxu0 %v2527
    %2577 = vmatpush1.bf16.msra.mxu0 %v2526
    %2578 = vmatprep.subr.bf16.mxu0 %v2525
    %2579 = vmatpush1.bf16.msra.mxu0 %v2524
    %2580 = vmatprep.subr.bf16.mxu0 %v2523
    %2581 = vmatpush1.bf16.msra.mxu0 %v2522
    %2582 = vmatprep.subr.bf16.mxu0 %v2521
    %2583 = vmatpush1.bf16.msra.mxu0 %v2520
    %2584 = vmatprep.subr.bf16.mxu0 %v2519
    %2585 = vmatpush1.bf16.msra.mxu0 %v2518
    %2586 = vmatprep.subr.bf16.mxu0 %v2517
    %2587 = vmatpush1.bf16.msra.mxu0 %v2516
    %2588 = vmatprep.subr.bf16.mxu0 %v2515
    %2589 = vmatpush1.bf16.msra.mxu0 %v2514
    %2590 = vmatprep.subr.bf16.mxu0 %v2513
    %2591 = vmatpush1.bf16.msra.mxu0 %v2512
    %2592 = vmatprep.subr.bf16.mxu0 %v2543
    %2593 = vmatpush2.bf16.msra.mxu0 %v2542
    %2594 = vmatprep.subr.bf16.mxu0 %v2541
    %2595 = vmatpush2.bf16.msra.mxu0 %v2540
    %2596 = vmatprep.subr.bf16.mxu0 %v2539
    %2597 = vmatpush2.bf16.msra.mxu0 %v2538
    %2598 = vmatprep.subr.bf16.mxu0 %v2537
    %2599 = vmatpush2.bf16.msra.mxu0 %v2536
    %2600 = vmatprep.subr.bf16.mxu0 %v2535
    %2601 = vmatpush2.bf16.msra.mxu0 %v2534
    %2602 = vmatprep.subr.bf16.mxu0 %v2533
    %2603 = vmatpush2.bf16.msra.mxu0 %v2532
    %2604 = vmatprep.subr.bf16.mxu0 %v2531
    %2605 = vmatpush2.bf16.msra.mxu0 %v2530
    %2606 = vmatprep.subr.bf16.mxu0 %v2529
    %2607 = vmatpush2.bf16.msra.mxu0 %v2528
    %2608 = vmatprep.mubr.bf16.mxu0 %v2415
    %2609 = vmatmul.mubr.bf16.gmra.mxu0 %v2414
    %v2610 = vpop.f32.mrf.mxu0
    %v2611 = vadd.f32 0.0, %v2610
    %v2612 = vpop.f32.mrf.mxu0
    %v2613 = vadd.f32 0.0, %v2612
    %v2614 = vpop.f32.mrf.mxu0
    %v2615 = vadd.f32 0.0, %v2614
    %v2616 = vpop.f32.mrf.mxu0
    %v2617 = vadd.f32 0.0, %v2616
    %2618 = vdwg.mxu0
    %v2619 = vlaneseq
    %v2620 = vshrl.u32 %v2619, 7
    %v2621 = vsub.s32 1, %v2620
    %v2622 = vrot.slane %v2362, %v2621
    %v2623 = vlaneseq
    %v2624 = vshrl.u32 %v2623, 7
    %v2625 = vsub.s32 1, %v2624
    %v2626 = vrot.slane %v2363, %v2625
    %v2627 = vsub.f32 %v2350, %v2622
    %v2628 = vsub.f32 %v2352, %v2626
    %v2629 = vsub.f32 %v2354, %v2622
    %v2630 = vsub.f32 %v2356, %v2626
    %v2631 = vmul.f32 %v2627, %v2627
    %v2632 = vmul.f32 %v2628, %v2628
    %v2633 = vmul.f32 %v2629, %v2629
    %v2634 = vmul.f32 %v2630, %v2630
    %v2635 = vpack.c.bf16 %v2633, %v2631
    %v2636 = vpack.c.bf16 %v2634, %v2632
    %2637 = vmatprep.subr.bf16.mxu0 %v2527
    %2638 = vmatpush1.bf16.msra.mxu0 %v2526
    %2639 = vmatprep.subr.bf16.mxu0 %v2525
    %2640 = vmatpush1.bf16.msra.mxu0 %v2524
    %2641 = vmatprep.subr.bf16.mxu0 %v2523
    %2642 = vmatpush1.bf16.msra.mxu0 %v2522
    %2643 = vmatprep.subr.bf16.mxu0 %v2521
    %2644 = vmatpush1.bf16.msra.mxu0 %v2520
    %2645 = vmatprep.subr.bf16.mxu0 %v2519
    %2646 = vmatpush1.bf16.msra.mxu0 %v2518
    %2647 = vmatprep.subr.bf16.mxu0 %v2517
    %2648 = vmatpush1.bf16.msra.mxu0 %v2516
    %2649 = vmatprep.subr.bf16.mxu0 %v2515
    %2650 = vmatpush1.bf16.msra.mxu0 %v2514
    %2651 = vmatprep.subr.bf16.mxu0 %v2513
    %2652 = vmatpush1.bf16.msra.mxu0 %v2512
    %2653 = vmatprep.subr.bf16.mxu0 %v2543
    %2654 = vmatpush2.bf16.msra.mxu0 %v2542
    %2655 = vmatprep.subr.bf16.mxu0 %v2541
    %2656 = vmatpush2.bf16.msra.mxu0 %v2540
    %2657 = vmatprep.subr.bf16.mxu0 %v2539
    %2658 = vmatpush2.bf16.msra.mxu0 %v2538
    %2659 = vmatprep.subr.bf16.mxu0 %v2537
    %2660 = vmatpush2.bf16.msra.mxu0 %v2536
    %2661 = vmatprep.subr.bf16.mxu0 %v2535
    %2662 = vmatpush2.bf16.msra.mxu0 %v2534
    %2663 = vmatprep.subr.bf16.mxu0 %v2533
    %2664 = vmatpush2.bf16.msra.mxu0 %v2532
    %2665 = vmatprep.subr.bf16.mxu0 %v2531
    %2666 = vmatpush2.bf16.msra.mxu0 %v2530
    %2667 = vmatprep.subr.bf16.mxu0 %v2529
    %2668 = vmatpush2.bf16.msra.mxu0 %v2528
    %2669 = vmatprep.mubr.bf16.mxu0 %v2636
    %2670 = vmatmul.mubr.bf16.gmra.mxu0 %v2635
    %v2671 = vpop.f32.mrf.mxu0
    %v2672 = vadd.f32 0.0, %v2671
    %v2673 = vpop.f32.mrf.mxu0
    %v2674 = vadd.f32 0.0, %v2673
    %v2675 = vpop.f32.mrf.mxu0
    %v2676 = vadd.f32 0.0, %v2675
    %v2677 = vpop.f32.mrf.mxu0
    %v2678 = vadd.f32 0.0, %v2677
    %2679 = vdwg.mxu0
    %vm2680 = vcmp.lt.f32.partialorder %v2672, %v2611
    %vm2681 = vcmp.lt.f32.partialorder %v2674, %v2613
    %vm2682 = vcmp.lt.f32.partialorder %v2676, %v2615
    %vm2683 = vcmp.lt.f32.partialorder %v2678, %v2617
    %v2684 = vsel %vm2680, %v2672, %v2611
    %v2685 = vsel %vm2681, %v2674, %v2613
    %v2686 = vsel %vm2682, %v2676, %v2615
    %v2687 = vsel %vm2683, %v2678, %v2617
    %v2688 = vsel %vm2680, 1, 0
    %v2689 = vsel %vm2681, 1, 0
    %v2690 = vsel %vm2682, 1, 0
    %v2691 = vsel %vm2683, 1, 0
    %v2692 = vlaneseq
    %v2693 = vshrl.u32 %v2692, 7
    %v2694 = vsub.s32 2, %v2693
    %v2695 = vrot.slane %v2362, %v2694
    %v2696 = vlaneseq
    %v2697 = vshrl.u32 %v2696, 7
    %v2698 = vsub.s32 2, %v2697
    %v2699 = vrot.slane %v2363, %v2698
    %v2700 = vsub.f32 %v2350, %v2695
    %v2701 = vsub.f32 %v2352, %v2699
    %v2702 = vsub.f32 %v2354, %v2695
    %v2703 = vsub.f32 %v2356, %v2699
    %v2704 = vmul.f32 %v2700, %v2700
    %v2705 = vmul.f32 %v2701, %v2701
    %v2706 = vmul.f32 %v2702, %v2702
    %v2707 = vmul.f32 %v2703, %v2703
    %v2708 = vpack.c.bf16 %v2706, %v2704
    %v2709 = vpack.c.bf16 %v2707, %v2705
    %2710 = vmatprep.subr.bf16.mxu0 %v2527
    %2711 = vmatpush1.bf16.msra.mxu0 %v2526
    %2712 = vmatprep.subr.bf16.mxu0 %v2525
    %2713 = vmatpush1.bf16.msra.mxu0 %v2524
    %2714 = vmatprep.subr.bf16.mxu0 %v2523
    %2715 = vmatpush1.bf16.msra.mxu0 %v2522
    %2716 = vmatprep.subr.bf16.mxu0 %v2521
    %2717 = vmatpush1.bf16.msra.mxu0 %v2520
    %2718 = vmatprep.subr.bf16.mxu0 %v2519
    %2719 = vmatpush1.bf16.msra.mxu0 %v2518
    %2720 = vmatprep.subr.bf16.mxu0 %v2517
    %2721 = vmatpush1.bf16.msra.mxu0 %v2516
    %2722 = vmatprep.subr.bf16.mxu0 %v2515
    %2723 = vmatpush1.bf16.msra.mxu0 %v2514
    %2724 = vmatprep.subr.bf16.mxu0 %v2513
    %2725 = vmatpush1.bf16.msra.mxu0 %v2512
    %2726 = vmatprep.subr.bf16.mxu0 %v2543
    %2727 = vmatpush2.bf16.msra.mxu0 %v2542
    %2728 = vmatprep.subr.bf16.mxu0 %v2541
    %2729 = vmatpush2.bf16.msra.mxu0 %v2540
    %2730 = vmatprep.subr.bf16.mxu0 %v2539
    %2731 = vmatpush2.bf16.msra.mxu0 %v2538
    %2732 = vmatprep.subr.bf16.mxu0 %v2537
    %2733 = vmatpush2.bf16.msra.mxu0 %v2536
    %2734 = vmatprep.subr.bf16.mxu0 %v2535
    %2735 = vmatpush2.bf16.msra.mxu0 %v2534
    %2736 = vmatprep.subr.bf16.mxu0 %v2533
    %2737 = vmatpush2.bf16.msra.mxu0 %v2532
    %2738 = vmatprep.subr.bf16.mxu0 %v2531
    %2739 = vmatpush2.bf16.msra.mxu0 %v2530
    %2740 = vmatprep.subr.bf16.mxu0 %v2529
    %2741 = vmatpush2.bf16.msra.mxu0 %v2528
    %2742 = vmatprep.mubr.bf16.mxu0 %v2709
    %2743 = vmatmul.mubr.bf16.gmra.mxu0 %v2708
    %v2744 = vpop.f32.mrf.mxu0
    %v2745 = vadd.f32 0.0, %v2744
    %v2746 = vpop.f32.mrf.mxu0
    %v2747 = vadd.f32 0.0, %v2746
    %v2748 = vpop.f32.mrf.mxu0
    %v2749 = vadd.f32 0.0, %v2748
    %v2750 = vpop.f32.mrf.mxu0
    %v2751 = vadd.f32 0.0, %v2750
    %2752 = vdwg.mxu0
    %vm2753 = vcmp.lt.f32.partialorder %v2745, %v2684
    %vm2754 = vcmp.lt.f32.partialorder %v2747, %v2685
    %vm2755 = vcmp.lt.f32.partialorder %v2749, %v2686
    %vm2756 = vcmp.lt.f32.partialorder %v2751, %v2687
    %v2757 = vsel %vm2753, %v2745, %v2684
    %v2758 = vsel %vm2754, %v2747, %v2685
    %v2759 = vsel %vm2755, %v2749, %v2686
    %v2760 = vsel %vm2756, %v2751, %v2687
    %v2761 = vsel %vm2753, 2, %v2688
    %v2762 = vsel %vm2754, 2, %v2689
    %v2763 = vsel %vm2755, 2, %v2690
    %v2764 = vsel %vm2756, 2, %v2691
    %v2765 = vlaneseq
    %v2766 = vshrl.u32 %v2765, 7
    %v2767 = vsub.s32 3, %v2766
    %v2768 = vrot.slane %v2362, %v2767
    %v2769 = vlaneseq
    %v2770 = vshrl.u32 %v2769, 7
    %v2771 = vsub.s32 3, %v2770
    %v2772 = vrot.slane %v2363, %v2771
    %v2773 = vsub.f32 %v2350, %v2768
    %v2774 = vsub.f32 %v2352, %v2772
    %v2775 = vsub.f32 %v2354, %v2768
    %v2776 = vsub.f32 %v2356, %v2772
    %v2777 = vmul.f32 %v2773, %v2773
    %v2778 = vmul.f32 %v2774, %v2774
    %v2779 = vmul.f32 %v2775, %v2775
    %v2780 = vmul.f32 %v2776, %v2776
    %v2781 = vpack.c.bf16 %v2779, %v2777
    %v2782 = vpack.c.bf16 %v2780, %v2778
    %2783 = vmatprep.subr.bf16.mxu0 %v2527
    %2784 = vmatpush1.bf16.msra.mxu0 %v2526
    %2785 = vmatprep.subr.bf16.mxu0 %v2525
    %2786 = vmatpush1.bf16.msra.mxu0 %v2524
    %2787 = vmatprep.subr.bf16.mxu0 %v2523
    %2788 = vmatpush1.bf16.msra.mxu0 %v2522
    %2789 = vmatprep.subr.bf16.mxu0 %v2521
    %2790 = vmatpush1.bf16.msra.mxu0 %v2520
    %2791 = vmatprep.subr.bf16.mxu0 %v2519
    %2792 = vmatpush1.bf16.msra.mxu0 %v2518
    %2793 = vmatprep.subr.bf16.mxu0 %v2517
    %2794 = vmatpush1.bf16.msra.mxu0 %v2516
    %2795 = vmatprep.subr.bf16.mxu0 %v2515
    %2796 = vmatpush1.bf16.msra.mxu0 %v2514
    %2797 = vmatprep.subr.bf16.mxu0 %v2513
    %2798 = vmatpush1.bf16.msra.mxu0 %v2512
    %2799 = vmatprep.subr.bf16.mxu0 %v2543
    %2800 = vmatpush2.bf16.msra.mxu0 %v2542
    %2801 = vmatprep.subr.bf16.mxu0 %v2541
    %2802 = vmatpush2.bf16.msra.mxu0 %v2540
    %2803 = vmatprep.subr.bf16.mxu0 %v2539
    %2804 = vmatpush2.bf16.msra.mxu0 %v2538
    %2805 = vmatprep.subr.bf16.mxu0 %v2537
    %2806 = vmatpush2.bf16.msra.mxu0 %v2536
    %2807 = vmatprep.subr.bf16.mxu0 %v2535
    %2808 = vmatpush2.bf16.msra.mxu0 %v2534
    %2809 = vmatprep.subr.bf16.mxu0 %v2533
    %2810 = vmatpush2.bf16.msra.mxu0 %v2532
    %2811 = vmatprep.subr.bf16.mxu0 %v2531
    %2812 = vmatpush2.bf16.msra.mxu0 %v2530
    %2813 = vmatprep.subr.bf16.mxu0 %v2529
    %2814 = vmatpush2.bf16.msra.mxu0 %v2528
    %2815 = vmatprep.mubr.bf16.mxu0 %v2782
    %2816 = vmatmul.mubr.bf16.gmra.mxu0 %v2781
    %v2817 = vpop.f32.mrf.mxu0
    %v2818 = vadd.f32 0.0, %v2817
    %v2819 = vpop.f32.mrf.mxu0
    %v2820 = vadd.f32 0.0, %v2819
    %v2821 = vpop.f32.mrf.mxu0
    %v2822 = vadd.f32 0.0, %v2821
    %v2823 = vpop.f32.mrf.mxu0
    %v2824 = vadd.f32 0.0, %v2823
    %2825 = vdwg.mxu0
    %vm2826 = vcmp.lt.f32.partialorder %v2818, %v2757
    %vm2827 = vcmp.lt.f32.partialorder %v2820, %v2758
    %vm2828 = vcmp.lt.f32.partialorder %v2822, %v2759
    %vm2829 = vcmp.lt.f32.partialorder %v2824, %v2760
    %v2830 = vsel %vm2826, %v2818, %v2757
    %v2831 = vsel %vm2827, %v2820, %v2758
    %v2832 = vsel %vm2828, %v2822, %v2759
    %v2833 = vsel %vm2829, %v2824, %v2760
    %v2834 = vsel %vm2826, 3, %v2761
    %v2835 = vsel %vm2827, 3, %v2762
    %v2836 = vsel %vm2828, 3, %v2763
    %v2837 = vsel %vm2829, 3, %v2764
    %v2838 = vlaneseq
    %v2839 = vshrl.u32 %v2838, 7
    %v2840 = vsub.s32 4, %v2839
    %v2841 = vrot.slane %v2362, %v2840
    %v2842 = vlaneseq
    %v2843 = vshrl.u32 %v2842, 7
    %v2844 = vsub.s32 4, %v2843
    %v2845 = vrot.slane %v2363, %v2844
    %v2846 = vsub.f32 %v2350, %v2841
    %v2847 = vsub.f32 %v2352, %v2845
    %v2848 = vsub.f32 %v2354, %v2841
    %v2849 = vsub.f32 %v2356, %v2845
    %v2850 = vmul.f32 %v2846, %v2846
    %v2851 = vmul.f32 %v2847, %v2847
    %v2852 = vmul.f32 %v2848, %v2848
    %v2853 = vmul.f32 %v2849, %v2849
    %v2854 = vpack.c.bf16 %v2852, %v2850
    %v2855 = vpack.c.bf16 %v2853, %v2851
    %2856 = vmatprep.subr.bf16.mxu0 %v2527
    %2857 = vmatpush1.bf16.msra.mxu0 %v2526
    %2858 = vmatprep.subr.bf16.mxu0 %v2525
    %2859 = vmatpush1.bf16.msra.mxu0 %v2524
    %2860 = vmatprep.subr.bf16.mxu0 %v2523
    %2861 = vmatpush1.bf16.msra.mxu0 %v2522
    %2862 = vmatprep.subr.bf16.mxu0 %v2521
    %2863 = vmatpush1.bf16.msra.mxu0 %v2520
    %2864 = vmatprep.subr.bf16.mxu0 %v2519
    %2865 = vmatpush1.bf16.msra.mxu0 %v2518
    %2866 = vmatprep.subr.bf16.mxu0 %v2517
    %2867 = vmatpush1.bf16.msra.mxu0 %v2516
    %2868 = vmatprep.subr.bf16.mxu0 %v2515
    %2869 = vmatpush1.bf16.msra.mxu0 %v2514
    %2870 = vmatprep.subr.bf16.mxu0 %v2513
    %2871 = vmatpush1.bf16.msra.mxu0 %v2512
    %2872 = vmatprep.subr.bf16.mxu0 %v2543
    %2873 = vmatpush2.bf16.msra.mxu0 %v2542
    %2874 = vmatprep.subr.bf16.mxu0 %v2541
    %2875 = vmatpush2.bf16.msra.mxu0 %v2540
    %2876 = vmatprep.subr.bf16.mxu0 %v2539
    %2877 = vmatpush2.bf16.msra.mxu0 %v2538
    %2878 = vmatprep.subr.bf16.mxu0 %v2537
    %2879 = vmatpush2.bf16.msra.mxu0 %v2536
    %2880 = vmatprep.subr.bf16.mxu0 %v2535
    %2881 = vmatpush2.bf16.msra.mxu0 %v2534
    %2882 = vmatprep.subr.bf16.mxu0 %v2533
    %2883 = vmatpush2.bf16.msra.mxu0 %v2532
    %2884 = vmatprep.subr.bf16.mxu0 %v2531
    %2885 = vmatpush2.bf16.msra.mxu0 %v2530
    %2886 = vmatprep.subr.bf16.mxu0 %v2529
    %2887 = vmatpush2.bf16.msra.mxu0 %v2528
    %2888 = vmatprep.mubr.bf16.mxu0 %v2855
    %2889 = vmatmul.mubr.bf16.gmra.mxu0 %v2854
    %v2890 = vpop.f32.mrf.mxu0
    %v2891 = vadd.f32 0.0, %v2890
    %v2892 = vpop.f32.mrf.mxu0
    %v2893 = vadd.f32 0.0, %v2892
    %v2894 = vpop.f32.mrf.mxu0
    %v2895 = vadd.f32 0.0, %v2894
    %v2896 = vpop.f32.mrf.mxu0
    %v2897 = vadd.f32 0.0, %v2896
    %2898 = vdwg.mxu0
    %vm2899 = vcmp.lt.f32.partialorder %v2891, %v2830
    %vm2900 = vcmp.lt.f32.partialorder %v2893, %v2831
    %vm2901 = vcmp.lt.f32.partialorder %v2895, %v2832
    %vm2902 = vcmp.lt.f32.partialorder %v2897, %v2833
    %v2903 = vsel %vm2899, %v2891, %v2830
    %v2904 = vsel %vm2900, %v2893, %v2831
    %v2905 = vsel %vm2901, %v2895, %v2832
    %v2906 = vsel %vm2902, %v2897, %v2833
    %v2907 = vsel %vm2899, 4, %v2834
    %v2908 = vsel %vm2900, 4, %v2835
    %v2909 = vsel %vm2901, 4, %v2836
    %v2910 = vsel %vm2902, 4, %v2837
    %v2911 = vlaneseq
    %v2912 = vshrl.u32 %v2911, 7
    %v2913 = vsub.s32 5, %v2912
    %v2914 = vrot.slane %v2362, %v2913
    %v2915 = vlaneseq
    %v2916 = vshrl.u32 %v2915, 7
    %v2917 = vsub.s32 5, %v2916
    %v2918 = vrot.slane %v2363, %v2917
    %v2919 = vsub.f32 %v2350, %v2914
    %v2920 = vsub.f32 %v2352, %v2918
    %v2921 = vsub.f32 %v2354, %v2914
    %v2922 = vsub.f32 %v2356, %v2918
    %v2923 = vmul.f32 %v2919, %v2919
    %v2924 = vmul.f32 %v2920, %v2920
    %v2925 = vmul.f32 %v2921, %v2921
    %v2926 = vmul.f32 %v2922, %v2922
    %v2927 = vpack.c.bf16 %v2925, %v2923
    %v2928 = vpack.c.bf16 %v2926, %v2924
    %2929 = vmatprep.subr.bf16.mxu0 %v2527
    %2930 = vmatpush1.bf16.msra.mxu0 %v2526
    %2931 = vmatprep.subr.bf16.mxu0 %v2525
    %2932 = vmatpush1.bf16.msra.mxu0 %v2524
    %2933 = vmatprep.subr.bf16.mxu0 %v2523
    %2934 = vmatpush1.bf16.msra.mxu0 %v2522
    %2935 = vmatprep.subr.bf16.mxu0 %v2521
    %2936 = vmatpush1.bf16.msra.mxu0 %v2520
    %2937 = vmatprep.subr.bf16.mxu0 %v2519
    %2938 = vmatpush1.bf16.msra.mxu0 %v2518
    %2939 = vmatprep.subr.bf16.mxu0 %v2517
    %2940 = vmatpush1.bf16.msra.mxu0 %v2516
    %2941 = vmatprep.subr.bf16.mxu0 %v2515
    %2942 = vmatpush1.bf16.msra.mxu0 %v2514
    %2943 = vmatprep.subr.bf16.mxu0 %v2513
    %2944 = vmatpush1.bf16.msra.mxu0 %v2512
    %2945 = vmatprep.subr.bf16.mxu0 %v2543
    %2946 = vmatpush2.bf16.msra.mxu0 %v2542
    %2947 = vmatprep.subr.bf16.mxu0 %v2541
    %2948 = vmatpush2.bf16.msra.mxu0 %v2540
    %2949 = vmatprep.subr.bf16.mxu0 %v2539
    %2950 = vmatpush2.bf16.msra.mxu0 %v2538
    %2951 = vmatprep.subr.bf16.mxu0 %v2537
    %2952 = vmatpush2.bf16.msra.mxu0 %v2536
    %2953 = vmatprep.subr.bf16.mxu0 %v2535
    %2954 = vmatpush2.bf16.msra.mxu0 %v2534
    %2955 = vmatprep.subr.bf16.mxu0 %v2533
    %2956 = vmatpush2.bf16.msra.mxu0 %v2532
    %2957 = vmatprep.subr.bf16.mxu0 %v2531
    %2958 = vmatpush2.bf16.msra.mxu0 %v2530
    %2959 = vmatprep.subr.bf16.mxu0 %v2529
    %2960 = vmatpush2.bf16.msra.mxu0 %v2528
    %2961 = vmatprep.mubr.bf16.mxu0 %v2928
    %2962 = vmatmul.mubr.bf16.gmra.mxu0 %v2927
    %v2963 = vpop.f32.mrf.mxu0
    %v2964 = vadd.f32 0.0, %v2963
    %v2965 = vpop.f32.mrf.mxu0
    %v2966 = vadd.f32 0.0, %v2965
    %v2967 = vpop.f32.mrf.mxu0
    %v2968 = vadd.f32 0.0, %v2967
    %v2969 = vpop.f32.mrf.mxu0
    %v2970 = vadd.f32 0.0, %v2969
    %2971 = vdwg.mxu0
    %vm2972 = vcmp.lt.f32.partialorder %v2964, %v2903
    %vm2973 = vcmp.lt.f32.partialorder %v2966, %v2904
    %vm2974 = vcmp.lt.f32.partialorder %v2968, %v2905
    %vm2975 = vcmp.lt.f32.partialorder %v2970, %v2906
    %v2976 = vsel %vm2972, %v2964, %v2903
    %v2977 = vsel %vm2973, %v2966, %v2904
    %v2978 = vsel %vm2974, %v2968, %v2905
    %v2979 = vsel %vm2975, %v2970, %v2906
    %v2980 = vsel %vm2972, 5, %v2907
    %v2981 = vsel %vm2973, 5, %v2908
    %v2982 = vsel %vm2974, 5, %v2909
    %v2983 = vsel %vm2975, 5, %v2910
    %v2984 = vlaneseq
    %v2985 = vshrl.u32 %v2984, 7
    %v2986 = vsub.s32 6, %v2985
    %v2987 = vrot.slane %v2362, %v2986
    %v2988 = vlaneseq
    %v2989 = vshrl.u32 %v2988, 7
    %v2990 = vsub.s32 6, %v2989
    %v2991 = vrot.slane %v2363, %v2990
    %v2992 = vsub.f32 %v2350, %v2987
    %v2993 = vsub.f32 %v2352, %v2991
    %v2994 = vsub.f32 %v2354, %v2987
    %v2995 = vsub.f32 %v2356, %v2991
    %v2996 = vmul.f32 %v2992, %v2992
    %v2997 = vmul.f32 %v2993, %v2993
    %v2998 = vmul.f32 %v2994, %v2994
    %v2999 = vmul.f32 %v2995, %v2995
    %v3000 = vpack.c.bf16 %v2998, %v2996
    %v3001 = vpack.c.bf16 %v2999, %v2997
    %3002 = vmatprep.subr.bf16.mxu0 %v2527
    %3003 = vmatpush1.bf16.msra.mxu0 %v2526
    %3004 = vmatprep.subr.bf16.mxu0 %v2525
    %3005 = vmatpush1.bf16.msra.mxu0 %v2524
    %3006 = vmatprep.subr.bf16.mxu0 %v2523
    %3007 = vmatpush1.bf16.msra.mxu0 %v2522
    %3008 = vmatprep.subr.bf16.mxu0 %v2521
    %3009 = vmatpush1.bf16.msra.mxu0 %v2520
    %3010 = vmatprep.subr.bf16.mxu0 %v2519
    %3011 = vmatpush1.bf16.msra.mxu0 %v2518
    %3012 = vmatprep.subr.bf16.mxu0 %v2517
    %3013 = vmatpush1.bf16.msra.mxu0 %v2516
    %3014 = vmatprep.subr.bf16.mxu0 %v2515
    %3015 = vmatpush1.bf16.msra.mxu0 %v2514
    %3016 = vmatprep.subr.bf16.mxu0 %v2513
    %3017 = vmatpush1.bf16.msra.mxu0 %v2512
    %3018 = vmatprep.subr.bf16.mxu0 %v2543
    %3019 = vmatpush2.bf16.msra.mxu0 %v2542
    %3020 = vmatprep.subr.bf16.mxu0 %v2541
    %3021 = vmatpush2.bf16.msra.mxu0 %v2540
    %3022 = vmatprep.subr.bf16.mxu0 %v2539
    %3023 = vmatpush2.bf16.msra.mxu0 %v2538
    %3024 = vmatprep.subr.bf16.mxu0 %v2537
    %3025 = vmatpush2.bf16.msra.mxu0 %v2536
    %3026 = vmatprep.subr.bf16.mxu0 %v2535
    %3027 = vmatpush2.bf16.msra.mxu0 %v2534
    %3028 = vmatprep.subr.bf16.mxu0 %v2533
    %3029 = vmatpush2.bf16.msra.mxu0 %v2532
    %3030 = vmatprep.subr.bf16.mxu0 %v2531
    %3031 = vmatpush2.bf16.msra.mxu0 %v2530
    %3032 = vmatprep.subr.bf16.mxu0 %v2529
    %3033 = vmatpush2.bf16.msra.mxu0 %v2528
    %3034 = vmatprep.mubr.bf16.mxu0 %v3001
    %3035 = vmatmul.mubr.bf16.gmra.mxu0 %v3000
    %v3036 = vpop.f32.mrf.mxu0
    %v3037 = vadd.f32 0.0, %v3036
    %v3038 = vpop.f32.mrf.mxu0
    %v3039 = vadd.f32 0.0, %v3038
    %v3040 = vpop.f32.mrf.mxu0
    %v3041 = vadd.f32 0.0, %v3040
    %v3042 = vpop.f32.mrf.mxu0
    %v3043 = vadd.f32 0.0, %v3042
    %3044 = vdwg.mxu0
    %vm3045 = vcmp.lt.f32.partialorder %v3037, %v2976
    %vm3046 = vcmp.lt.f32.partialorder %v3039, %v2977
    %vm3047 = vcmp.lt.f32.partialorder %v3041, %v2978
    %vm3048 = vcmp.lt.f32.partialorder %v3043, %v2979
    %v3049 = vsel %vm3045, %v3037, %v2976
    %v3050 = vsel %vm3046, %v3039, %v2977
    %v3051 = vsel %vm3047, %v3041, %v2978
    %v3052 = vsel %vm3048, %v3043, %v2979
    %v3053 = vsel %vm3045, 6, %v2980
    %v3054 = vsel %vm3046, 6, %v2981
    %v3055 = vsel %vm3047, 6, %v2982
    %v3056 = vsel %vm3048, 6, %v2983
    %v3057 = vlaneseq
    %v3058 = vshrl.u32 %v3057, 7
    %v3059 = vsub.s32 7, %v3058
    %v3060 = vrot.slane %v2362, %v3059
    %v3061 = vlaneseq
    %v3062 = vshrl.u32 %v3061, 7
    %v3063 = vsub.s32 7, %v3062
    %v3064 = vrot.slane %v2363, %v3063
    %v3065 = vsub.f32 %v2350, %v3060
    %v3066 = vsub.f32 %v2352, %v3064
    %v3067 = vsub.f32 %v2354, %v3060
    %v3068 = vsub.f32 %v2356, %v3064
    %v3069 = vmul.f32 %v3065, %v3065
    %v3070 = vmul.f32 %v3066, %v3066
    %v3071 = vmul.f32 %v3067, %v3067
    %v3072 = vmul.f32 %v3068, %v3068
    %v3073 = vpack.c.bf16 %v3071, %v3069
    %v3074 = vpack.c.bf16 %v3072, %v3070
    %3075 = vmatprep.subr.bf16.mxu0 %v2527
    %3076 = vmatpush1.bf16.msra.mxu0 %v2526
    %3077 = vmatprep.subr.bf16.mxu0 %v2525
    %3078 = vmatpush1.bf16.msra.mxu0 %v2524
    %3079 = vmatprep.subr.bf16.mxu0 %v2523
    %3080 = vmatpush1.bf16.msra.mxu0 %v2522
    %3081 = vmatprep.subr.bf16.mxu0 %v2521
    %3082 = vmatpush1.bf16.msra.mxu0 %v2520
    %3083 = vmatprep.subr.bf16.mxu0 %v2519
    %3084 = vmatpush1.bf16.msra.mxu0 %v2518
    %3085 = vmatprep.subr.bf16.mxu0 %v2517
    %3086 = vmatpush1.bf16.msra.mxu0 %v2516
    %3087 = vmatprep.subr.bf16.mxu0 %v2515
    %3088 = vmatpush1.bf16.msra.mxu0 %v2514
    %3089 = vmatprep.subr.bf16.mxu0 %v2513
    %3090 = vmatpush1.bf16.msra.mxu0 %v2512
    %3091 = vmatprep.subr.bf16.mxu0 %v2543
    %3092 = vmatpush2.bf16.msra.mxu0 %v2542
    %3093 = vmatprep.subr.bf16.mxu0 %v2541
    %3094 = vmatpush2.bf16.msra.mxu0 %v2540
    %3095 = vmatprep.subr.bf16.mxu0 %v2539
    %3096 = vmatpush2.bf16.msra.mxu0 %v2538
    %3097 = vmatprep.subr.bf16.mxu0 %v2537
    %3098 = vmatpush2.bf16.msra.mxu0 %v2536
    %3099 = vmatprep.subr.bf16.mxu0 %v2535
    %3100 = vmatpush2.bf16.msra.mxu0 %v2534
    %3101 = vmatprep.subr.bf16.mxu0 %v2533
    %3102 = vmatpush2.bf16.msra.mxu0 %v2532
    %3103 = vmatprep.subr.bf16.mxu0 %v2531
    %3104 = vmatpush2.bf16.msra.mxu0 %v2530
    %3105 = vmatprep.subr.bf16.mxu0 %v2529
    %3106 = vmatpush2.bf16.msra.mxu0 %v2528
    %3107 = vmatprep.mubr.bf16.mxu0 %v3074
    %3108 = vmatmul.mubr.bf16.gmra.mxu0 %v3073
    %v3109 = vpop.f32.mrf.mxu0
    %v3110 = vadd.f32 0.0, %v3109
    %v3111 = vpop.f32.mrf.mxu0
    %v3112 = vadd.f32 0.0, %v3111
    %v3113 = vpop.f32.mrf.mxu0
    %v3114 = vadd.f32 0.0, %v3113
    %v3115 = vpop.f32.mrf.mxu0
    %v3116 = vadd.f32 0.0, %v3115
    %3117 = vdwg.mxu0
    %vm3118 = vcmp.lt.f32.partialorder %v3110, %v3049
    %vm3119 = vcmp.lt.f32.partialorder %v3112, %v3050
    %vm3120 = vcmp.lt.f32.partialorder %v3114, %v3051
    %vm3121 = vcmp.lt.f32.partialorder %v3116, %v3052
    %v3122 = vsel %vm3118, %v3110, %v3049
    %v3123 = vsel %vm3119, %v3112, %v3050
    %v3124 = vsel %vm3120, %v3114, %v3051
    %v3125 = vsel %vm3121, %v3116, %v3052
    %v3126 = vsel %vm3118, 7, %v3053
    %v3127 = vsel %vm3119, 7, %v3054
    %v3128 = vsel %vm3120, 7, %v3055
    %v3129 = vsel %vm3121, 7, %v3056
    %v3130 = vlaneseq
    %v3131 = vshrl.u32 %v3130, 7
    %v3132 = vsub.s32 0, %v3131
    %v3133 = vrot.slane %v2364, %v3132
    %v3134 = vlaneseq
    %v3135 = vshrl.u32 %v3134, 7
    %v3136 = vsub.s32 0, %v3135
    %v3137 = vrot.slane %v2365, %v3136
    %v3138 = vsub.f32 %v2350, %v3133
    %v3139 = vsub.f32 %v2352, %v3137
    %v3140 = vsub.f32 %v2354, %v3133
    %v3141 = vsub.f32 %v2356, %v3137
    %v3142 = vmul.f32 %v3138, %v3138
    %v3143 = vmul.f32 %v3139, %v3139
    %v3144 = vmul.f32 %v3140, %v3140
    %v3145 = vmul.f32 %v3141, %v3141
    %v3146 = vpack.c.bf16 %v3144, %v3142
    %v3147 = vpack.c.bf16 %v3145, %v3143
    %3148 = vmatprep.subr.bf16.mxu0 %v2527
    %3149 = vmatpush1.bf16.msra.mxu0 %v2526
    %3150 = vmatprep.subr.bf16.mxu0 %v2525
    %3151 = vmatpush1.bf16.msra.mxu0 %v2524
    %3152 = vmatprep.subr.bf16.mxu0 %v2523
    %3153 = vmatpush1.bf16.msra.mxu0 %v2522
    %3154 = vmatprep.subr.bf16.mxu0 %v2521
    %3155 = vmatpush1.bf16.msra.mxu0 %v2520
    %3156 = vmatprep.subr.bf16.mxu0 %v2519
    %3157 = vmatpush1.bf16.msra.mxu0 %v2518
    %3158 = vmatprep.subr.bf16.mxu0 %v2517
    %3159 = vmatpush1.bf16.msra.mxu0 %v2516
    %3160 = vmatprep.subr.bf16.mxu0 %v2515
    %3161 = vmatpush1.bf16.msra.mxu0 %v2514
    %3162 = vmatprep.subr.bf16.mxu0 %v2513
    %3163 = vmatpush1.bf16.msra.mxu0 %v2512
    %3164 = vmatprep.subr.bf16.mxu0 %v2543
    %3165 = vmatpush2.bf16.msra.mxu0 %v2542
    %3166 = vmatprep.subr.bf16.mxu0 %v2541
    %3167 = vmatpush2.bf16.msra.mxu0 %v2540
    %3168 = vmatprep.subr.bf16.mxu0 %v2539
    %3169 = vmatpush2.bf16.msra.mxu0 %v2538
    %3170 = vmatprep.subr.bf16.mxu0 %v2537
    %3171 = vmatpush2.bf16.msra.mxu0 %v2536
    %3172 = vmatprep.subr.bf16.mxu0 %v2535
    %3173 = vmatpush2.bf16.msra.mxu0 %v2534
    %3174 = vmatprep.subr.bf16.mxu0 %v2533
    %3175 = vmatpush2.bf16.msra.mxu0 %v2532
    %3176 = vmatprep.subr.bf16.mxu0 %v2531
    %3177 = vmatpush2.bf16.msra.mxu0 %v2530
    %3178 = vmatprep.subr.bf16.mxu0 %v2529
    %3179 = vmatpush2.bf16.msra.mxu0 %v2528
    %3180 = vmatprep.mubr.bf16.mxu0 %v3147
    %3181 = vmatmul.mubr.bf16.gmra.mxu0 %v3146
    %v3182 = vpop.f32.mrf.mxu0
    %v3183 = vadd.f32 0.0, %v3182
    %v3184 = vpop.f32.mrf.mxu0
    %v3185 = vadd.f32 0.0, %v3184
    %v3186 = vpop.f32.mrf.mxu0
    %v3187 = vadd.f32 0.0, %v3186
    %v3188 = vpop.f32.mrf.mxu0
    %v3189 = vadd.f32 0.0, %v3188
    %3190 = vdwg.mxu0
    %vm3191 = vcmp.lt.f32.partialorder %v3183, %v3122
    %vm3192 = vcmp.lt.f32.partialorder %v3185, %v3123
    %vm3193 = vcmp.lt.f32.partialorder %v3187, %v3124
    %vm3194 = vcmp.lt.f32.partialorder %v3189, %v3125
    %v3195 = vsel %vm3191, %v3183, %v3122
    %v3196 = vsel %vm3192, %v3185, %v3123
    %v3197 = vsel %vm3193, %v3187, %v3124
    %v3198 = vsel %vm3194, %v3189, %v3125
    %v3199 = vsel %vm3191, 8, %v3126
    %v3200 = vsel %vm3192, 8, %v3127
    %v3201 = vsel %vm3193, 8, %v3128
    %v3202 = vsel %vm3194, 8, %v3129
    %v3203 = vlaneseq
    %v3204 = vshrl.u32 %v3203, 7
    %v3205 = vsub.s32 1, %v3204
    %v3206 = vrot.slane %v2364, %v3205
    %v3207 = vlaneseq
    %v3208 = vshrl.u32 %v3207, 7
    %v3209 = vsub.s32 1, %v3208
    %v3210 = vrot.slane %v2365, %v3209
    %v3211 = vsub.f32 %v2350, %v3206
    %v3212 = vsub.f32 %v2352, %v3210
    %v3213 = vsub.f32 %v2354, %v3206
    %v3214 = vsub.f32 %v2356, %v3210
    %v3215 = vmul.f32 %v3211, %v3211
    %v3216 = vmul.f32 %v3212, %v3212
    %v3217 = vmul.f32 %v3213, %v3213
    %v3218 = vmul.f32 %v3214, %v3214
    %v3219 = vpack.c.bf16 %v3217, %v3215
    %v3220 = vpack.c.bf16 %v3218, %v3216
    %3221 = vmatprep.subr.bf16.mxu0 %v2527
    %3222 = vmatpush1.bf16.msra.mxu0 %v2526
    %3223 = vmatprep.subr.bf16.mxu0 %v2525
    %3224 = vmatpush1.bf16.msra.mxu0 %v2524
    %3225 = vmatprep.subr.bf16.mxu0 %v2523
    %3226 = vmatpush1.bf16.msra.mxu0 %v2522
    %3227 = vmatprep.subr.bf16.mxu0 %v2521
    %3228 = vmatpush1.bf16.msra.mxu0 %v2520
    %3229 = vmatprep.subr.bf16.mxu0 %v2519
    %3230 = vmatpush1.bf16.msra.mxu0 %v2518
    %3231 = vmatprep.subr.bf16.mxu0 %v2517
    %3232 = vmatpush1.bf16.msra.mxu0 %v2516
    %3233 = vmatprep.subr.bf16.mxu0 %v2515
    %3234 = vmatpush1.bf16.msra.mxu0 %v2514
    %3235 = vmatprep.subr.bf16.mxu0 %v2513
    %3236 = vmatpush1.bf16.msra.mxu0 %v2512
    %3237 = vmatprep.subr.bf16.mxu0 %v2543
    %3238 = vmatpush2.bf16.msra.mxu0 %v2542
    %3239 = vmatprep.subr.bf16.mxu0 %v2541
    %3240 = vmatpush2.bf16.msra.mxu0 %v2540
    %3241 = vmatprep.subr.bf16.mxu0 %v2539
    %3242 = vmatpush2.bf16.msra.mxu0 %v2538
    %3243 = vmatprep.subr.bf16.mxu0 %v2537
    %3244 = vmatpush2.bf16.msra.mxu0 %v2536
    %3245 = vmatprep.subr.bf16.mxu0 %v2535
    %3246 = vmatpush2.bf16.msra.mxu0 %v2534
    %3247 = vmatprep.subr.bf16.mxu0 %v2533
    %3248 = vmatpush2.bf16.msra.mxu0 %v2532
    %3249 = vmatprep.subr.bf16.mxu0 %v2531
    %3250 = vmatpush2.bf16.msra.mxu0 %v2530
    %3251 = vmatprep.subr.bf16.mxu0 %v2529
    %3252 = vmatpush2.bf16.msra.mxu0 %v2528
    %3253 = vmatprep.mubr.bf16.mxu0 %v3220
    %3254 = vmatmul.mubr.bf16.gmra.mxu0 %v3219
    %v3255 = vpop.f32.mrf.mxu0
    %v3256 = vadd.f32 0.0, %v3255
    %v3257 = vpop.f32.mrf.mxu0
    %v3258 = vadd.f32 0.0, %v3257
    %v3259 = vpop.f32.mrf.mxu0
    %v3260 = vadd.f32 0.0, %v3259
    %v3261 = vpop.f32.mrf.mxu0
    %v3262 = vadd.f32 0.0, %v3261
    %3263 = vdwg.mxu0
    %vm3264 = vcmp.lt.f32.partialorder %v3256, %v3195
    %vm3265 = vcmp.lt.f32.partialorder %v3258, %v3196
    %vm3266 = vcmp.lt.f32.partialorder %v3260, %v3197
    %vm3267 = vcmp.lt.f32.partialorder %v3262, %v3198
    %v3268 = vsel %vm3264, 9, %v3199
    %v3269 = vsel %vm3265, 9, %v3200
    %v3270 = vsel %vm3266, 9, %v3201
    %v3271 = vsel %vm3267, 9, %v3202
    %vm3272 = vcmp.eq.s32.totalorder %v3268, 1
    %vm3273 = vcmp.eq.s32.totalorder %v3269, 1
    %vm3274 = vcmp.eq.s32.totalorder %v3270, 1
    %vm3275 = vcmp.eq.s32.totalorder %v3271, 1
    %v3276 = vsel %vm3272, %v2622, %v2401
    %v3277 = vsel %vm3273, %v2626, %v2405
    %v3278 = vsel %vm3274, %v2622, %v2401
    %v3279 = vsel %vm3275, %v2626, %v2405
    %vm3280 = vcmp.eq.s32.totalorder %v3268, 2
    %vm3281 = vcmp.eq.s32.totalorder %v3269, 2
    %vm3282 = vcmp.eq.s32.totalorder %v3270, 2
    %vm3283 = vcmp.eq.s32.totalorder %v3271, 2
    %v3284 = vsel %vm3280, %v2695, %v3276
    %v3285 = vsel %vm3281, %v2699, %v3277
    %v3286 = vsel %vm3282, %v2695, %v3278
    %v3287 = vsel %vm3283, %v2699, %v3279
    %vm3288 = vcmp.eq.s32.totalorder %v3268, 3
    %vm3289 = vcmp.eq.s32.totalorder %v3269, 3
    %vm3290 = vcmp.eq.s32.totalorder %v3270, 3
    %vm3291 = vcmp.eq.s32.totalorder %v3271, 3
    %v3292 = vsel %vm3288, %v2768, %v3284
    %v3293 = vsel %vm3289, %v2772, %v3285
    %v3294 = vsel %vm3290, %v2768, %v3286
    %v3295 = vsel %vm3291, %v2772, %v3287
    %vm3296 = vcmp.eq.s32.totalorder %v3268, 4
    %vm3297 = vcmp.eq.s32.totalorder %v3269, 4
    %vm3298 = vcmp.eq.s32.totalorder %v3270, 4
    %vm3299 = vcmp.eq.s32.totalorder %v3271, 4
    %v3300 = vsel %vm3296, %v2841, %v3292
    %v3301 = vsel %vm3297, %v2845, %v3293
    %v3302 = vsel %vm3298, %v2841, %v3294
    %v3303 = vsel %vm3299, %v2845, %v3295
    %vm3304 = vcmp.eq.s32.totalorder %v3268, 5
    %vm3305 = vcmp.eq.s32.totalorder %v3269, 5
    %vm3306 = vcmp.eq.s32.totalorder %v3270, 5
    %vm3307 = vcmp.eq.s32.totalorder %v3271, 5
    %v3308 = vsel %vm3304, %v2914, %v3300
    %v3309 = vsel %vm3305, %v2918, %v3301
    %v3310 = vsel %vm3306, %v2914, %v3302
    %v3311 = vsel %vm3307, %v2918, %v3303
    %vm3312 = vcmp.eq.s32.totalorder %v3268, 6
    %vm3313 = vcmp.eq.s32.totalorder %v3269, 6
    %vm3314 = vcmp.eq.s32.totalorder %v3270, 6
    %vm3315 = vcmp.eq.s32.totalorder %v3271, 6
    %v3316 = vsel %vm3312, %v2987, %v3308
    %v3317 = vsel %vm3313, %v2991, %v3309
    %v3318 = vsel %vm3314, %v2987, %v3310
    %v3319 = vsel %vm3315, %v2991, %v3311
    %vm3320 = vcmp.eq.s32.totalorder %v3268, 7
    %vm3321 = vcmp.eq.s32.totalorder %v3269, 7
    %vm3322 = vcmp.eq.s32.totalorder %v3270, 7
    %vm3323 = vcmp.eq.s32.totalorder %v3271, 7
    %v3324 = vsel %vm3320, %v3060, %v3316
    %v3325 = vsel %vm3321, %v3064, %v3317
    %v3326 = vsel %vm3322, %v3060, %v3318
    %v3327 = vsel %vm3323, %v3064, %v3319
    %vm3328 = vcmp.eq.s32.totalorder %v3268, 8
    %vm3329 = vcmp.eq.s32.totalorder %v3269, 8
    %vm3330 = vcmp.eq.s32.totalorder %v3270, 8
    %vm3331 = vcmp.eq.s32.totalorder %v3271, 8
    %v3332 = vsel %vm3328, %v3133, %v3324
    %v3333 = vsel %vm3329, %v3137, %v3325
    %v3334 = vsel %vm3330, %v3133, %v3326
    %v3335 = vsel %vm3331, %v3137, %v3327
    %vm3336 = vcmp.eq.s32.totalorder %v3268, 9
    %vm3337 = vcmp.eq.s32.totalorder %v3269, 9
    %vm3338 = vcmp.eq.s32.totalorder %v3270, 9
    %vm3339 = vcmp.eq.s32.totalorder %v3271, 9
    %v3340 = vsel %vm3336, %v3206, %v3332
    %v3341 = vsel %vm3337, %v3210, %v3333
    %v3342 = vsel %vm3338, %v3206, %v3334
    %v3343 = vsel %vm3339, %v3210, %v3335
    %3344 = vst [vmem:[%s13] sm:$0xff] %v3340
    %3345 = vst [vmem:[%s13 + $0x8] sm:$0xff] %v3341
    %3346 = vst [vmem:[%s13 + $0x10] sm:$0xff] %v3342
    %3347 = vst [vmem:[%s13 + $0x18] sm:$0xff] %v3343
    %v3348 = vpack.c.bf16 %v3342, %v3340
    %v3349 = vpack.c.bf16 %v3343, %v3341
    %v3350 = vld [vmem:[#allocation7] sm:$0xff]
    %v3351 = vld [vmem:[#allocation7 + $0x8] sm:$0xff]
    %v3352 = vld [vmem:[#allocation7 + $0x10] sm:$0xff]
    %v3353 = vld [vmem:[#allocation7 + $0x18] sm:$0xff]
    %v3354 = vld [vmem:[#allocation7 + $0x20] sm:$0xff]
    %v3355 = vld [vmem:[#allocation7 + $0x28] sm:$0xff]
    %v3356 = vld [vmem:[#allocation7 + $0x30] sm:$0xff]
    %v3357 = vld [vmem:[#allocation7 + $0x38] sm:$0xff]
    %v3358 = vld [vmem:[#allocation7 + $0x40] sm:$0xff]
    %v3359 = vld [vmem:[#allocation7 + $0x48] sm:$0xff]
    %v3360 = vld [vmem:[#allocation7 + $0x50] sm:$0xff]
    %v3361 = vld [vmem:[#allocation7 + $0x58] sm:$0xff]
    %v3362 = vld [vmem:[#allocation7 + $0x60] sm:$0xff]
    %v3363 = vld [vmem:[#allocation7 + $0x68] sm:$0xff]
    %v3364 = vld [vmem:[#allocation7 + $0x70] sm:$0xff]
    %v3365 = vld [vmem:[#allocation7 + $0x78] sm:$0xff]
    %v3366 = vld [vmem:[#allocation7 + $0x80] sm:$0xff]
    %v3367 = vld [vmem:[#allocation7 + $0x88] sm:$0xff]
    %v3368 = vld [vmem:[#allocation7 + $0x90] sm:$0xff]
    %v3369 = vld [vmem:[#allocation7 + $0x98] sm:$0xff]
    %v3370 = vld [vmem:[#allocation7 + $0xa0] sm:$0xff]
    %v3371 = vld [vmem:[#allocation7 + $0xa8] sm:$0xff]
    %v3372 = vld [vmem:[#allocation7 + $0xb0] sm:$0xff]
    %v3373 = vld [vmem:[#allocation7 + $0xb8] sm:$0xff]
    %v3374 = vld [vmem:[#allocation7 + $0xc0] sm:$0xff]
    %v3375 = vld [vmem:[#allocation7 + $0xc8] sm:$0xff]
    %v3376 = vld [vmem:[#allocation7 + $0xd0] sm:$0xff]
    %v3377 = vld [vmem:[#allocation7 + $0xd8] sm:$0xff]
    %v3378 = vld [vmem:[#allocation7 + $0xe0] sm:$0xff]
    %v3379 = vld [vmem:[#allocation7 + $0xe8] sm:$0xff]
    %v3380 = vld [vmem:[#allocation7 + $0xf0] sm:$0xff]
    %v3381 = vld [vmem:[#allocation7 + $0xf8] sm:$0xff]
    %v3382 = vld [vmem:[#allocation7 + $0x100] sm:$0xff]
    %v3383 = vld [vmem:[#allocation7 + $0x108] sm:$0xff]
    %v3384 = vld [vmem:[#allocation7 + $0x110] sm:$0xff]
    %v3385 = vld [vmem:[#allocation7 + $0x118] sm:$0xff]
    %v3386 = vld [vmem:[#allocation7 + $0x120] sm:$0xff]
    %v3387 = vld [vmem:[#allocation7 + $0x128] sm:$0xff]
    %v3388 = vld [vmem:[#allocation7 + $0x130] sm:$0xff]
    %v3389 = vld [vmem:[#allocation7 + $0x138] sm:$0xff]
    %v3390 = vld [vmem:[#allocation7 + $0x140] sm:$0xff]
    %v3391 = vld [vmem:[#allocation7 + $0x148] sm:$0xff]
    %v3392 = vld [vmem:[#allocation7 + $0x150] sm:$0xff]
    %v3393 = vld [vmem:[#allocation7 + $0x158] sm:$0xff]
    %v3394 = vld [vmem:[#allocation7 + $0x160] sm:$0xff]
    %v3395 = vld [vmem:[#allocation7 + $0x168] sm:$0xff]
    %v3396 = vld [vmem:[#allocation7 + $0x170] sm:$0xff]
    %v3397 = vld [vmem:[#allocation7 + $0x178] sm:$0xff]
    %v3398 = vld [vmem:[#allocation7 + $0x180] sm:$0xff]
    %v3399 = vld [vmem:[#allocation7 + $0x188] sm:$0xff]
    %v3400 = vld [vmem:[#allocation7 + $0x190] sm:$0xff]
    %v3401 = vld [vmem:[#allocation7 + $0x198] sm:$0xff]
    %v3402 = vld [vmem:[#allocation7 + $0x1a0] sm:$0xff]
    %v3403 = vld [vmem:[#allocation7 + $0x1a8] sm:$0xff]
    %v3404 = vld [vmem:[#allocation7 + $0x1b0] sm:$0xff]
    %v3405 = vld [vmem:[#allocation7 + $0x1b8] sm:$0xff]
    %v3406 = vld [vmem:[#allocation7 + $0x1c0] sm:$0xff]
    %v3407 = vld [vmem:[#allocation7 + $0x1c8] sm:$0xff]
    %v3408 = vld [vmem:[#allocation7 + $0x1d0] sm:$0xff]
    %v3409 = vld [vmem:[#allocation7 + $0x1d8] sm:$0xff]
    %v3410 = vld [vmem:[#allocation7 + $0x1e0] sm:$0xff]
    %v3411 = vld [vmem:[#allocation7 + $0x1e8] sm:$0xff]
    %v3412 = vld [vmem:[#allocation7 + $0x1f0] sm:$0xff]
    %v3413 = vld [vmem:[#allocation7 + $0x1f8] sm:$0xff]
    %v3414 = vld [vmem:[%s8] sm:$0xf]
    %v3416 = vlaneseq
    %v3417 = vshrl.u32 %v3416, 7
    %v3418 = vsub.s32 0, %v3417
    %v3419 = vrot.slane %v3414, %v3418
    %v3420 = vlaneseq
    %v3421 = vshrl.u32 %v3420, 7
    %v3422 = vsub.s32 1, %v3421
    %v3423 = vrot.slane %v3414, %v3422
    %v3424 = vlaneseq
    %v3425 = vshrl.u32 %v3424, 7
    %v3426 = vsub.s32 2, %v3425
    %v3427 = vrot.slane %v3414, %v3426
    %v3428 = vlaneseq
    %v3429 = vshrl.u32 %v3428, 7
    %v3430 = vsub.s32 3, %v3429
    %v3431 = vrot.slane %v3414, %v3430
    %v3500 = vunpack.c.l.b16 %v3350
    %v3501 = vunpack.c.h.b16 %v3350
    %v3502 = vunpack.c.l.b16 %v3351
    %v3503 = vunpack.c.h.b16 %v3351
    %v3504 = vunpack.c.l.b16 %v3352
    %v3505 = vunpack.c.h.b16 %v3352
    %v3506 = vunpack.c.l.b16 %v3353
    %v3507 = vunpack.c.h.b16 %v3353
    %v3508 = vunpack.c.l.b16 %v3354
    %v3509 = vunpack.c.h.b16 %v3354
    %v3510 = vunpack.c.l.b16 %v3355
    %v3511 = vunpack.c.h.b16 %v3355
    %v3512 = vunpack.c.l.b16 %v3356
    %v3513 = vunpack.c.h.b16 %v3356
    %v3514 = vunpack.c.l.b16 %v3357
    %v3515 = vunpack.c.h.b16 %v3357
    %v3516 = vunpack.c.l.b16 %v3358
    %v3517 = vunpack.c.h.b16 %v3358
    %v3518 = vunpack.c.l.b16 %v3359
    %v3519 = vunpack.c.h.b16 %v3359
    %v3520 = vunpack.c.l.b16 %v3360
    %v3521 = vunpack.c.h.b16 %v3360
    %v3522 = vunpack.c.l.b16 %v3361
    %v3523 = vunpack.c.h.b16 %v3361
    %v3524 = vunpack.c.l.b16 %v3362
    %v3525 = vunpack.c.h.b16 %v3362
    %v3526 = vunpack.c.l.b16 %v3363
    %v3527 = vunpack.c.h.b16 %v3363
    %v3528 = vunpack.c.l.b16 %v3364
    %v3529 = vunpack.c.h.b16 %v3364
    %v3530 = vunpack.c.l.b16 %v3365
    %v3531 = vunpack.c.h.b16 %v3365
    %v3532 = vunpack.c.l.b16 %v3366
    %v3533 = vunpack.c.h.b16 %v3366
    %v3534 = vunpack.c.l.b16 %v3367
    %v3535 = vunpack.c.h.b16 %v3367
    %v3536 = vunpack.c.l.b16 %v3368
    %v3537 = vunpack.c.h.b16 %v3368
    %v3538 = vunpack.c.l.b16 %v3369
    %v3539 = vunpack.c.h.b16 %v3369
    %v3540 = vunpack.c.l.b16 %v3370
    %v3541 = vunpack.c.h.b16 %v3370
    %v3542 = vunpack.c.l.b16 %v3371
    %v3543 = vunpack.c.h.b16 %v3371
    %v3544 = vunpack.c.l.b16 %v3372
    %v3545 = vunpack.c.h.b16 %v3372
    %v3546 = vunpack.c.l.b16 %v3373
    %v3547 = vunpack.c.h.b16 %v3373
    %v3548 = vunpack.c.l.b16 %v3374
    %v3549 = vunpack.c.h.b16 %v3374
    %v3550 = vunpack.c.l.b16 %v3375
    %v3551 = vunpack.c.h.b16 %v3375
    %v3552 = vunpack.c.l.b16 %v3376
    %v3553 = vunpack.c.h.b16 %v3376
    %v3554 = vunpack.c.l.b16 %v3377
    %v3555 = vunpack.c.h.b16 %v3377
    %v3556 = vunpack.c.l.b16 %v3378
    %v3557 = vunpack.c.h.b16 %v3378
    %v3558 = vunpack.c.l.b16 %v3379
    %v3559 = vunpack.c.h.b16 %v3379
    %v3560 = vunpack.c.l.b16 %v3380
    %v3561 = vunpack.c.h.b16 %v3380
    %v3562 = vunpack.c.l.b16 %v3381
    %v3563 = vunpack.c.h.b16 %v3381
    %v3564 = vunpack.c.l.b16 %v3382
    %v3565 = vunpack.c.h.b16 %v3382
    %v3566 = vunpack.c.l.b16 %v3383
    %v3567 = vunpack.c.h.b16 %v3383
    %v3568 = vunpack.c.l.b16 %v3384
    %v3569 = vunpack.c.h.b16 %v3384
    %v3570 = vunpack.c.l.b16 %v3385
    %v3571 = vunpack.c.h.b16 %v3385
    %v3572 = vunpack.c.l.b16 %v3386
    %v3573 = vunpack.c.h.b16 %v3386
    %v3574 = vunpack.c.l.b16 %v3387
    %v3575 = vunpack.c.h.b16 %v3387
    %v3576 = vunpack.c.l.b16 %v3388
    %v3577 = vunpack.c.h.b16 %v3388
    %v3578 = vunpack.c.l.b16 %v3389
    %v3579 = vunpack.c.h.b16 %v3389
    %v3580 = vunpack.c.l.b16 %v3390
    %v3581 = vunpack.c.h.b16 %v3390
    %v3582 = vunpack.c.l.b16 %v3391
    %v3583 = vunpack.c.h.b16 %v3391
    %v3584 = vunpack.c.l.b16 %v3392
    %v3585 = vunpack.c.h.b16 %v3392
    %v3586 = vunpack.c.l.b16 %v3393
    %v3587 = vunpack.c.h.b16 %v3393
    %v3588 = vunpack.c.l.b16 %v3394
    %v3589 = vunpack.c.h.b16 %v3394
    %v3590 = vunpack.c.l.b16 %v3395
    %v3591 = vunpack.c.h.b16 %v3395
    %v3592 = vunpack.c.l.b16 %v3396
    %v3593 = vunpack.c.h.b16 %v3396
    %v3594 = vunpack.c.l.b16 %v3397
    %v3595 = vunpack.c.h.b16 %v3397
    %v3596 = vunpack.c.l.b16 %v3398
    %v3597 = vunpack.c.h.b16 %v3398
    %v3598 = vunpack.c.l.b16 %v3399
    %v3599 = vunpack.c.h.b16 %v3399
    %v3600 = vunpack.c.l.b16 %v3400
    %v3601 = vunpack.c.h.b16 %v3400
    %v3602 = vunpack.c.l.b16 %v3401
    %v3603 = vunpack.c.h.b16 %v3401
    %v3604 = vunpack.c.l.b16 %v3402
    %v3605 = vunpack.c.h.b16 %v3402
    %v3606 = vunpack.c.l.b16 %v3403
    %v3607 = vunpack.c.h.b16 %v3403
    %v3608 = vunpack.c.l.b16 %v3404
    %v3609 = vunpack.c.h.b16 %v3404
    %v3610 = vunpack.c.l.b16 %v3405
    %v3611 = vunpack.c.h.b16 %v3405
    %v3612 = vunpack.c.l.b16 %v3406
    %v3613 = vunpack.c.h.b16 %v3406
    %v3614 = vunpack.c.l.b16 %v3407
    %v3615 = vunpack.c.h.b16 %v3407
    %v3616 = vunpack.c.l.b16 %v3408
    %v3617 = vunpack.c.h.b16 %v3408
    %v3618 = vunpack.c.l.b16 %v3409
    %v3619 = vunpack.c.h.b16 %v3409
    %v3620 = vunpack.c.l.b16 %v3410
    %v3621 = vunpack.c.h.b16 %v3410
    %v3622 = vunpack.c.l.b16 %v3411
    %v3623 = vunpack.c.h.b16 %v3411
    %v3624 = vunpack.c.l.b16 %v3412
    %v3625 = vunpack.c.h.b16 %v3412
    %v3626 = vunpack.c.l.b16 %v3413
    %v3627 = vunpack.c.h.b16 %v3413
    %v3628 = vpack.c.b16 %v3504, %v3500
    %v3629 = vpack.c.b16 %v3505, %v3501
    %v3630 = vpack.c.b16 %v3506, %v3502
    %v3631 = vpack.c.b16 %v3507, %v3503
    %v3632 = vpack.c.b16 %v3512, %v3508
    %v3633 = vpack.c.b16 %v3513, %v3509
    %v3634 = vpack.c.b16 %v3514, %v3510
    %v3635 = vpack.c.b16 %v3515, %v3511
    %v3636 = vpack.c.b16 %v3520, %v3516
    %v3637 = vpack.c.b16 %v3521, %v3517
    %v3638 = vpack.c.b16 %v3522, %v3518
    %v3639 = vpack.c.b16 %v3523, %v3519
    %v3640 = vpack.c.b16 %v3528, %v3524
    %v3641 = vpack.c.b16 %v3529, %v3525
    %v3642 = vpack.c.b16 %v3530, %v3526
    %v3643 = vpack.c.b16 %v3531, %v3527
    %v3644 = vpack.c.b16 %v3536, %v3532
    %v3645 = vpack.c.b16 %v3537, %v3533
    %v3646 = vpack.c.b16 %v3538, %v3534
    %v3647 = vpack.c.b16 %v3539, %v3535
    %v3648 = vpack.c.b16 %v3544, %v3540
    %v3649 = vpack.c.b16 %v3545, %v3541
    %v3650 = vpack.c.b16 %v3546, %v3542
    %v3651 = vpack.c.b16 %v3547, %v3543
    %v3652 = vpack.c.b16 %v3552, %v3548
    %v3653 = vpack.c.b16 %v3553, %v3549
    %v3654 = vpack.c.b16 %v3554, %v3550
    %v3655 = vpack.c.b16 %v3555, %v3551
    %v3656 = vpack.c.b16 %v3560, %v3556
    %v3657 = vpack.c.b16 %v3561, %v3557
    %v3658 = vpack.c.b16 %v3562, %v3558
    %v3659 = vpack.c.b16 %v3563, %v3559
    %v3660 = vpack.c.b16 %v3568, %v3564
    %v3661 = vpack.c.b16 %v3569, %v3565
    %v3662 = vpack.c.b16 %v3570, %v3566
    %v3663 = vpack.c.b16 %v3571, %v3567
    %v3664 = vpack.c.b16 %v3576, %v3572
    %v3665 = vpack.c.b16 %v3577, %v3573
    %v3666 = vpack.c.b16 %v3578, %v3574
    %v3667 = vpack.c.b16 %v3579, %v3575
    %v3668 = vpack.c.b16 %v3584, %v3580
    %v3669 = vpack.c.b16 %v3585, %v3581
    %v3670 = vpack.c.b16 %v3586, %v3582
    %v3671 = vpack.c.b16 %v3587, %v3583
    %v3672 = vpack.c.b16 %v3592, %v3588
    %v3673 = vpack.c.b16 %v3593, %v3589
    %v3674 = vpack.c.b16 %v3594, %v3590
    %v3675 = vpack.c.b16 %v3595, %v3591
    %v3676 = vpack.c.b16 %v3600, %v3596
    %v3677 = vpack.c.b16 %v3601, %v3597
    %v3678 = vpack.c.b16 %v3602, %v3598
    %v3679 = vpack.c.b16 %v3603, %v3599
    %v3680 = vpack.c.b16 %v3608, %v3604
    %v3681 = vpack.c.b16 %v3609, %v3605
    %v3682 = vpack.c.b16 %v3610, %v3606
    %v3683 = vpack.c.b16 %v3611, %v3607
    %v3684 = vpack.c.b16 %v3616, %v3612
    %v3685 = vpack.c.b16 %v3617, %v3613
    %v3686 = vpack.c.b16 %v3618, %v3614
    %v3687 = vpack.c.b16 %v3619, %v3615
    %v3688 = vpack.c.b16 %v3624, %v3620
    %v3689 = vpack.c.b16 %v3625, %v3621
    %v3690 = vpack.c.b16 %v3626, %v3622
    %v3691 = vpack.c.b16 %v3627, %v3623
    %3756 = vmatprep.subr.bf16.mxu0 %v3657
    %3757 = vmatpush1.bf16.msra.mxu0 %v3656
    %3758 = vmatprep.subr.bf16.mxu0 %v3653
    %3759 = vmatpush1.bf16.msra.mxu0 %v3652
    %3760 = vmatprep.subr.bf16.mxu0 %v3649
    %3761 = vmatpush1.bf16.msra.mxu0 %v3648
    %3762 = vmatprep.subr.bf16.mxu0 %v3645
    %3763 = vmatpush1.bf16.msra.mxu0 %v3644
    %3764 = vmatprep.subr.bf16.mxu0 %v3641
    %3765 = vmatpush1.bf16.msra.mxu0 %v3640
    %3766 = vmatprep.subr.bf16.mxu0 %v3637
    %3767 = vmatpush1.bf16.msra.mxu0 %v3636
    %3768 = vmatprep.subr.bf16.mxu0 %v3633
    %3769 = vmatpush1.bf16.msra.mxu0 %v3632
    %3770 = vmatprep.subr.bf16.mxu0 %v3629
    %3771 = vmatpush1.bf16.msra.mxu0 %v3628
    %3772 = vmatprep.subr.bf16.mxu0 %v3689
    %3773 = vmatpush2.bf16.msra.mxu0 %v3688
    %3774 = vmatprep.subr.bf16.mxu0 %v3685
    %3775 = vmatpush2.bf16.msra.mxu0 %v3684
    %3776 = vmatprep.subr.bf16.mxu0 %v3681
    %3777 = vmatpush2.bf16.msra.mxu0 %v3680
    %3778 = vmatprep.subr.bf16.mxu0 %v3677
    %3779 = vmatpush2.bf16.msra.mxu0 %v3676
    %3780 = vmatprep.subr.bf16.mxu0 %v3673
    %3781 = vmatpush2.bf16.msra.mxu0 %v3672
    %3782 = vmatprep.subr.bf16.mxu0 %v3669
    %3783 = vmatpush2.bf16.msra.mxu0 %v3668
    %3784 = vmatprep.subr.bf16.mxu0 %v3665
    %3785 = vmatpush2.bf16.msra.mxu0 %v3664
    %3786 = vmatprep.subr.bf16.mxu0 %v3661
    %3787 = vmatpush2.bf16.msra.mxu0 %v3660
    %3788 = vmatprep.mubr.bf16.mxu0 %v3349
    %3789 = vmatmul.mubr.bf16.gmra.mxu0 %v3348
    %v3790 = vpop.f32.mrf.mxu0
    %v3791 = vadd.f32 %v3419, %v3790
    %v3792 = vpop.f32.mrf.mxu0
    %v3793 = vadd.f32 %v3423, %v3792
    %v3794 = vpop.f32.mrf.mxu0
    %v3795 = vadd.f32 %v3419, %v3794
    %v3796 = vpop.f32.mrf.mxu0
    %v3797 = vadd.f32 %v3423, %v3796
    %3798 = vdwg.mxu0
    %3799 = vmatprep.subr.bf16.mxu0 %v3659
    %3800 = vmatpush1.bf16.msra.mxu0 %v3658
    %3801 = vmatprep.subr.bf16.mxu0 %v3655
    %3802 = vmatpush1.bf16.msra.mxu0 %v3654
    %3803 = vmatprep.subr.bf16.mxu0 %v3651
    %3804 = vmatpush1.bf16.msra.mxu0 %v3650
    %3805 = vmatprep.subr.bf16.mxu0 %v3647
    %3806 = vmatpush1.bf16.msra.mxu0 %v3646
    %3807 = vmatprep.subr.bf16.mxu0 %v3643
    %3808 = vmatpush1.bf16.msra.mxu0 %v3642
    %3809 = vmatprep.subr.bf16.mxu0 %v3639
    %3810 = vmatpush1.bf16.msra.mxu0 %v3638
    %3811 = vmatprep.subr.bf16.mxu0 %v3635
    %3812 = vmatpush1.bf16.msra.mxu0 %v3634
    %3813 = vmatprep.subr.bf16.mxu0 %v3631
    %3814 = vmatpush1.bf16.msra.mxu0 %v3630
    %3815 = vmatprep.subr.bf16.mxu0 %v3691
    %3816 = vmatpush2.bf16.msra.mxu0 %v3690
    %3817 = vmatprep.subr.bf16.mxu0 %v3687
    %3818 = vmatpush2.bf16.msra.mxu0 %v3686
    %3819 = vmatprep.subr.bf16.mxu0 %v3683
    %3820 = vmatpush2.bf16.msra.mxu0 %v3682
    %3821 = vmatprep.subr.bf16.mxu0 %v3679
    %3822 = vmatpush2.bf16.msra.mxu0 %v3678
    %3823 = vmatprep.subr.bf16.mxu0 %v3675
    %3824 = vmatpush2.bf16.msra.mxu0 %v3674
    %3825 = vmatprep.subr.bf16.mxu0 %v3671
    %3826 = vmatpush2.bf16.msra.mxu0 %v3670
    %3827 = vmatprep.subr.bf16.mxu0 %v3667
    %3828 = vmatpush2.bf16.msra.mxu0 %v3666
    %3829 = vmatprep.subr.bf16.mxu0 %v3663
    %3830 = vmatpush2.bf16.msra.mxu0 %v3662
    %3831 = vmatprep.mubr.bf16.mxu0 %v3349
    %3832 = vmatmul.mubr.bf16.gmra.mxu0 %v3348
    %v3833 = vpop.f32.mrf.mxu0
    %v3834 = vadd.f32 %v3427, %v3833
    %v3835 = vpop.f32.mrf.mxu0
    %v3836 = vadd.f32 %v3431, %v3835
    %v3837 = vpop.f32.mrf.mxu0
    %v3838 = vadd.f32 %v3427, %v3837
    %v3839 = vpop.f32.mrf.mxu0
    %v3840 = vadd.f32 %v3431, %v3839
    %3841 = vdwg.mxu0
    %v3842 = vmax.f32 %v3791, 0.0
    %v3843 = vmax.f32 %v3793, 0.0
    %v3844 = vmax.f32 %v3834, 0.0
    %v3845 = vmax.f32 %v3836, 0.0
    %v3846 = vmax.f32 %v3795, 0.0
    %v3847 = vmax.f32 %v3797, 0.0
    %v3848 = vmax.f32 %v3838, 0.0
    %v3849 = vmax.f32 %v3840, 0.0
    %v3850 = vpack.c.bf16 %v3846, %v3842
    %v3851 = vpack.c.bf16 %v3847, %v3843
    %v3852 = vpack.c.bf16 %v3848, %v3844
    %v3853 = vpack.c.bf16 %v3849, %v3845
    %v3854 = vld [vmem:[#allocation9] sm:$0xff]
    %v3855 = vld [vmem:[#allocation9 + $0x8] sm:$0xff]
    %v3856 = vld [vmem:[#allocation9 + $0x10] sm:$0xff]
    %v3857 = vld [vmem:[#allocation9 + $0x18] sm:$0xf]
    %v3858 = vld [vmem:[#allocation9 + $0x1c] sm:$0xff]
    %v3859 = vld [vmem:[#allocation9 + $0x24] sm:$0xff]
    %v3860 = vld [vmem:[#allocation9 + $0x2c] sm:$0xff]
    %v3861 = vld [vmem:[#allocation9 + $0x34] sm:$0xf]
    %v3862 = vld [vmem:[#allocation9 + $0x38] sm:$0xff]
    %v3863 = vld [vmem:[#allocation9 + $0x40] sm:$0xff]
    %v3864 = vld [vmem:[#allocation9 + $0x48] sm:$0xff]
    %v3865 = vld [vmem:[#allocation9 + $0x50] sm:$0xf]
    %v3866 = vld [vmem:[#allocation9 + $0x54] sm:$0xff]
    %v3867 = vld [vmem:[#allocation9 + $0x5c] sm:$0xff]
    %v3868 = vld [vmem:[#allocation9 + $0x64] sm:$0xff]
    %v3869 = vld [vmem:[#allocation9 + $0x6c] sm:$0xf]
    %v3870 = vld [vmem:[#allocation9 + $0x70] sm:$0xff]
    %v3871 = vld [vmem:[#allocation9 + $0x78] sm:$0xff]
    %v3872 = vld [vmem:[#allocation9 + $0x80] sm:$0xff]
    %v3873 = vld [vmem:[#allocation9 + $0x88] sm:$0xf]
    %v3874 = vld [vmem:[#allocation9 + $0x8c] sm:$0xff]
    %v3875 = vld [vmem:[#allocation9 + $0x94] sm:$0xff]
    %v3876 = vld [vmem:[#allocation9 + $0x9c] sm:$0xff]
    %v3877 = vld [vmem:[#allocation9 + $0xa4] sm:$0xf]
    %v3878 = vld [vmem:[#allocation9 + $0xa8] sm:$0xff]
    %v3879 = vld [vmem:[#allocation9 + $0xb0] sm:$0xff]
    %v3880 = vld [vmem:[#allocation9 + $0xb8] sm:$0xff]
    %v3881 = vld [vmem:[#allocation9 + $0xc0] sm:$0xf]
    %v3882 = vld [vmem:[#allocation9 + $0xc4] sm:$0xff]
    %v3883 = vld [vmem:[#allocation9 + $0xcc] sm:$0xff]
    %v3884 = vld [vmem:[#allocation9 + $0xd4] sm:$0xff]
    %v3885 = vld [vmem:[#allocation9 + $0xdc] sm:$0xf]
    %v3886 = vld [vmem:[#allocation9 + $0xe0] sm:$0xff]
    %v3887 = vld [vmem:[#allocation9 + $0xe8] sm:$0xff]
    %v3888 = vld [vmem:[#allocation9 + $0xf0] sm:$0xff]
    %v3889 = vld [vmem:[#allocation9 + $0xf8] sm:$0xf]
    %v3890 = vld [vmem:[#allocation9 + $0xfc] sm:$0xff]
    %v3891 = vld [vmem:[#allocation9 + $0x104] sm:$0xff]
    %v3892 = vld [vmem:[#allocation9 + $0x10c] sm:$0xff]
    %v3893 = vld [vmem:[#allocation9 + $0x114] sm:$0xf]
    %v3894 = vld [vmem:[#allocation9 + $0x118] sm:$0xff]
    %v3895 = vld [vmem:[#allocation9 + $0x120] sm:$0xff]
    %v3896 = vld [vmem:[#allocation9 + $0x128] sm:$0xff]
    %v3897 = vld [vmem:[#allocation9 + $0x130] sm:$0xf]
    %v3898 = vld [vmem:[#allocation9 + $0x134] sm:$0xff]
    %v3899 = vld [vmem:[#allocation9 + $0x13c] sm:$0xff]
    %v3900 = vld [vmem:[#allocation9 + $0x144] sm:$0xff]
    %v3901 = vld [vmem:[#allocation9 + $0x14c] sm:$0xf]
    %v3902 = vld [vmem:[#allocation9 + $0x150] sm:$0xff]
    %v3903 = vld [vmem:[#allocation9 + $0x158] sm:$0xff]
    %v3904 = vld [vmem:[#allocation9 + $0x160] sm:$0xff]
    %v3905 = vld [vmem:[#allocation9 + $0x168] sm:$0xf]
    %v3906 = vld [vmem:[#allocation9 + $0x16c] sm:$0xff]
    %v3907 = vld [vmem:[#allocation9 + $0x174] sm:$0xff]
    %v3908 = vld [vmem:[#allocation9 + $0x17c] sm:$0xff]
    %v3909 = vld [vmem:[#allocation9 + $0x184] sm:$0xf]
    %v3910 = vld [vmem:[#allocation9 + $0x188] sm:$0xff]
    %v3911 = vld [vmem:[#allocation9 + $0x190] sm:$0xff]
    %v3912 = vld [vmem:[#allocation9 + $0x198] sm:$0xff]
    %v3913 = vld [vmem:[#allocation9 + $0x1a0] sm:$0xf]
    %v3914 = vld [vmem:[#allocation9 + $0x1a4] sm:$0xff]
    %v3915 = vld [vmem:[#allocation9 + $0x1ac] sm:$0xff]
    %v3916 = vld [vmem:[#allocation9 + $0x1b4] sm:$0xff]
    %v3917 = vld [vmem:[#allocation9 + $0x1bc] sm:$0xf]
    %v3918 = vld [vmem:[#allocation9 + $0x1c0] sm:$0xff]
    %v3919 = vld [vmem:[#allocation9 + $0x1c8] sm:$0xff]
    %v3920 = vld [vmem:[#allocation9 + $0x1d0] sm:$0xff]
    %v3921 = vld [vmem:[#allocation9 + $0x1d8] sm:$0xf]
    %v3922 = vld [vmem:[#allocation9 + $0x1dc] sm:$0xff]
    %v3923 = vld [vmem:[#allocation9 + $0x1e4] sm:$0xff]
    %v3924 = vld [vmem:[#allocation9 + $0x1ec] sm:$0xff]
    %v3925 = vld [vmem:[#allocation9 + $0x1f4] sm:$0xf]
    %v3926 = vld [vmem:[#allocation9 + $0x1f8] sm:$0xff]
    %v3927 = vld [vmem:[#allocation9 + $0x200] sm:$0xff]
    %v3928 = vld [vmem:[#allocation9 + $0x208] sm:$0xff]
    %v3929 = vld [vmem:[#allocation9 + $0x210] sm:$0xf]
    %v3930 = vld [vmem:[#allocation9 + $0x214] sm:$0xff]
    %v3931 = vld [vmem:[#allocation9 + $0x21c] sm:$0xff]
    %v3932 = vld [vmem:[#allocation9 + $0x224] sm:$0xff]
    %v3933 = vld [vmem:[#allocation9 + $0x22c] sm:$0xf]
    %v3934 = vld [vmem:[#allocation9 + $0x230] sm:$0xff]
    %v3935 = vld [vmem:[#allocation9 + $0x238] sm:$0xff]
    %v3936 = vld [vmem:[#allocation9 + $0x240] sm:$0xff]
    %v3937 = vld [vmem:[#allocation9 + $0x248] sm:$0xf]
    %v3938 = vld [vmem:[#allocation9 + $0x24c] sm:$0xff]
    %v3939 = vld [vmem:[#allocation9 + $0x254] sm:$0xff]
    %v3940 = vld [vmem:[#allocation9 + $0x25c] sm:$0xff]
    %v3941 = vld [vmem:[#allocation9 + $0x264] sm:$0xf]
    %v3942 = vld [vmem:[#allocation9 + $0x268] sm:$0xff]
    %v3943 = vld [vmem:[#allocation9 + $0x270] sm:$0xff]
    %v3944 = vld [vmem:[#allocation9 + $0x278] sm:$0xff]
    %v3945 = vld [vmem:[#allocation9 + $0x280] sm:$0xf]
    %v3946 = vld [vmem:[#allocation9 + $0x284] sm:$0xff]
    %v3947 = vld [vmem:[#allocation9 + $0x28c] sm:$0xff]
    %v3948 = vld [vmem:[#allocation9 + $0x294] sm:$0xff]
    %v3949 = vld [vmem:[#allocation9 + $0x29c] sm:$0xf]
    %v3950 = vld [vmem:[#allocation9 + $0x2a0] sm:$0xff]
    %v3951 = vld [vmem:[#allocation9 + $0x2a8] sm:$0xff]
    %v3952 = vld [vmem:[#allocation9 + $0x2b0] sm:$0xff]
    %v3953 = vld [vmem:[#allocation9 + $0x2b8] sm:$0xf]
    %v3954 = vld [vmem:[#allocation9 + $0x2bc] sm:$0xff]
    %v3955 = vld [vmem:[#allocation9 + $0x2c4] sm:$0xff]
    %v3956 = vld [vmem:[#allocation9 + $0x2cc] sm:$0xff]
    %v3957 = vld [vmem:[#allocation9 + $0x2d4] sm:$0xf]
    %v3958 = vld [vmem:[#allocation9 + $0x2d8] sm:$0xff]
    %v3959 = vld [vmem:[#allocation9 + $0x2e0] sm:$0xff]
    %v3960 = vld [vmem:[#allocation9 + $0x2e8] sm:$0xff]
    %v3961 = vld [vmem:[#allocation9 + $0x2f0] sm:$0xf]
    %v3962 = vld [vmem:[#allocation9 + $0x2f4] sm:$0xff]
    %v3963 = vld [vmem:[#allocation9 + $0x2fc] sm:$0xff]
    %v3964 = vld [vmem:[#allocation9 + $0x304] sm:$0xff]
    %v3965 = vld [vmem:[#allocation9 + $0x30c] sm:$0xf]
    %v3966 = vld [vmem:[#allocation9 + $0x310] sm:$0xff]
    %v3967 = vld [vmem:[#allocation9 + $0x318] sm:$0xff]
    %v3968 = vld [vmem:[#allocation9 + $0x320] sm:$0xff]
    %v3969 = vld [vmem:[#allocation9 + $0x328] sm:$0xf]
    %v3970 = vld [vmem:[#allocation9 + $0x32c] sm:$0xff]
    %v3971 = vld [vmem:[#allocation9 + $0x334] sm:$0xff]
    %v3972 = vld [vmem:[#allocation9 + $0x33c] sm:$0xff]
    %v3973 = vld [vmem:[#allocation9 + $0x344] sm:$0xf]
    %v3974 = vld [vmem:[#allocation9 + $0x348] sm:$0xff]
    %v3975 = vld [vmem:[#allocation9 + $0x350] sm:$0xff]
    %v3976 = vld [vmem:[#allocation9 + $0x358] sm:$0xff]
    %v3977 = vld [vmem:[#allocation9 + $0x360] sm:$0xf]
    %v3978 = vld [vmem:[#allocation9 + $0x364] sm:$0xff]
    %v3979 = vld [vmem:[#allocation9 + $0x36c] sm:$0xff]
    %v3980 = vld [vmem:[#allocation9 + $0x374] sm:$0xff]
    %v3981 = vld [vmem:[#allocation9 + $0x37c] sm:$0xf]
    %v3982 = vld [vmem:[#allocation9 + $0x380] sm:$0xff]
    %v3983 = vld [vmem:[#allocation9 + $0x388] sm:$0xff]
    %v3984 = vld [vmem:[#allocation9 + $0x390] sm:$0xff]
    %v3985 = vld [vmem:[#allocation9 + $0x398] sm:$0xf]
    %v3986 = vld [vmem:[#allocation9 + $0x39c] sm:$0xff]
    %v3987 = vld [vmem:[#allocation9 + $0x3a4] sm:$0xff]
    %v3988 = vld [vmem:[#allocation9 + $0x3ac] sm:$0xff]
    %v3989 = vld [vmem:[#allocation9 + $0x3b4] sm:$0xf]
    %v3990 = vld [vmem:[#allocation9 + $0x3b8] sm:$0xff]
    %v3991 = vld [vmem:[#allocation9 + $0x3c0] sm:$0xff]
    %v3992 = vld [vmem:[#allocation9 + $0x3c8] sm:$0xff]
    %v3993 = vld [vmem:[#allocation9 + $0x3d0] sm:$0xf]
    %v3994 = vld [vmem:[#allocation9 + $0x3d4] sm:$0xff]
    %v3995 = vld [vmem:[#allocation9 + $0x3dc] sm:$0xff]
    %v3996 = vld [vmem:[#allocation9 + $0x3e4] sm:$0xff]
    %v3997 = vld [vmem:[#allocation9 + $0x3ec] sm:$0xf]
    %v3998 = vld [vmem:[#allocation9 + $0x3f0] sm:$0xff]
    %v3999 = vld [vmem:[#allocation9 + $0x3f8] sm:$0xff]
    %v4000 = vld [vmem:[#allocation9 + $0x400] sm:$0xff]
    %v4001 = vld [vmem:[#allocation9 + $0x408] sm:$0xf]
    %v4002 = vld [vmem:[#allocation9 + $0x40c] sm:$0xff]
    %v4003 = vld [vmem:[#allocation9 + $0x414] sm:$0xff]
    %v4004 = vld [vmem:[#allocation9 + $0x41c] sm:$0xff]
    %v4005 = vld [vmem:[#allocation9 + $0x424] sm:$0xf]
    %v4006 = vld [vmem:[#allocation9 + $0x428] sm:$0xff]
    %v4007 = vld [vmem:[#allocation9 + $0x430] sm:$0xff]
    %v4008 = vld [vmem:[#allocation9 + $0x438] sm:$0xff]
    %v4009 = vld [vmem:[#allocation9 + $0x440] sm:$0xf]
    %v4010 = vld [vmem:[#allocation9 + $0x444] sm:$0xff]
    %v4011 = vld [vmem:[#allocation9 + $0x44c] sm:$0xff]
    %v4012 = vld [vmem:[#allocation9 + $0x454] sm:$0xff]
    %v4013 = vld [vmem:[#allocation9 + $0x45c] sm:$0xf]
    %v4014 = vld [vmem:[#allocation9 + $0x460] sm:$0xff]
    %v4015 = vld [vmem:[#allocation9 + $0x468] sm:$0xff]
    %v4016 = vld [vmem:[#allocation9 + $0x470] sm:$0xff]
    %v4017 = vld [vmem:[#allocation9 + $0x478] sm:$0xf]
    %v4018 = vld [vmem:[#allocation9 + $0x47c] sm:$0xff]
    %v4019 = vld [vmem:[#allocation9 + $0x484] sm:$0xff]
    %v4020 = vld [vmem:[#allocation9 + $0x48c] sm:$0xff]
    %v4021 = vld [vmem:[#allocation9 + $0x494] sm:$0xf]
    %v4022 = vld [vmem:[#allocation9 + $0x498] sm:$0xff]
    %v4023 = vld [vmem:[#allocation9 + $0x4a0] sm:$0xff]
    %v4024 = vld [vmem:[#allocation9 + $0x4a8] sm:$0xff]
    %v4025 = vld [vmem:[#allocation9 + $0x4b0] sm:$0xf]
    %v4026 = vld [vmem:[#allocation9 + $0x4b4] sm:$0xff]
    %v4027 = vld [vmem:[#allocation9 + $0x4bc] sm:$0xff]
    %v4028 = vld [vmem:[#allocation9 + $0x4c4] sm:$0xff]
    %v4029 = vld [vmem:[#allocation9 + $0x4cc] sm:$0xf]
    %v4030 = vld [vmem:[#allocation9 + $0x4d0] sm:$0xff]
    %v4031 = vld [vmem:[#allocation9 + $0x4d8] sm:$0xff]
    %v4032 = vld [vmem:[#allocation9 + $0x4e0] sm:$0xff]
    %v4033 = vld [vmem:[#allocation9 + $0x4e8] sm:$0xf]
    %v4034 = vld [vmem:[#allocation9 + $0x4ec] sm:$0xff]
    %v4035 = vld [vmem:[#allocation9 + $0x4f4] sm:$0xff]
    %v4036 = vld [vmem:[#allocation9 + $0x4fc] sm:$0xff]
    %v4037 = vld [vmem:[#allocation9 + $0x504] sm:$0xf]
    %v4038 = vld [vmem:[#allocation9 + $0x508] sm:$0xff]
    %v4039 = vld [vmem:[#allocation9 + $0x510] sm:$0xff]
    %v4040 = vld [vmem:[#allocation9 + $0x518] sm:$0xff]
    %v4041 = vld [vmem:[#allocation9 + $0x520] sm:$0xf]
    %v4042 = vld [vmem:[#allocation9 + $0x524] sm:$0xff]
    %v4043 = vld [vmem:[#allocation9 + $0x52c] sm:$0xff]
    %v4044 = vld [vmem:[#allocation9 + $0x534] sm:$0xff]
    %v4045 = vld [vmem:[#allocation9 + $0x53c] sm:$0xf]
    %v4046 = vld [vmem:[#allocation9 + $0x540] sm:$0xff]
    %v4047 = vld [vmem:[#allocation9 + $0x548] sm:$0xff]
    %v4048 = vld [vmem:[#allocation9 + $0x550] sm:$0xff]
    %v4049 = vld [vmem:[#allocation9 + $0x558] sm:$0xf]
    %v4050 = vld [vmem:[#allocation9 + $0x55c] sm:$0xff]
    %v4051 = vld [vmem:[#allocation9 + $0x564] sm:$0xff]
    %v4052 = vld [vmem:[#allocation9 + $0x56c] sm:$0xff]
    %v4053 = vld [vmem:[#allocation9 + $0x574] sm:$0xf]
    %v4054 = vld [vmem:[#allocation9 + $0x578] sm:$0xff]
    %v4055 = vld [vmem:[#allocation9 + $0x580] sm:$0xff]
    %v4056 = vld [vmem:[#allocation9 + $0x588] sm:$0xff]
    %v4057 = vld [vmem:[#allocation9 + $0x590] sm:$0xf]
    %v4058 = vld [vmem:[#allocation9 + $0x594] sm:$0xff]
    %v4059 = vld [vmem:[#allocation9 + $0x59c] sm:$0xff]
    %v4060 = vld [vmem:[#allocation9 + $0x5a4] sm:$0xff]
    %v4061 = vld [vmem:[#allocation9 + $0x5ac] sm:$0xf]
    %v4062 = vld [vmem:[#allocation9 + $0x5b0] sm:$0xff]
    %v4063 = vld [vmem:[#allocation9 + $0x5b8] sm:$0xff]
    %v4064 = vld [vmem:[#allocation9 + $0x5c0] sm:$0xff]
    %v4065 = vld [vmem:[#allocation9 + $0x5c8] sm:$0xf]
    %v4066 = vld [vmem:[#allocation9 + $0x5cc] sm:$0xff]
    %v4067 = vld [vmem:[#allocation9 + $0x5d4] sm:$0xff]
    %v4068 = vld [vmem:[#allocation9 + $0x5dc] sm:$0xff]
    %v4069 = vld [vmem:[#allocation9 + $0x5e4] sm:$0xf]
    %v4070 = vld [vmem:[#allocation9 + $0x5e8] sm:$0xff]
    %v4071 = vld [vmem:[#allocation9 + $0x5f0] sm:$0xff]
    %v4072 = vld [vmem:[#allocation9 + $0x5f8] sm:$0xff]
    %v4073 = vld [vmem:[#allocation9 + $0x600] sm:$0xf]
    %v4074 = vld [vmem:[#allocation9 + $0x604] sm:$0xff]
    %v4075 = vld [vmem:[#allocation9 + $0x60c] sm:$0xff]
    %v4076 = vld [vmem:[#allocation9 + $0x614] sm:$0xff]
    %v4077 = vld [vmem:[#allocation9 + $0x61c] sm:$0xf]
    %v4078 = vld [vmem:[#allocation9 + $0x620] sm:$0xff]
    %v4079 = vld [vmem:[#allocation9 + $0x628] sm:$0xff]
    %v4080 = vld [vmem:[#allocation9 + $0x630] sm:$0xff]
    %v4081 = vld [vmem:[#allocation9 + $0x638] sm:$0xf]
    %v4082 = vld [vmem:[#allocation9 + $0x63c] sm:$0xff]
    %v4083 = vld [vmem:[#allocation9 + $0x644] sm:$0xff]
    %v4084 = vld [vmem:[#allocation9 + $0x64c] sm:$0xff]
    %v4085 = vld [vmem:[#allocation9 + $0x654] sm:$0xf]
    %v4086 = vld [vmem:[#allocation9 + $0x658] sm:$0xff]
    %v4087 = vld [vmem:[#allocation9 + $0x660] sm:$0xff]
    %v4088 = vld [vmem:[#allocation9 + $0x668] sm:$0xff]
    %v4089 = vld [vmem:[#allocation9 + $0x670] sm:$0xf]
    %v4090 = vld [vmem:[#allocation9 + $0x674] sm:$0xff]
    %v4091 = vld [vmem:[#allocation9 + $0x67c] sm:$0xff]
    %v4092 = vld [vmem:[#allocation9 + $0x684] sm:$0xff]
    %v4093 = vld [vmem:[#allocation9 + $0x68c] sm:$0xf]
    %v4094 = vld [vmem:[#allocation9 + $0x690] sm:$0xff]
    %v4095 = vld [vmem:[#allocation9 + $0x698] sm:$0xff]
    %v4096 = vld [vmem:[#allocation9 + $0x6a0] sm:$0xff]
    %v4097 = vld [vmem:[#allocation9 + $0x6a8] sm:$0xf]
    %v4098 = vld [vmem:[#allocation9 + $0x6ac] sm:$0xff]
    %v4099 = vld [vmem:[#allocation9 + $0x6b4] sm:$0xff]
    %v4100 = vld [vmem:[#allocation9 + $0x6bc] sm:$0xff]
    %v4101 = vld [vmem:[#allocation9 + $0x6c4] sm:$0xf]
    %v4102 = vld [vmem:[#allocation9 + $0x6c8] sm:$0xff]
    %v4103 = vld [vmem:[#allocation9 + $0x6d0] sm:$0xff]
    %v4104 = vld [vmem:[#allocation9 + $0x6d8] sm:$0xff]
    %v4105 = vld [vmem:[#allocation9 + $0x6e0] sm:$0xf]
    %v4106 = vld [vmem:[#allocation9 + $0x6e4] sm:$0xff]
    %v4107 = vld [vmem:[#allocation9 + $0x6ec] sm:$0xff]
    %v4108 = vld [vmem:[#allocation9 + $0x6f4] sm:$0xff]
    %v4109 = vld [vmem:[#allocation9 + $0x6fc] sm:$0xf]
    %v4110 = vld [vmem:[%s10] sm:$0xff]
    %v4112 = vlaneseq
    %v4113 = vshrl.u32 %v4112, 7
    %v4114 = vsub.s32 0, %v4113
    %v4115 = vrot.slane %v4110, %v4114
    %v4116 = vlaneseq
    %v4117 = vshrl.u32 %v4116, 7
    %v4118 = vsub.s32 1, %v4117
    %v4119 = vrot.slane %v4110, %v4118
    %v4120 = vlaneseq
    %v4121 = vshrl.u32 %v4120, 7
    %v4122 = vsub.s32 2, %v4121
    %v4123 = vrot.slane %v4110, %v4122
    %v4124 = vlaneseq
    %v4125 = vshrl.u32 %v4124, 7
    %v4126 = vsub.s32 3, %v4125
    %v4127 = vrot.slane %v4110, %v4126
    %v4128 = vlaneseq
    %v4129 = vshrl.u32 %v4128, 7
    %v4130 = vsub.s32 4, %v4129
    %v4131 = vrot.slane %v4110, %v4130
    %v4132 = vlaneseq
    %v4133 = vshrl.u32 %v4132, 7
    %v4134 = vsub.s32 5, %v4133
    %v4135 = vrot.slane %v4110, %v4134
    %v4136 = vlaneseq
    %v4137 = vshrl.u32 %v4136, 7
    %v4138 = vsub.s32 6, %v4137
    %v4139 = vrot.slane %v4110, %v4138
    %v4403 = vunpack.c.l.b16 %v3854
    %v4404 = vunpack.c.h.b16 %v3854
    %v4405 = vunpack.c.l.b16 %v3855
    %v4406 = vunpack.c.h.b16 %v3855
    %v4407 = vunpack.c.l.b16 %v3856
    %v4408 = vunpack.c.h.b16 %v3856
    %v4409 = vunpack.c.l.b16 %v3857
    %v4410 = vunpack.c.l.b16 %v3858
    %v4411 = vunpack.c.h.b16 %v3858
    %v4412 = vunpack.c.l.b16 %v3859
    %v4413 = vunpack.c.h.b16 %v3859
    %v4414 = vunpack.c.l.b16 %v3860
    %v4415 = vunpack.c.h.b16 %v3860
    %v4416 = vunpack.c.l.b16 %v3861
    %v4417 = vunpack.c.l.b16 %v3862
    %v4418 = vunpack.c.h.b16 %v3862
    %v4419 = vunpack.c.l.b16 %v3863
    %v4420 = vunpack.c.h.b16 %v3863
    %v4421 = vunpack.c.l.b16 %v3864
    %v4422 = vunpack.c.h.b16 %v3864
    %v4423 = vunpack.c.l.b16 %v3865
    %v4424 = vunpack.c.l.b16 %v3866
    %v4425 = vunpack.c.h.b16 %v3866
    %v4426 = vunpack.c.l.b16 %v3867
    %v4427 = vunpack.c.h.b16 %v3867
    %v4428 = vunpack.c.l.b16 %v3868
    %v4429 = vunpack.c.h.b16 %v3868
    %v4430 = vunpack.c.l.b16 %v3869
    %v4431 = vunpack.c.l.b16 %v3870
    %v4432 = vunpack.c.h.b16 %v3870
    %v4433 = vunpack.c.l.b16 %v3871
    %v4434 = vunpack.c.h.b16 %v3871
    %v4435 = vunpack.c.l.b16 %v3872
    %v4436 = vunpack.c.h.b16 %v3872
    %v4437 = vunpack.c.l.b16 %v3873
    %v4438 = vunpack.c.l.b16 %v3874
    %v4439 = vunpack.c.h.b16 %v3874
    %v4440 = vunpack.c.l.b16 %v3875
    %v4441 = vunpack.c.h.b16 %v3875
    %v4442 = vunpack.c.l.b16 %v3876
    %v4443 = vunpack.c.h.b16 %v3876
    %v4444 = vunpack.c.l.b16 %v3877
    %v4445 = vunpack.c.l.b16 %v3878
    %v4446 = vunpack.c.h.b16 %v3878
    %v4447 = vunpack.c.l.b16 %v3879
    %v4448 = vunpack.c.h.b16 %v3879
    %v4449 = vunpack.c.l.b16 %v3880
    %v4450 = vunpack.c.h.b16 %v3880
    %v4451 = vunpack.c.l.b16 %v3881
    %v4452 = vunpack.c.l.b16 %v3882
    %v4453 = vunpack.c.h.b16 %v3882
    %v4454 = vunpack.c.l.b16 %v3883
    %v4455 = vunpack.c.h.b16 %v3883
    %v4456 = vunpack.c.l.b16 %v3884
    %v4457 = vunpack.c.h.b16 %v3884
    %v4458 = vunpack.c.l.b16 %v3885
    %v4459 = vunpack.c.l.b16 %v3886
    %v4460 = vunpack.c.h.b16 %v3886
    %v4461 = vunpack.c.l.b16 %v3887
    %v4462 = vunpack.c.h.b16 %v3887
    %v4463 = vunpack.c.l.b16 %v3888
    %v4464 = vunpack.c.h.b16 %v3888
    %v4465 = vunpack.c.l.b16 %v3889
    %v4466 = vunpack.c.l.b16 %v3890
    %v4467 = vunpack.c.h.b16 %v3890
    %v4468 = vunpack.c.l.b16 %v3891
    %v4469 = vunpack.c.h.b16 %v3891
    %v4470 = vunpack.c.l.b16 %v3892
    %v4471 = vunpack.c.h.b16 %v3892
    %v4472 = vunpack.c.l.b16 %v3893
    %v4473 = vunpack.c.l.b16 %v3894
    %v4474 = vunpack.c.h.b16 %v3894
    %v4475 = vunpack.c.l.b16 %v3895
    %v4476 = vunpack.c.h.b16 %v3895
    %v4477 = vunpack.c.l.b16 %v3896
    %v4478 = vunpack.c.h.b16 %v3896
    %v4479 = vunpack.c.l.b16 %v3897
    %v4480 = vunpack.c.l.b16 %v3898
    %v4481 = vunpack.c.h.b16 %v3898
    %v4482 = vunpack.c.l.b16 %v3899
    %v4483 = vunpack.c.h.b16 %v3899
    %v4484 = vunpack.c.l.b16 %v3900
    %v4485 = vunpack.c.h.b16 %v3900
    %v4486 = vunpack.c.l.b16 %v3901
    %v4487 = vunpack.c.l.b16 %v3902
    %v4488 = vunpack.c.h.b16 %v3902
    %v4489 = vunpack.c.l.b16 %v3903
    %v4490 = vunpack.c.h.b16 %v3903
    %v4491 = vunpack.c.l.b16 %v3904
    %v4492 = vunpack.c.h.b16 %v3904
    %v4493 = vunpack.c.l.b16 %v3905
    %v4494 = vunpack.c.l.b16 %v3906
    %v4495 = vunpack.c.h.b16 %v3906
    %v4496 = vunpack.c.l.b16 %v3907
    %v4497 = vunpack.c.h.b16 %v3907
    %v4498 = vunpack.c.l.b16 %v3908
    %v4499 = vunpack.c.h.b16 %v3908
    %v4500 = vunpack.c.l.b16 %v3909
    %v4501 = vunpack.c.l.b16 %v3910
    %v4502 = vunpack.c.h.b16 %v3910
    %v4503 = vunpack.c.l.b16 %v3911
    %v4504 = vunpack.c.h.b16 %v3911
    %v4505 = vunpack.c.l.b16 %v3912
    %v4506 = vunpack.c.h.b16 %v3912
    %v4507 = vunpack.c.l.b16 %v3913
    %v4508 = vunpack.c.l.b16 %v3914
    %v4509 = vunpack.c.h.b16 %v3914
    %v4510 = vunpack.c.l.b16 %v3915
    %v4511 = vunpack.c.h.b16 %v3915
    %v4512 = vunpack.c.l.b16 %v3916
    %v4513 = vunpack.c.h.b16 %v3916
    %v4514 = vunpack.c.l.b16 %v3917
    %v4515 = vunpack.c.l.b16 %v3918
    %v4516 = vunpack.c.h.b16 %v3918
    %v4517 = vunpack.c.l.b16 %v3919
    %v4518 = vunpack.c.h.b16 %v3919
    %v4519 = vunpack.c.l.b16 %v3920
    %v4520 = vunpack.c.h.b16 %v3920
    %v4521 = vunpack.c.l.b16 %v3921
    %v4522 = vunpack.c.l.b16 %v3922
    %v4523 = vunpack.c.h.b16 %v3922
    %v4524 = vunpack.c.l.b16 %v3923
    %v4525 = vunpack.c.h.b16 %v3923
    %v4526 = vunpack.c.l.b16 %v3924
    %v4527 = vunpack.c.h.b16 %v3924
    %v4528 = vunpack.c.l.b16 %v3925
    %v4529 = vunpack.c.l.b16 %v3926
    %v4530 = vunpack.c.h.b16 %v3926
    %v4531 = vunpack.c.l.b16 %v3927
    %v4532 = vunpack.c.h.b16 %v3927
    %v4533 = vunpack.c.l.b16 %v3928
    %v4534 = vunpack.c.h.b16 %v3928
    %v4535 = vunpack.c.l.b16 %v3929
    %v4536 = vunpack.c.l.b16 %v3930
    %v4537 = vunpack.c.h.b16 %v3930
    %v4538 = vunpack.c.l.b16 %v3931
    %v4539 = vunpack.c.h.b16 %v3931
    %v4540 = vunpack.c.l.b16 %v3932
    %v4541 = vunpack.c.h.b16 %v3932
    %v4542 = vunpack.c.l.b16 %v3933
    %v4543 = vunpack.c.l.b16 %v3934
    %v4544 = vunpack.c.h.b16 %v3934
    %v4545 = vunpack.c.l.b16 %v3935
    %v4546 = vunpack.c.h.b16 %v3935
    %v4547 = vunpack.c.l.b16 %v3936
    %v4548 = vunpack.c.h.b16 %v3936
    %v4549 = vunpack.c.l.b16 %v3937
    %v4550 = vunpack.c.l.b16 %v3938
    %v4551 = vunpack.c.h.b16 %v3938
    %v4552 = vunpack.c.l.b16 %v3939
    %v4553 = vunpack.c.h.b16 %v3939
    %v4554 = vunpack.c.l.b16 %v3940
    %v4555 = vunpack.c.h.b16 %v3940
    %v4556 = vunpack.c.l.b16 %v3941
    %v4557 = vunpack.c.l.b16 %v3942
    %v4558 = vunpack.c.h.b16 %v3942
    %v4559 = vunpack.c.l.b16 %v3943
    %v4560 = vunpack.c.h.b16 %v3943
    %v4561 = vunpack.c.l.b16 %v3944
    %v4562 = vunpack.c.h.b16 %v3944
    %v4563 = vunpack.c.l.b16 %v3945
    %v4564 = vunpack.c.l.b16 %v3946
    %v4565 = vunpack.c.h.b16 %v3946
    %v4566 = vunpack.c.l.b16 %v3947
    %v4567 = vunpack.c.h.b16 %v3947
    %v4568 = vunpack.c.l.b16 %v3948
    %v4569 = vunpack.c.h.b16 %v3948
    %v4570 = vunpack.c.l.b16 %v3949
    %v4571 = vunpack.c.l.b16 %v3950
    %v4572 = vunpack.c.h.b16 %v3950
    %v4573 = vunpack.c.l.b16 %v3951
    %v4574 = vunpack.c.h.b16 %v3951
    %v4575 = vunpack.c.l.b16 %v3952
    %v4576 = vunpack.c.h.b16 %v3952
    %v4577 = vunpack.c.l.b16 %v3953
    %v4578 = vunpack.c.l.b16 %v3954
    %v4579 = vunpack.c.h.b16 %v3954
    %v4580 = vunpack.c.l.b16 %v3955
    %v4581 = vunpack.c.h.b16 %v3955
    %v4582 = vunpack.c.l.b16 %v3956
    %v4583 = vunpack.c.h.b16 %v3956
    %v4584 = vunpack.c.l.b16 %v3957
    %v4585 = vunpack.c.l.b16 %v3958
    %v4586 = vunpack.c.h.b16 %v3958
    %v4587 = vunpack.c.l.b16 %v3959
    %v4588 = vunpack.c.h.b16 %v3959
    %v4589 = vunpack.c.l.b16 %v3960
    %v4590 = vunpack.c.h.b16 %v3960
    %v4591 = vunpack.c.l.b16 %v3961
    %v4592 = vunpack.c.l.b16 %v3962
    %v4593 = vunpack.c.h.b16 %v3962
    %v4594 = vunpack.c.l.b16 %v3963
    %v4595 = vunpack.c.h.b16 %v3963
    %v4596 = vunpack.c.l.b16 %v3964
    %v4597 = vunpack.c.h.b16 %v3964
    %v4598 = vunpack.c.l.b16 %v3965
    %v4599 = vunpack.c.l.b16 %v3966
    %v4600 = vunpack.c.h.b16 %v3966
    %v4601 = vunpack.c.l.b16 %v3967
    %v4602 = vunpack.c.h.b16 %v3967
    %v4603 = vunpack.c.l.b16 %v3968
    %v4604 = vunpack.c.h.b16 %v3968
    %v4605 = vunpack.c.l.b16 %v3969
    %v4606 = vunpack.c.l.b16 %v3970
    %v4607 = vunpack.c.h.b16 %v3970
    %v4608 = vunpack.c.l.b16 %v3971
    %v4609 = vunpack.c.h.b16 %v3971
    %v4610 = vunpack.c.l.b16 %v3972
    %v4611 = vunpack.c.h.b16 %v3972
    %v4612 = vunpack.c.l.b16 %v3973
    %v4613 = vunpack.c.l.b16 %v3974
    %v4614 = vunpack.c.h.b16 %v3974
    %v4615 = vunpack.c.l.b16 %v3975
    %v4616 = vunpack.c.h.b16 %v3975
    %v4617 = vunpack.c.l.b16 %v3976
    %v4618 = vunpack.c.h.b16 %v3976
    %v4619 = vunpack.c.l.b16 %v3977
    %v4620 = vunpack.c.l.b16 %v3978
    %v4621 = vunpack.c.h.b16 %v3978
    %v4622 = vunpack.c.l.b16 %v3979
    %v4623 = vunpack.c.h.b16 %v3979
    %v4624 = vunpack.c.l.b16 %v3980
    %v4625 = vunpack.c.h.b16 %v3980
    %v4626 = vunpack.c.l.b16 %v3981
    %v4627 = vunpack.c.l.b16 %v3982
    %v4628 = vunpack.c.h.b16 %v3982
    %v4629 = vunpack.c.l.b16 %v3983
    %v4630 = vunpack.c.h.b16 %v3983
    %v4631 = vunpack.c.l.b16 %v3984
    %v4632 = vunpack.c.h.b16 %v3984
    %v4633 = vunpack.c.l.b16 %v3985
    %v4634 = vunpack.c.l.b16 %v3986
    %v4635 = vunpack.c.h.b16 %v3986
    %v4636 = vunpack.c.l.b16 %v3987
    %v4637 = vunpack.c.h.b16 %v3987
    %v4638 = vunpack.c.l.b16 %v3988
    %v4639 = vunpack.c.h.b16 %v3988
    %v4640 = vunpack.c.l.b16 %v3989
    %v4641 = vunpack.c.l.b16 %v3990
    %v4642 = vunpack.c.h.b16 %v3990
    %v4643 = vunpack.c.l.b16 %v3991
    %v4644 = vunpack.c.h.b16 %v3991
    %v4645 = vunpack.c.l.b16 %v3992
    %v4646 = vunpack.c.h.b16 %v3992
    %v4647 = vunpack.c.l.b16 %v3993
    %v4648 = vunpack.c.l.b16 %v3994
    %v4649 = vunpack.c.h.b16 %v3994
    %v4650 = vunpack.c.l.b16 %v3995
    %v4651 = vunpack.c.h.b16 %v3995
    %v4652 = vunpack.c.l.b16 %v3996
    %v4653 = vunpack.c.h.b16 %v3996
    %v4654 = vunpack.c.l.b16 %v3997
    %v4655 = vunpack.c.l.b16 %v3998
    %v4656 = vunpack.c.h.b16 %v3998
    %v4657 = vunpack.c.l.b16 %v3999
    %v4658 = vunpack.c.h.b16 %v3999
    %v4659 = vunpack.c.l.b16 %v4000
    %v4660 = vunpack.c.h.b16 %v4000
    %v4661 = vunpack.c.l.b16 %v4001
    %v4662 = vunpack.c.l.b16 %v4002
    %v4663 = vunpack.c.h.b16 %v4002
    %v4664 = vunpack.c.l.b16 %v4003
    %v4665 = vunpack.c.h.b16 %v4003
    %v4666 = vunpack.c.l.b16 %v4004
    %v4667 = vunpack.c.h.b16 %v4004
    %v4668 = vunpack.c.l.b16 %v4005
    %v4669 = vunpack.c.l.b16 %v4006
    %v4670 = vunpack.c.h.b16 %v4006
    %v4671 = vunpack.c.l.b16 %v4007
    %v4672 = vunpack.c.h.b16 %v4007
    %v4673 = vunpack.c.l.b16 %v4008
    %v4674 = vunpack.c.h.b16 %v4008
    %v4675 = vunpack.c.l.b16 %v4009
    %v4676 = vunpack.c.l.b16 %v4010
    %v4677 = vunpack.c.h.b16 %v4010
    %v4678 = vunpack.c.l.b16 %v4011
    %v4679 = vunpack.c.h.b16 %v4011
    %v4680 = vunpack.c.l.b16 %v4012
    %v4681 = vunpack.c.h.b16 %v4012
    %v4682 = vunpack.c.l.b16 %v4013
    %v4683 = vunpack.c.l.b16 %v4014
    %v4684 = vunpack.c.h.b16 %v4014
    %v4685 = vunpack.c.l.b16 %v4015
    %v4686 = vunpack.c.h.b16 %v4015
    %v4687 = vunpack.c.l.b16 %v4016
    %v4688 = vunpack.c.h.b16 %v4016
    %v4689 = vunpack.c.l.b16 %v4017
    %v4690 = vunpack.c.l.b16 %v4018
    %v4691 = vunpack.c.h.b16 %v4018
    %v4692 = vunpack.c.l.b16 %v4019
    %v4693 = vunpack.c.h.b16 %v4019
    %v4694 = vunpack.c.l.b16 %v4020
    %v4695 = vunpack.c.h.b16 %v4020
    %v4696 = vunpack.c.l.b16 %v4021
    %v4697 = vunpack.c.l.b16 %v4022
    %v4698 = vunpack.c.h.b16 %v4022
    %v4699 = vunpack.c.l.b16 %v4023
    %v4700 = vunpack.c.h.b16 %v4023
    %v4701 = vunpack.c.l.b16 %v4024
    %v4702 = vunpack.c.h.b16 %v4024
    %v4703 = vunpack.c.l.b16 %v4025
    %v4704 = vunpack.c.l.b16 %v4026
    %v4705 = vunpack.c.h.b16 %v4026
    %v4706 = vunpack.c.l.b16 %v4027
    %v4707 = vunpack.c.h.b16 %v4027
    %v4708 = vunpack.c.l.b16 %v4028
    %v4709 = vunpack.c.h.b16 %v4028
    %v4710 = vunpack.c.l.b16 %v4029
    %v4711 = vunpack.c.l.b16 %v4030
    %v4712 = vunpack.c.h.b16 %v4030
    %v4713 = vunpack.c.l.b16 %v4031
    %v4714 = vunpack.c.h.b16 %v4031
    %v4715 = vunpack.c.l.b16 %v4032
    %v4716 = vunpack.c.h.b16 %v4032
    %v4717 = vunpack.c.l.b16 %v4033
    %v4718 = vunpack.c.l.b16 %v4034
    %v4719 = vunpack.c.h.b16 %v4034
    %v4720 = vunpack.c.l.b16 %v4035
    %v4721 = vunpack.c.h.b16 %v4035
    %v4722 = vunpack.c.l.b16 %v4036
    %v4723 = vunpack.c.h.b16 %v4036
    %v4724 = vunpack.c.l.b16 %v4037
    %v4725 = vunpack.c.l.b16 %v4038
    %v4726 = vunpack.c.h.b16 %v4038
    %v4727 = vunpack.c.l.b16 %v4039
    %v4728 = vunpack.c.h.b16 %v4039
    %v4729 = vunpack.c.l.b16 %v4040
    %v4730 = vunpack.c.h.b16 %v4040
    %v4731 = vunpack.c.l.b16 %v4041
    %v4732 = vunpack.c.l.b16 %v4042
    %v4733 = vunpack.c.h.b16 %v4042
    %v4734 = vunpack.c.l.b16 %v4043
    %v4735 = vunpack.c.h.b16 %v4043
    %v4736 = vunpack.c.l.b16 %v4044
    %v4737 = vunpack.c.h.b16 %v4044
    %v4738 = vunpack.c.l.b16 %v4045
    %v4739 = vunpack.c.l.b16 %v4046
    %v4740 = vunpack.c.h.b16 %v4046
    %v4741 = vunpack.c.l.b16 %v4047
    %v4742 = vunpack.c.h.b16 %v4047
    %v4743 = vunpack.c.l.b16 %v4048
    %v4744 = vunpack.c.h.b16 %v4048
    %v4745 = vunpack.c.l.b16 %v4049
    %v4746 = vunpack.c.l.b16 %v4050
    %v4747 = vunpack.c.h.b16 %v4050
    %v4748 = vunpack.c.l.b16 %v4051
    %v4749 = vunpack.c.h.b16 %v4051
    %v4750 = vunpack.c.l.b16 %v4052
    %v4751 = vunpack.c.h.b16 %v4052
    %v4752 = vunpack.c.l.b16 %v4053
    %v4753 = vunpack.c.l.b16 %v4054
    %v4754 = vunpack.c.h.b16 %v4054
    %v4755 = vunpack.c.l.b16 %v4055
    %v4756 = vunpack.c.h.b16 %v4055
    %v4757 = vunpack.c.l.b16 %v4056
    %v4758 = vunpack.c.h.b16 %v4056
    %v4759 = vunpack.c.l.b16 %v4057
    %v4760 = vunpack.c.l.b16 %v4058
    %v4761 = vunpack.c.h.b16 %v4058
    %v4762 = vunpack.c.l.b16 %v4059
    %v4763 = vunpack.c.h.b16 %v4059
    %v4764 = vunpack.c.l.b16 %v4060
    %v4765 = vunpack.c.h.b16 %v4060
    %v4766 = vunpack.c.l.b16 %v4061
    %v4767 = vunpack.c.l.b16 %v4062
    %v4768 = vunpack.c.h.b16 %v4062
    %v4769 = vunpack.c.l.b16 %v4063
    %v4770 = vunpack.c.h.b16 %v4063
    %v4771 = vunpack.c.l.b16 %v4064
    %v4772 = vunpack.c.h.b16 %v4064
    %v4773 = vunpack.c.l.b16 %v4065
    %v4774 = vunpack.c.l.b16 %v4066
    %v4775 = vunpack.c.h.b16 %v4066
    %v4776 = vunpack.c.l.b16 %v4067
    %v4777 = vunpack.c.h.b16 %v4067
    %v4778 = vunpack.c.l.b16 %v4068
    %v4779 = vunpack.c.h.b16 %v4068
    %v4780 = vunpack.c.l.b16 %v4069
    %v4781 = vunpack.c.l.b16 %v4070
    %v4782 = vunpack.c.h.b16 %v4070
    %v4783 = vunpack.c.l.b16 %v4071
    %v4784 = vunpack.c.h.b16 %v4071
    %v4785 = vunpack.c.l.b16 %v4072
    %v4786 = vunpack.c.h.b16 %v4072
    %v4787 = vunpack.c.l.b16 %v4073
    %v4788 = vunpack.c.l.b16 %v4074
    %v4789 = vunpack.c.h.b16 %v4074
    %v4790 = vunpack.c.l.b16 %v4075
    %v4791 = vunpack.c.h.b16 %v4075
    %v4792 = vunpack.c.l.b16 %v4076
    %v4793 = vunpack.c.h.b16 %v4076
    %v4794 = vunpack.c.l.b16 %v4077
    %v4795 = vunpack.c.l.b16 %v4078
    %v4796 = vunpack.c.h.b16 %v4078
    %v4797 = vunpack.c.l.b16 %v4079
    %v4798 = vunpack.c.h.b16 %v4079
    %v4799 = vunpack.c.l.b16 %v4080
    %v4800 = vunpack.c.h.b16 %v4080
    %v4801 = vunpack.c.l.b16 %v4081
    %v4802 = vunpack.c.l.b16 %v4082
    %v4803 = vunpack.c.h.b16 %v4082
    %v4804 = vunpack.c.l.b16 %v4083
    %v4805 = vunpack.c.h.b16 %v4083
    %v4806 = vunpack.c.l.b16 %v4084
    %v4807 = vunpack.c.h.b16 %v4084
    %v4808 = vunpack.c.l.b16 %v4085
    %v4809 = vunpack.c.l.b16 %v4086
    %v4810 = vunpack.c.h.b16 %v4086
    %v4811 = vunpack.c.l.b16 %v4087
    %v4812 = vunpack.c.h.b16 %v4087
    %v4813 = vunpack.c.l.b16 %v4088
    %v4814 = vunpack.c.h.b16 %v4088
    %v4815 = vunpack.c.l.b16 %v4089
    %v4816 = vunpack.c.l.b16 %v4090
    %v4817 = vunpack.c.h.b16 %v4090
    %v4818 = vunpack.c.l.b16 %v4091
    %v4819 = vunpack.c.h.b16 %v4091
    %v4820 = vunpack.c.l.b16 %v4092
    %v4821 = vunpack.c.h.b16 %v4092
    %v4822 = vunpack.c.l.b16 %v4093
    %v4823 = vunpack.c.l.b16 %v4094
    %v4824 = vunpack.c.h.b16 %v4094
    %v4825 = vunpack.c.l.b16 %v4095
    %v4826 = vunpack.c.h.b16 %v4095
    %v4827 = vunpack.c.l.b16 %v4096
    %v4828 = vunpack.c.h.b16 %v4096
    %v4829 = vunpack.c.l.b16 %v4097
    %v4830 = vunpack.c.l.b16 %v4098
    %v4831 = vunpack.c.h.b16 %v4098
    %v4832 = vunpack.c.l.b16 %v4099
    %v4833 = vunpack.c.h.b16 %v4099
    %v4834 = vunpack.c.l.b16 %v4100
    %v4835 = vunpack.c.h.b16 %v4100
    %v4836 = vunpack.c.l.b16 %v4101
    %v4837 = vunpack.c.l.b16 %v4102
    %v4838 = vunpack.c.h.b16 %v4102
    %v4839 = vunpack.c.l.b16 %v4103
    %v4840 = vunpack.c.h.b16 %v4103
    %v4841 = vunpack.c.l.b16 %v4104
    %v4842 = vunpack.c.h.b16 %v4104
    %v4843 = vunpack.c.l.b16 %v4105
    %v4844 = vunpack.c.l.b16 %v4106
    %v4845 = vunpack.c.h.b16 %v4106
    %v4846 = vunpack.c.l.b16 %v4107
    %v4847 = vunpack.c.h.b16 %v4107
    %v4848 = vunpack.c.l.b16 %v4108
    %v4849 = vunpack.c.h.b16 %v4108
    %v4850 = vunpack.c.l.b16 %v4109
    %v4851 = vpack.c.b16 %v4410, %v4403
    %v4852 = vpack.c.b16 %v4411, %v4404
    %v4853 = vpack.c.b16 %v4412, %v4405
    %v4854 = vpack.c.b16 %v4413, %v4406
    %v4855 = vpack.c.b16 %v4414, %v4407
    %v4856 = vpack.c.b16 %v4415, %v4408
    %v4857 = vpack.c.b16 %v4416, %v4409
    %v4858 = vpack.c.b16 %v4424, %v4417
    %v4859 = vpack.c.b16 %v4425, %v4418
    %v4860 = vpack.c.b16 %v4426, %v4419
    %v4861 = vpack.c.b16 %v4427, %v4420
    %v4862 = vpack.c.b16 %v4428, %v4421
    %v4863 = vpack.c.b16 %v4429, %v4422
    %v4864 = vpack.c.b16 %v4430, %v4423
    %v4865 = vpack.c.b16 %v4438, %v4431
    %v4866 = vpack.c.b16 %v4439, %v4432
    %v4867 = vpack.c.b16 %v4440, %v4433
    %v4868 = vpack.c.b16 %v4441, %v4434
    %v4869 = vpack.c.b16 %v4442, %v4435
    %v4870 = vpack.c.b16 %v4443, %v4436
    %v4871 = vpack.c.b16 %v4444, %v4437
    %v4872 = vpack.c.b16 %v4452, %v4445
    %v4873 = vpack.c.b16 %v4453, %v4446
    %v4874 = vpack.c.b16 %v4454, %v4447
    %v4875 = vpack.c.b16 %v4455, %v4448
    %v4876 = vpack.c.b16 %v4456, %v4449
    %v4877 = vpack.c.b16 %v4457, %v4450
    %v4878 = vpack.c.b16 %v4458, %v4451
    %v4879 = vpack.c.b16 %v4466, %v4459
    %v4880 = vpack.c.b16 %v4467, %v4460
    %v4881 = vpack.c.b16 %v4468, %v4461
    %v4882 = vpack.c.b16 %v4469, %v4462
    %v4883 = vpack.c.b16 %v4470, %v4463
    %v4884 = vpack.c.b16 %v4471, %v4464
    %v4885 = vpack.c.b16 %v4472, %v4465
    %v4886 = vpack.c.b16 %v4480, %v4473
    %v4887 = vpack.c.b16 %v4481, %v4474
    %v4888 = vpack.c.b16 %v4482, %v4475
    %v4889 = vpack.c.b16 %v4483, %v4476
    %v4890 = vpack.c.b16 %v4484, %v4477
    %v4891 = vpack.c.b16 %v4485, %v4478
    %v4892 = vpack.c.b16 %v4486, %v4479
    %v4893 = vpack.c.b16 %v4494, %v4487
    %v4894 = vpack.c.b16 %v4495, %v4488
    %v4895 = vpack.c.b16 %v4496, %v4489
    %v4896 = vpack.c.b16 %v4497, %v4490
    %v4897 = vpack.c.b16 %v4498, %v4491
    %v4898 = vpack.c.b16 %v4499, %v4492
    %v4899 = vpack.c.b16 %v4500, %v4493
    %v4900 = vpack.c.b16 %v4508, %v4501
    %v4901 = vpack.c.b16 %v4509, %v4502
    %v4902 = vpack.c.b16 %v4510, %v4503
    %v4903 = vpack.c.b16 %v4511, %v4504
    %v4904 = vpack.c.b16 %v4512, %v4505
    %v4905 = vpack.c.b16 %v4513, %v4506
    %v4906 = vpack.c.b16 %v4514, %v4507
    %v4907 = vpack.c.b16 %v4522, %v4515
    %v4908 = vpack.c.b16 %v4523, %v4516
    %v4909 = vpack.c.b16 %v4524, %v4517
    %v4910 = vpack.c.b16 %v4525, %v4518
    %v4911 = vpack.c.b16 %v4526, %v4519
    %v4912 = vpack.c.b16 %v4527, %v4520
    %v4913 = vpack.c.b16 %v4528, %v4521
    %v4914 = vpack.c.b16 %v4536, %v4529
    %v4915 = vpack.c.b16 %v4537, %v4530
    %v4916 = vpack.c.b16 %v4538, %v4531
    %v4917 = vpack.c.b16 %v4539, %v4532
    %v4918 = vpack.c.b16 %v4540, %v4533
    %v4919 = vpack.c.b16 %v4541, %v4534
    %v4920 = vpack.c.b16 %v4542, %v4535
    %v4921 = vpack.c.b16 %v4550, %v4543
    %v4922 = vpack.c.b16 %v4551, %v4544
    %v4923 = vpack.c.b16 %v4552, %v4545
    %v4924 = vpack.c.b16 %v4553, %v4546
    %v4925 = vpack.c.b16 %v4554, %v4547
    %v4926 = vpack.c.b16 %v4555, %v4548
    %v4927 = vpack.c.b16 %v4556, %v4549
    %v4928 = vpack.c.b16 %v4564, %v4557
    %v4929 = vpack.c.b16 %v4565, %v4558
    %v4930 = vpack.c.b16 %v4566, %v4559
    %v4931 = vpack.c.b16 %v4567, %v4560
    %v4932 = vpack.c.b16 %v4568, %v4561
    %v4933 = vpack.c.b16 %v4569, %v4562
    %v4934 = vpack.c.b16 %v4570, %v4563
    %v4935 = vpack.c.b16 %v4578, %v4571
    %v4936 = vpack.c.b16 %v4579, %v4572
    %v4937 = vpack.c.b16 %v4580, %v4573
    %v4938 = vpack.c.b16 %v4581, %v4574
    %v4939 = vpack.c.b16 %v4582, %v4575
    %v4940 = vpack.c.b16 %v4583, %v4576
    %v4941 = vpack.c.b16 %v4584, %v4577
    %v4942 = vpack.c.b16 %v4592, %v4585
    %v4943 = vpack.c.b16 %v4593, %v4586
    %v4944 = vpack.c.b16 %v4594, %v4587
    %v4945 = vpack.c.b16 %v4595, %v4588
    %v4946 = vpack.c.b16 %v4596, %v4589
    %v4947 = vpack.c.b16 %v4597, %v4590
    %v4948 = vpack.c.b16 %v4598, %v4591
    %v4949 = vpack.c.b16 %v4606, %v4599
    %v4950 = vpack.c.b16 %v4607, %v4600
    %v4951 = vpack.c.b16 %v4608, %v4601
    %v4952 = vpack.c.b16 %v4609, %v4602
    %v4953 = vpack.c.b16 %v4610, %v4603
    %v4954 = vpack.c.b16 %v4611, %v4604
    %v4955 = vpack.c.b16 %v4612, %v4605
    %v4956 = vpack.c.b16 %v4620, %v4613
    %v4957 = vpack.c.b16 %v4621, %v4614
    %v4958 = vpack.c.b16 %v4622, %v4615
    %v4959 = vpack.c.b16 %v4623, %v4616
    %v4960 = vpack.c.b16 %v4624, %v4617
    %v4961 = vpack.c.b16 %v4625, %v4618
    %v4962 = vpack.c.b16 %v4626, %v4619
    %v4963 = vpack.c.b16 %v4634, %v4627
    %v4964 = vpack.c.b16 %v4635, %v4628
    %v4965 = vpack.c.b16 %v4636, %v4629
    %v4966 = vpack.c.b16 %v4637, %v4630
    %v4967 = vpack.c.b16 %v4638, %v4631
    %v4968 = vpack.c.b16 %v4639, %v4632
    %v4969 = vpack.c.b16 %v4640, %v4633
    %v4970 = vpack.c.b16 %v4648, %v4641
    %v4971 = vpack.c.b16 %v4649, %v4642
    %v4972 = vpack.c.b16 %v4650, %v4643
    %v4973 = vpack.c.b16 %v4651, %v4644
    %v4974 = vpack.c.b16 %v4652, %v4645
    %v4975 = vpack.c.b16 %v4653, %v4646
    %v4976 = vpack.c.b16 %v4654, %v4647
    %v4977 = vpack.c.b16 %v4662, %v4655
    %v4978 = vpack.c.b16 %v4663, %v4656
    %v4979 = vpack.c.b16 %v4664, %v4657
    %v4980 = vpack.c.b16 %v4665, %v4658
    %v4981 = vpack.c.b16 %v4666, %v4659
    %v4982 = vpack.c.b16 %v4667, %v4660
    %v4983 = vpack.c.b16 %v4668, %v4661
    %v4984 = vpack.c.b16 %v4676, %v4669
    %v4985 = vpack.c.b16 %v4677, %v4670
    %v4986 = vpack.c.b16 %v4678, %v4671
    %v4987 = vpack.c.b16 %v4679, %v4672
    %v4988 = vpack.c.b16 %v4680, %v4673
    %v4989 = vpack.c.b16 %v4681, %v4674
    %v4990 = vpack.c.b16 %v4682, %v4675
    %v4991 = vpack.c.b16 %v4690, %v4683
    %v4992 = vpack.c.b16 %v4691, %v4684
    %v4993 = vpack.c.b16 %v4692, %v4685
    %v4994 = vpack.c.b16 %v4693, %v4686
    %v4995 = vpack.c.b16 %v4694, %v4687
    %v4996 = vpack.c.b16 %v4695, %v4688
    %v4997 = vpack.c.b16 %v4696, %v4689
    %v4998 = vpack.c.b16 %v4704, %v4697
    %v4999 = vpack.c.b16 %v4705, %v4698
    %v5000 = vpack.c.b16 %v4706, %v4699
    %v5001 = vpack.c.b16 %v4707, %v4700
    %v5002 = vpack.c.b16 %v4708, %v4701
    %v5003 = vpack.c.b16 %v4709, %v4702
    %v5004 = vpack.c.b16 %v4710, %v4703
    %v5005 = vpack.c.b16 %v4718, %v4711
    %v5006 = vpack.c.b16 %v4719, %v4712
    %v5007 = vpack.c.b16 %v4720, %v4713
    %v5008 = vpack.c.b16 %v4721, %v4714
    %v5009 = vpack.c.b16 %v4722, %v4715
    %v5010 = vpack.c.b16 %v4723, %v4716
    %v5011 = vpack.c.b16 %v4724, %v4717
    %v5012 = vpack.c.b16 %v4732, %v4725
    %v5013 = vpack.c.b16 %v4733, %v4726
    %v5014 = vpack.c.b16 %v4734, %v4727
    %v5015 = vpack.c.b16 %v4735, %v4728
    %v5016 = vpack.c.b16 %v4736, %v4729
    %v5017 = vpack.c.b16 %v4737, %v4730
    %v5018 = vpack.c.b16 %v4738, %v4731
    %v5019 = vpack.c.b16 %v4746, %v4739
    %v5020 = vpack.c.b16 %v4747, %v4740
    %v5021 = vpack.c.b16 %v4748, %v4741
    %v5022 = vpack.c.b16 %v4749, %v4742
    %v5023 = vpack.c.b16 %v4750, %v4743
    %v5024 = vpack.c.b16 %v4751, %v4744
    %v5025 = vpack.c.b16 %v4752, %v4745
    %v5026 = vpack.c.b16 %v4760, %v4753
    %v5027 = vpack.c.b16 %v4761, %v4754
    %v5028 = vpack.c.b16 %v4762, %v4755
    %v5029 = vpack.c.b16 %v4763, %v4756
    %v5030 = vpack.c.b16 %v4764, %v4757
    %v5031 = vpack.c.b16 %v4765, %v4758
    %v5032 = vpack.c.b16 %v4766, %v4759
    %v5033 = vpack.c.b16 %v4774, %v4767
    %v5034 = vpack.c.b16 %v4775, %v4768
    %v5035 = vpack.c.b16 %v4776, %v4769
    %v5036 = vpack.c.b16 %v4777, %v4770
    %v5037 = vpack.c.b16 %v4778, %v4771
    %v5038 = vpack.c.b16 %v4779, %v4772
    %v5039 = vpack.c.b16 %v4780, %v4773
    %v5040 = vpack.c.b16 %v4788, %v4781
    %v5041 = vpack.c.b16 %v4789, %v4782
    %v5042 = vpack.c.b16 %v4790, %v4783
    %v5043 = vpack.c.b16 %v4791, %v4784
    %v5044 = vpack.c.b16 %v4792, %v4785
    %v5045 = vpack.c.b16 %v4793, %v4786
    %v5046 = vpack.c.b16 %v4794, %v4787
    %v5047 = vpack.c.b16 %v4802, %v4795
    %v5048 = vpack.c.b16 %v4803, %v4796
    %v5049 = vpack.c.b16 %v4804, %v4797
    %v5050 = vpack.c.b16 %v4805, %v4798
    %v5051 = vpack.c.b16 %v4806, %v4799
    %v5052 = vpack.c.b16 %v4807, %v4800
    %v5053 = vpack.c.b16 %v4808, %v4801
    %v5054 = vpack.c.b16 %v4816, %v4809
    %v5055 = vpack.c.b16 %v4817, %v4810
    %v5056 = vpack.c.b16 %v4818, %v4811
    %v5057 = vpack.c.b16 %v4819, %v4812
    %v5058 = vpack.c.b16 %v4820, %v4813
    %v5059 = vpack.c.b16 %v4821, %v4814
    %v5060 = vpack.c.b16 %v4822, %v4815
    %v5061 = vpack.c.b16 %v4830, %v4823
    %v5062 = vpack.c.b16 %v4831, %v4824
    %v5063 = vpack.c.b16 %v4832, %v4825
    %v5064 = vpack.c.b16 %v4833, %v4826
    %v5065 = vpack.c.b16 %v4834, %v4827
    %v5066 = vpack.c.b16 %v4835, %v4828
    %v5067 = vpack.c.b16 %v4836, %v4829
    %v5068 = vpack.c.b16 %v4844, %v4837
    %v5069 = vpack.c.b16 %v4845, %v4838
    %v5070 = vpack.c.b16 %v4846, %v4839
    %v5071 = vpack.c.b16 %v4847, %v4840
    %v5072 = vpack.c.b16 %v4848, %v4841
    %v5073 = vpack.c.b16 %v4849, %v4842
    %v5074 = vpack.c.b16 %v4850, %v4843
    %5299 = vmatprep.subr.bf16.mxu0 %v4901
    %5300 = vmatpush1.bf16.msra.mxu0 %v4900
    %5301 = vmatprep.subr.bf16.mxu0 %v4894
    %5302 = vmatpush1.bf16.msra.mxu0 %v4893
    %5303 = vmatprep.subr.bf16.mxu0 %v4887
    %5304 = vmatpush1.bf16.msra.mxu0 %v4886
    %5305 = vmatprep.subr.bf16.mxu0 %v4880
    %5306 = vmatpush1.bf16.msra.mxu0 %v4879
    %5307 = vmatprep.subr.bf16.mxu0 %v4873
    %5308 = vmatpush1.bf16.msra.mxu0 %v4872
    %5309 = vmatprep.subr.bf16.mxu0 %v4866
    %5310 = vmatpush1.bf16.msra.mxu0 %v4865
    %5311 = vmatprep.subr.bf16.mxu0 %v4859
    %5312 = vmatpush1.bf16.msra.mxu0 %v4858
    %5313 = vmatprep.subr.bf16.mxu0 %v4852
    %5314 = vmatpush1.bf16.msra.mxu0 %v4851
    %5315 = vmatprep.subr.bf16.mxu0 %v4957
    %5316 = vmatpush2.bf16.msra.mxu0 %v4956
    %5317 = vmatprep.subr.bf16.mxu0 %v4950
    %5318 = vmatpush2.bf16.msra.mxu0 %v4949
    %5319 = vmatprep.subr.bf16.mxu0 %v4943
    %5320 = vmatpush2.bf16.msra.mxu0 %v4942
    %5321 = vmatprep.subr.bf16.mxu0 %v4936
    %5322 = vmatpush2.bf16.msra.mxu0 %v4935
    %5323 = vmatprep.subr.bf16.mxu0 %v4929
    %5324 = vmatpush2.bf16.msra.mxu0 %v4928
    %5325 = vmatprep.subr.bf16.mxu0 %v4922
    %5326 = vmatpush2.bf16.msra.mxu0 %v4921
    %5327 = vmatprep.subr.bf16.mxu0 %v4915
    %5328 = vmatpush2.bf16.msra.mxu0 %v4914
    %5329 = vmatprep.subr.bf16.mxu0 %v4908
    %5330 = vmatpush2.bf16.msra.mxu0 %v4907
    %5331 = vmatprep.mubr.bf16.mxu0 %v3851
    %5332 = vmatmul.mubr.bf16.gmra.mxu0 %v3850
    %v5333 = vpop.f32.mrf.mxu0
    %v5334 = vadd.f32 %v4115, %v5333
    %v5335 = vpop.f32.mrf.mxu0
    %v5336 = vadd.f32 %v4119, %v5335
    %v5337 = vpop.f32.mrf.mxu0
    %v5338 = vadd.f32 %v4115, %v5337
    %v5339 = vpop.f32.mrf.mxu0
    %v5340 = vadd.f32 %v4119, %v5339
    %5341 = vdwg.mxu0
    %5342 = vmatprep.subr.bf16.mxu0 %v5013
    %5343 = vmatpush1.bf16.msra.mxu0 %v5012
    %5344 = vmatprep.subr.bf16.mxu0 %v5006
    %5345 = vmatpush1.bf16.msra.mxu0 %v5005
    %5346 = vmatprep.subr.bf16.mxu0 %v4999
    %5347 = vmatpush1.bf16.msra.mxu0 %v4998
    %5348 = vmatprep.subr.bf16.mxu0 %v4992
    %5349 = vmatpush1.bf16.msra.mxu0 %v4991
    %5350 = vmatprep.subr.bf16.mxu0 %v4985
    %5351 = vmatpush1.bf16.msra.mxu0 %v4984
    %5352 = vmatprep.subr.bf16.mxu0 %v4978
    %5353 = vmatpush1.bf16.msra.mxu0 %v4977
    %5354 = vmatprep.subr.bf16.mxu0 %v4971
    %5355 = vmatpush1.bf16.msra.mxu0 %v4970
    %5356 = vmatprep.subr.bf16.mxu0 %v4964
    %5357 = vmatpush1.bf16.msra.mxu0 %v4963
    %5358 = vmatprep.subr.bf16.mxu0 %v5069
    %5359 = vmatpush2.bf16.msra.mxu0 %v5068
    %5360 = vmatprep.subr.bf16.mxu0 %v5062
    %5361 = vmatpush2.bf16.msra.mxu0 %v5061
    %5362 = vmatprep.subr.bf16.mxu0 %v5055
    %5363 = vmatpush2.bf16.msra.mxu0 %v5054
    %5364 = vmatprep.subr.bf16.mxu0 %v5048
    %5365 = vmatpush2.bf16.msra.mxu0 %v5047
    %5366 = vmatprep.subr.bf16.mxu0 %v5041
    %5367 = vmatpush2.bf16.msra.mxu0 %v5040
    %5368 = vmatprep.subr.bf16.mxu0 %v5034
    %5369 = vmatpush2.bf16.msra.mxu0 %v5033
    %5370 = vmatprep.subr.bf16.mxu0 %v5027
    %5371 = vmatpush2.bf16.msra.mxu0 %v5026
    %5372 = vmatprep.subr.bf16.mxu0 %v5020
    %5373 = vmatpush2.bf16.msra.mxu0 %v5019
    %5374 = vmatprep.mubr.bf16.mxu0 %v3853
    %5375 = vmatmul.mubr.bf16.gmra.mxu0 %v3852
    %v5376 = vpop.f32.mrf.mxu0
    %v5377 = vadd.f32 %v5334, %v5376
    %v5378 = vpop.f32.mrf.mxu0
    %v5379 = vadd.f32 %v5336, %v5378
    %v5380 = vpop.f32.mrf.mxu0
    %v5381 = vadd.f32 %v5338, %v5380
    %v5382 = vpop.f32.mrf.mxu0
    %v5383 = vadd.f32 %v5340, %v5382
    %5384 = vdwg.mxu0
    %5385 = vmatprep.subr.bf16.mxu0 %v4903
    %5386 = vmatpush1.bf16.msra.mxu0 %v4902
    %5387 = vmatprep.subr.bf16.mxu0 %v4896
    %5388 = vmatpush1.bf16.msra.mxu0 %v4895
    %5389 = vmatprep.subr.bf16.mxu0 %v4889
    %5390 = vmatpush1.bf16.msra.mxu0 %v4888
    %5391 = vmatprep.subr.bf16.mxu0 %v4882
    %5392 = vmatpush1.bf16.msra.mxu0 %v4881
    %5393 = vmatprep.subr.bf16.mxu0 %v4875
    %5394 = vmatpush1.bf16.msra.mxu0 %v4874
    %5395 = vmatprep.subr.bf16.mxu0 %v4868
    %5396 = vmatpush1.bf16.msra.mxu0 %v4867
    %5397 = vmatprep.subr.bf16.mxu0 %v4861
    %5398 = vmatpush1.bf16.msra.mxu0 %v4860
    %5399 = vmatprep.subr.bf16.mxu0 %v4854
    %5400 = vmatpush1.bf16.msra.mxu0 %v4853
    %5401 = vmatprep.subr.bf16.mxu0 %v4959
    %5402 = vmatpush2.bf16.msra.mxu0 %v4958
    %5403 = vmatprep.subr.bf16.mxu0 %v4952
    %5404 = vmatpush2.bf16.msra.mxu0 %v4951
    %5405 = vmatprep.subr.bf16.mxu0 %v4945
    %5406 = vmatpush2.bf16.msra.mxu0 %v4944
    %5407 = vmatprep.subr.bf16.mxu0 %v4938
    %5408 = vmatpush2.bf16.msra.mxu0 %v4937
    %5409 = vmatprep.subr.bf16.mxu0 %v4931
    %5410 = vmatpush2.bf16.msra.mxu0 %v4930
    %5411 = vmatprep.subr.bf16.mxu0 %v4924
    %5412 = vmatpush2.bf16.msra.mxu0 %v4923
    %5413 = vmatprep.subr.bf16.mxu0 %v4917
    %5414 = vmatpush2.bf16.msra.mxu0 %v4916
    %5415 = vmatprep.subr.bf16.mxu0 %v4910
    %5416 = vmatpush2.bf16.msra.mxu0 %v4909
    %5417 = vmatprep.mubr.bf16.mxu0 %v3851
    %5418 = vmatmul.mubr.bf16.gmra.mxu0 %v3850
    %v5419 = vpop.f32.mrf.mxu0
    %v5420 = vadd.f32 %v4123, %v5419
    %v5421 = vpop.f32.mrf.mxu0
    %v5422 = vadd.f32 %v4127, %v5421
    %v5423 = vpop.f32.mrf.mxu0
    %v5424 = vadd.f32 %v4123, %v5423
    %v5425 = vpop.f32.mrf.mxu0
    %v5426 = vadd.f32 %v4127, %v5425
    %5427 = vdwg.mxu0
    %5428 = vmatprep.subr.bf16.mxu0 %v5015
    %5429 = vmatpush1.bf16.msra.mxu0 %v5014
    %5430 = vmatprep.subr.bf16.mxu0 %v5008
    %5431 = vmatpush1.bf16.msra.mxu0 %v5007
    %5432 = vmatprep.subr.bf16.mxu0 %v5001
    %5433 = vmatpush1.bf16.msra.mxu0 %v5000
    %5434 = vmatprep.subr.bf16.mxu0 %v4994
    %5435 = vmatpush1.bf16.msra.mxu0 %v4993
    %5436 = vmatprep.subr.bf16.mxu0 %v4987
    %5437 = vmatpush1.bf16.msra.mxu0 %v4986
    %5438 = vmatprep.subr.bf16.mxu0 %v4980
    %5439 = vmatpush1.bf16.msra.mxu0 %v4979
    %5440 = vmatprep.subr.bf16.mxu0 %v4973
    %5441 = vmatpush1.bf16.msra.mxu0 %v4972
    %5442 = vmatprep.subr.bf16.mxu0 %v4966
    %5443 = vmatpush1.bf16.msra.mxu0 %v4965
    %5444 = vmatprep.subr.bf16.mxu0 %v5071
    %5445 = vmatpush2.bf16.msra.mxu0 %v5070
    %5446 = vmatprep.subr.bf16.mxu0 %v5064
    %5447 = vmatpush2.bf16.msra.mxu0 %v5063
    %5448 = vmatprep.subr.bf16.mxu0 %v5057
    %5449 = vmatpush2.bf16.msra.mxu0 %v5056
    %5450 = vmatprep.subr.bf16.mxu0 %v5050
    %5451 = vmatpush2.bf16.msra.mxu0 %v5049
    %5452 = vmatprep.subr.bf16.mxu0 %v5043
    %5453 = vmatpush2.bf16.msra.mxu0 %v5042
    %5454 = vmatprep.subr.bf16.mxu0 %v5036
    %5455 = vmatpush2.bf16.msra.mxu0 %v5035
    %5456 = vmatprep.subr.bf16.mxu0 %v5029
    %5457 = vmatpush2.bf16.msra.mxu0 %v5028
    %5458 = vmatprep.subr.bf16.mxu0 %v5022
    %5459 = vmatpush2.bf16.msra.mxu0 %v5021
    %5460 = vmatprep.mubr.bf16.mxu0 %v3853
    %5461 = vmatmul.mubr.bf16.gmra.mxu0 %v3852
    %v5462 = vpop.f32.mrf.mxu0
    %v5463 = vadd.f32 %v5420, %v5462
    %v5464 = vpop.f32.mrf.mxu0
    %v5465 = vadd.f32 %v5422, %v5464
    %v5466 = vpop.f32.mrf.mxu0
    %v5467 = vadd.f32 %v5424, %v5466
    %v5468 = vpop.f32.mrf.mxu0
    %v5469 = vadd.f32 %v5426, %v5468
    %5470 = vdwg.mxu0
    %5471 = vmatprep.subr.bf16.mxu0 %v4905
    %5472 = vmatpush1.bf16.msra.mxu0 %v4904
    %5473 = vmatprep.subr.bf16.mxu0 %v4898
    %5474 = vmatpush1.bf16.msra.mxu0 %v4897
    %5475 = vmatprep.subr.bf16.mxu0 %v4891
    %5476 = vmatpush1.bf16.msra.mxu0 %v4890
    %5477 = vmatprep.subr.bf16.mxu0 %v4884
    %5478 = vmatpush1.bf16.msra.mxu0 %v4883
    %5479 = vmatprep.subr.bf16.mxu0 %v4877
    %5480 = vmatpush1.bf16.msra.mxu0 %v4876
    %5481 = vmatprep.subr.bf16.mxu0 %v4870
    %5482 = vmatpush1.bf16.msra.mxu0 %v4869
    %5483 = vmatprep.subr.bf16.mxu0 %v4863
    %5484 = vmatpush1.bf16.msra.mxu0 %v4862
    %5485 = vmatprep.subr.bf16.mxu0 %v4856
    %5486 = vmatpush1.bf16.msra.mxu0 %v4855
    %5487 = vmatprep.subr.bf16.mxu0 %v4961
    %5488 = vmatpush2.bf16.msra.mxu0 %v4960
    %5489 = vmatprep.subr.bf16.mxu0 %v4954
    %5490 = vmatpush2.bf16.msra.mxu0 %v4953
    %5491 = vmatprep.subr.bf16.mxu0 %v4947
    %5492 = vmatpush2.bf16.msra.mxu0 %v4946
    %5493 = vmatprep.subr.bf16.mxu0 %v4940
    %5494 = vmatpush2.bf16.msra.mxu0 %v4939
    %5495 = vmatprep.subr.bf16.mxu0 %v4933
    %5496 = vmatpush2.bf16.msra.mxu0 %v4932
    %5497 = vmatprep.subr.bf16.mxu0 %v4926
    %5498 = vmatpush2.bf16.msra.mxu0 %v4925
    %5499 = vmatprep.subr.bf16.mxu0 %v4919
    %5500 = vmatpush2.bf16.msra.mxu0 %v4918
    %5501 = vmatprep.subr.bf16.mxu0 %v4912
    %5502 = vmatpush2.bf16.msra.mxu0 %v4911
    %5503 = vmatprep.mubr.bf16.mxu0 %v3851
    %5504 = vmatmul.mubr.bf16.gmra.mxu0 %v3850
    %v5505 = vpop.f32.mrf.mxu0
    %v5506 = vadd.f32 %v4131, %v5505
    %v5507 = vpop.f32.mrf.mxu0
    %v5508 = vadd.f32 %v4135, %v5507
    %v5509 = vpop.f32.mrf.mxu0
    %v5510 = vadd.f32 %v4131, %v5509
    %v5511 = vpop.f32.mrf.mxu0
    %v5512 = vadd.f32 %v4135, %v5511
    %5513 = vdwg.mxu0
    %5514 = vmatprep.subr.bf16.mxu0 %v5017
    %5515 = vmatpush1.bf16.msra.mxu0 %v5016
    %5516 = vmatprep.subr.bf16.mxu0 %v5010
    %5517 = vmatpush1.bf16.msra.mxu0 %v5009
    %5518 = vmatprep.subr.bf16.mxu0 %v5003
    %5519 = vmatpush1.bf16.msra.mxu0 %v5002
    %5520 = vmatprep.subr.bf16.mxu0 %v4996
    %5521 = vmatpush1.bf16.msra.mxu0 %v4995
    %5522 = vmatprep.subr.bf16.mxu0 %v4989
    %5523 = vmatpush1.bf16.msra.mxu0 %v4988
    %5524 = vmatprep.subr.bf16.mxu0 %v4982
    %5525 = vmatpush1.bf16.msra.mxu0 %v4981
    %5526 = vmatprep.subr.bf16.mxu0 %v4975
    %5527 = vmatpush1.bf16.msra.mxu0 %v4974
    %5528 = vmatprep.subr.bf16.mxu0 %v4968
    %5529 = vmatpush1.bf16.msra.mxu0 %v4967
    %5530 = vmatprep.subr.bf16.mxu0 %v5073
    %5531 = vmatpush2.bf16.msra.mxu0 %v5072
    %5532 = vmatprep.subr.bf16.mxu0 %v5066
    %5533 = vmatpush2.bf16.msra.mxu0 %v5065
    %5534 = vmatprep.subr.bf16.mxu0 %v5059
    %5535 = vmatpush2.bf16.msra.mxu0 %v5058
    %5536 = vmatprep.subr.bf16.mxu0 %v5052
    %5537 = vmatpush2.bf16.msra.mxu0 %v5051
    %5538 = vmatprep.subr.bf16.mxu0 %v5045
    %5539 = vmatpush2.bf16.msra.mxu0 %v5044
    %5540 = vmatprep.subr.bf16.mxu0 %v5038
    %5541 = vmatpush2.bf16.msra.mxu0 %v5037
    %5542 = vmatprep.subr.bf16.mxu0 %v5031
    %5543 = vmatpush2.bf16.msra.mxu0 %v5030
    %5544 = vmatprep.subr.bf16.mxu0 %v5024
    %5545 = vmatpush2.bf16.msra.mxu0 %v5023
    %5546 = vmatprep.mubr.bf16.mxu0 %v3853
    %5547 = vmatmul.mubr.bf16.gmra.mxu0 %v3852
    %v5548 = vpop.f32.mrf.mxu0
    %v5549 = vadd.f32 %v5506, %v5548
    %v5550 = vpop.f32.mrf.mxu0
    %v5551 = vadd.f32 %v5508, %v5550
    %v5552 = vpop.f32.mrf.mxu0
    %v5553 = vadd.f32 %v5510, %v5552
    %v5554 = vpop.f32.mrf.mxu0
    %v5555 = vadd.f32 %v5512, %v5554
    %5556 = vdwg.mxu0
    %5557 = vmatprep.subr.bf16.mxu0 0
    %5558 = vmatpush1.bf16.msra.mxu0 %v4906
    %5559 = vmatprep.subr.bf16.mxu0 0
    %5560 = vmatpush1.bf16.msra.mxu0 %v4899
    %5561 = vmatprep.subr.bf16.mxu0 0
    %5562 = vmatpush1.bf16.msra.mxu0 %v4892
    %5563 = vmatprep.subr.bf16.mxu0 0
    %5564 = vmatpush1.bf16.msra.mxu0 %v4885
    %5565 = vmatprep.subr.bf16.mxu0 0
    %5566 = vmatpush1.bf16.msra.mxu0 %v4878
    %5567 = vmatprep.subr.bf16.mxu0 0
    %5568 = vmatpush1.bf16.msra.mxu0 %v4871
    %5569 = vmatprep.subr.bf16.mxu0 0
    %5570 = vmatpush1.bf16.msra.mxu0 %v4864
    %5571 = vmatprep.subr.bf16.mxu0 0
    %5572 = vmatpush1.bf16.msra.mxu0 %v4857
    %5573 = vmatprep.subr.bf16.mxu0 0
    %5574 = vmatpush2.bf16.msra.mxu0 %v4962
    %5575 = vmatprep.subr.bf16.mxu0 0
    %5576 = vmatpush2.bf16.msra.mxu0 %v4955
    %5577 = vmatprep.subr.bf16.mxu0 0
    %5578 = vmatpush2.bf16.msra.mxu0 %v4948
    %5579 = vmatprep.subr.bf16.mxu0 0
    %5580 = vmatpush2.bf16.msra.mxu0 %v4941
    %5581 = vmatprep.subr.bf16.mxu0 0
    %5582 = vmatpush2.bf16.msra.mxu0 %v4934
    %5583 = vmatprep.subr.bf16.mxu0 0
    %5584 = vmatpush2.bf16.msra.mxu0 %v4927
    %5585 = vmatprep.subr.bf16.mxu0 0
    %5586 = vmatpush2.bf16.msra.mxu0 %v4920
    %5587 = vmatprep.subr.bf16.mxu0 0
    %5588 = vmatpush2.bf16.msra.mxu0 %v4913
    %5589 = vmatprep.mubr.bf16.mxu0 %v3851
    %5590 = vmatmul.mubr.bf16.gmra.mxu0 %v3850
    %v5591 = vpop.f32.mrf.mxu0
    %v5592 = vadd.f32 %v4139, %v5591
    %v5593 = vpop.f32.mrf.mxu0
    %v5594 = vpop.f32.mrf.mxu0
    %v5595 = vadd.f32 %v4139, %v5594
    %v5596 = vpop.f32.mrf.mxu0
    %5597 = vdwg.mxu0
    %5598 = vmatprep.subr.bf16.mxu0 0
    %5599 = vmatpush1.bf16.msra.mxu0 %v5018
    %5600 = vmatprep.subr.bf16.mxu0 0
    %5601 = vmatpush1.bf16.msra.mxu0 %v5011
    %5602 = vmatprep.subr.bf16.mxu0 0
    %5603 = vmatpush1.bf16.msra.mxu0 %v5004
    %5604 = vmatprep.subr.bf16.mxu0 0
    %5605 = vmatpush1.bf16.msra.mxu0 %v4997
    %5606 = vmatprep.subr.bf16.mxu0 0
    %5607 = vmatpush1.bf16.msra.mxu0 %v4990
    %5608 = vmatprep.subr.bf16.mxu0 0
    %5609 = vmatpush1.bf16.msra.mxu0 %v4983
    %5610 = vmatprep.subr.bf16.mxu0 0
    %5611 = vmatpush1.bf16.msra.mxu0 %v4976
    %5612 = vmatprep.subr.bf16.mxu0 0
    %5613 = vmatpush1.bf16.msra.mxu0 %v4969
    %5614 = vmatprep.subr.bf16.mxu0 0
    %5615 = vmatpush2.bf16.msra.mxu0 %v5074
    %5616 = vmatprep.subr.bf16.mxu0 0
    %5617 = vmatpush2.bf16.msra.mxu0 %v5067
    %5618 = vmatprep.subr.bf16.mxu0 0
    %5619 = vmatpush2.bf16.msra.mxu0 %v5060
    %5620 = vmatprep.subr.bf16.mxu0 0
    %5621 = vmatpush2.bf16.msra.mxu0 %v5053
    %5622 = vmatprep.subr.bf16.mxu0 0
    %5623 = vmatpush2.bf16.msra.mxu0 %v5046
    %5624 = vmatprep.subr.bf16.mxu0 0
    %5625 = vmatpush2.bf16.msra.mxu0 %v5039
    %5626 = vmatprep.subr.bf16.mxu0 0
    %5627 = vmatpush2.bf16.msra.mxu0 %v5032
    %5628 = vmatprep.subr.bf16.mxu0 0
    %5629 = vmatpush2.bf16.msra.mxu0 %v5025
    %5630 = vmatprep.mubr.bf16.mxu0 %v3853
    %5631 = vmatmul.mubr.bf16.gmra.mxu0 %v3852
    %v5632 = vpop.f32.mrf.mxu0
    %v5633 = vadd.f32 %v5592, %v5632
    %v5634 = vpop.f32.mrf.mxu0
    %v5635 = vpop.f32.mrf.mxu0
    %v5636 = vadd.f32 %v5595, %v5635
    %v5637 = vpop.f32.mrf.mxu0
    %5638 = vdwg.mxu0
    %v5639 = vtanh.pop %v5377
    %v5640 = vtanh.pop %v5379
    %v5641 = vtanh.pop %v5463
    %v5642 = vtanh.pop %v5465
    %v5643 = vtanh.pop %v5549
    %v5644 = vtanh.pop %v5551
    %v5645 = vtanh.pop %v5633
    %v5646 = vtanh.pop %v5381
    %v5647 = vtanh.pop %v5383
    %v5648 = vtanh.pop %v5467
    %v5649 = vtanh.pop %v5469
    %v5650 = vtanh.pop %v5553
    %v5651 = vtanh.pop %v5555
    %v5652 = vtanh.pop %v5636
    %5653 = vst [vmem:[%s11] sm:$0xff] %v5639
    %5654 = vst [vmem:[%s11 + $0x8] sm:$0xff] %v5640
    %5655 = vst [vmem:[%s11 + $0x10] sm:$0xff] %v5641
    %5656 = vst [vmem:[%s11 + $0x18] sm:$0xff] %v5642
    %5657 = vst [vmem:[%s11 + $0x20] sm:$0xff] %v5643
    %5658 = vst [vmem:[%s11 + $0x28] sm:$0xff] %v5644
    %5659 = vst [vmem:[%s11 + $0x30] sm:$0xff] %v5645
    %5660 = vst [vmem:[%s11 + $0x38] sm:$0xff] %v5646
    %5661 = vst [vmem:[%s11 + $0x40] sm:$0xff] %v5647
    %5662 = vst [vmem:[%s11 + $0x48] sm:$0xff] %v5648
    %5663 = vst [vmem:[%s11 + $0x50] sm:$0xff] %v5649
    %5664 = vst [vmem:[%s11 + $0x58] sm:$0xff] %v5650
    %5665 = vst [vmem:[%s11 + $0x60] sm:$0xff] %v5651
    %5666 = vst [vmem:[%s11 + $0x68] sm:$0xff] %v5652
    // Predicated region
    $region66: #{vq_vae_forward.1} parent=1 // pred_check
      _
    $region67: #{vq_vae_forward.1} parent=1 // pred_check_branch
      %5668 = sbr.rel (0) target = $region69
    $region68: #{vq_vae_forward.1} parent=1 // pred_region
      _
    $region69: #{vq_vae_forward.1} parent=1 // pred_fallthru
      _
    // Predicated region
    $region70: #{vq_vae_forward.1} parent=1 // pred_check
      _
    $region71: #{vq_vae_forward.1} parent=1 // pred_check_branch
      %5670 = sbr.rel (0) target = $region73
    $region72: #{vq_vae_forward.1} parent=1 // pred_region
      _
    $region73: #{vq_vae_forward.1} parent=1 // pred_fallthru
      _
    // Predicated region
    $region74: #{vq_vae_forward.1} parent=1 // pred_check
      _
    $region75: #{vq_vae_forward.1} parent=1 // pred_check_branch
      %5672 = sbr.rel (0) target = $region77
    $region76: #{vq_vae_forward.1} parent=1 // pred_region
      _
    $region77: #{vq_vae_forward.1} parent=1 // pred_fallthru
      _
    // Predicated region
    $region78: #{vq_vae_forward.1} parent=1 // pred_check
      _
    $region79: #{vq_vae_forward.1} parent=1 // pred_check_branch
      %5674 = sbr.rel (0) target = $region81
    $region80: #{vq_vae_forward.1} parent=1 // pred_region
      _
    $region81: #{vq_vae_forward.1} parent=1 // pred_fallthru
      _
    // Predicated region
    $region82: #{vq_vae_forward.1} parent=1 // pred_check
      _
    $region83: #{vq_vae_forward.1} parent=1 // pred_check_branch
      %5676 = sbr.rel (0) target = $region85
    $region84: #{vq_vae_forward.1} parent=1 // pred_region
      _
    $region85: #{vq_vae_forward.1} parent=1 // pred_fallthru
      _
    // Predicated region
    $region86: #{vq_vae_forward.1} parent=1 // pred_check
      _
    $region87: #{vq_vae_forward.1} parent=1 // pred_check_branch
      %5678 = sbr.rel (0) target = $region89
    $region88: #{vq_vae_forward.1} parent=1 // pred_region
      _
    $region89: #{vq_vae_forward.1} parent=1 // pred_fallthru
      _
    %5679 = vsyncpa [#allocation3], 1
    %5680 = vsyncpa [#allocation5], 1
    %5681 = vsyncpa [#allocation8], 1

</llo_original>
